<compile_context>
chip_gen: v7x
topology: tpu7x:2x2x1
jax: 0.10.0
libtpu: 0.0.40
codegen_flags: <defaults>
</compile_context>

<pallas_src>
import functools

import jax
import jax.numpy as jnp
from jax.experimental import pallas as pl
from jax.experimental.pallas import tpu as pltpu

_EPS = 1e-5


def _block_kernel(x_ref, w1_ref, w2_ref, b1_ref, b2_ref, mask_ref,
                  out_ref, mid_ref, *, W):
    """conv1+BN+ReLU -> conv2+BN -> +identity -> ReLU for Bt images per step.

    Layout: channels in sublanes, flattened zero-padded spatial P=(H+2)*(W+2)
    in lanes.  For output slab position q (padded-flat offset W+3+q) the tap
    (ky, kx) reads padded-flat offset ky*(W+2)+kx + q, so every tap is a
    contiguous lane-slice and the conv is 9 accumulated MXU dots.
    """
    Bt, _, P = x_ref.shape
    Cm = mid_ref.shape[0]
    L = out_ref.shape[-1]            # = H*(W+2) - 2  (contiguous output slab)
    W2 = W + 2
    SLAB = W + 3                     # padded-flat offset of the first real pixel

    # Keep the top/bottom halo strips of the conv1-activation scratch at zero.
    # Border-only zeroing (tiny), done unconditionally so it stays correct
    # under megacore grid sharding.
    mid_ref[:, 0:SLAB] = jnp.zeros((Cm, SLAB), mid_ref.dtype)
    mid_ref[:, SLAB + L:P] = jnp.zeros((Cm, P - SLAB - L), mid_ref.dtype)

    # Hoisted loop-invariant loads (avoid re-broadcast / reload inside loops).
    mask = mask_ref[...]             # (1, L): 1.0 on real pixels, 0.0 on halo cols
    bias1 = b1_ref[...]              # (Cout, 1) -- BN shift (scale folded in weights)
    bias2 = b2_ref[...]
    w1 = [w1_ref[t] for t in range(9)]   # 9 x (Cout, Cin) bf16
    w2 = [w2_ref[t] for t in range(9)]

    def conv3x3(src, taps):
        # acc[:, q] = sum_t taps[t] @ src[:, ky*(W+2)+kx + q]   (accumulated dots)
        acc = None
        for t in range(9):
            ky, kx = t // 3, t % 3
            s = ky * W2 + kx
            d = jnp.dot(taps[t], src[:, s:s + L],
                        preferred_element_type=jnp.float32)
            acc = d if acc is None else acc + d
        return acc                                             # (Cout, L) f32

    for b in range(Bt):                                        # images in this step
        xf = x_ref[b]                                          # (C, P) f32
        x_bf = xf.astype(jnp.bfloat16)                         # one cast, at MXU boundary

        # conv1 -> BN (scale pre-folded) -> ReLU; stays in VMEM (no HBM round trip).
        h1 = jnp.maximum(conv3x3(x_bf, w1) + bias1, 0.0)
        # Mask zeroes the inter-row halo columns so conv2 sees proper zero padding.
        mid_ref[:, SLAB:SLAB + L] = (h1 * mask).astype(mid_ref.dtype)

        # conv2 -> BN -> +identity -> ReLU.
        acc2 = conv3x3(mid_ref, w2)
        identity = xf[:, SLAB:SLAB + L]                        # f32 residual (no downsample)
        out_ref[b] = jnp.maximum(acc2 + bias2 + identity, 0.0).astype(out_ref.dtype)


def prepare_block_params(params):
    """One-time prep: fold inference-mode BN into the convs; re-layout weights."""
    w1 = params["conv1_w"]                       # torch OIHW: (planes, inplanes, 3, 3)
    w2 = params["conv2_w"]
    planes, inplanes = w1.shape[0], w1.shape[1]
    s1 = params["bn1_gamma"] / jnp.sqrt(params["bn1_var"] + _EPS)
    b1 = params["bn1_beta"] - params["bn1_mean"] * s1
    s2 = params["bn2_gamma"] / jnp.sqrt(params["bn2_var"] + _EPS)
    b2 = params["bn2_beta"] - params["bn2_mean"] * s2
    # TODO(synk): training-mode BatchNorm (batch stats + running-stat updates) not implemented.
    w1f = w1 * s1[:, None, None, None]           # BN scale folded into the weights
    w2f = w2 * s2[:, None, None, None]
    # OIHW -> (tap = ky*3+kx, Cout, Cin), bf16 MXU operands.
    w1k = jnp.transpose(w1f, (2, 3, 0, 1)).reshape(9, planes, inplanes).astype(jnp.bfloat16)
    w2k = jnp.transpose(w2f, (2, 3, 0, 1)).reshape(9, planes, planes).astype(jnp.bfloat16)
    return {"w1": w1k, "w2": w2k,
            "b1": b1.reshape(planes, 1).astype(jnp.float32),
            "b2": b2.reshape(planes, 1).astype(jnp.float32)}


def _round_up(a, b):
    return (a + b - 1) // b * b


def _pick_batch_tile(n, out_cols):
    """Images per grid step: amortize per-step overhead when images are tiny."""
    target = max(1, 2048 // max(out_cols, 1))
    bt = 1
    for d in range(1, n + 1):
        if n % d == 0 and d <= target:
            bt = d
    return bt


def basic_block_enc(x_nchw, prep):
    """BasicBlockEnc forward. x_nchw: (N, C, H, W) float32 (PyTorch layout)."""
    # TODO(synk): stride != 1 / downsample path not implemented (constructor defaults only).
    # TODO(synk): for large H*W / C, add a second (parallel) grid axis over H row-strips.
    N, C, H, W = x_nchw.shape
    planes = prep["w1"].shape[1]
    assert planes == C, "identity residual requires inplanes == planes (no downsample)"

    W2 = W + 2
    P = (H + 2) * W2               # padded-flat spatial size (lane axis)
    L = H * W2 - 2                 # contiguous output slab length (lane axis)
    SLAB = W + 3
    Bt = _pick_batch_tile(N, L)

    # Zero-pad once in the wrapper and flatten spatial into the lane axis:
    # (N, C, H, W) -> (N, C, (H+2)*(W+2)).  Lane-dense; kernel consumes NCHW directly.
    xp = jnp.pad(x_nchw.astype(jnp.float32),
                 ((0, 0), (0, 0), (1, 1), (1, 1))).reshape(N, C, P)

    # 1.0 on real pixels of the slab, 0.0 on the inter-row halo columns.
    col = (jnp.arange(L, dtype=jnp.int32) + SLAB) % W2
    mask = ((col >= 1) & (col <= W)).astype(jnp.float32).reshape(1, L)

    flops = 2 * N * L * 9 * (C * planes + planes * planes)
    bytes_accessed = (N * C * P * 4 + N * planes * L * 4
                      + (prep["w1"].size + prep["w2"].size) * 2
                      + 2 * planes * 4 + L * 4)

    # VMEM budget from the actual (sublane/lane padded) tile sizes, with headroom.
    tile_bytes = Bt * _round_up(C, 8) * (_round_up(P, 128) + _round_up(L, 128)) * 4
    fixed_bytes = (_round_up(planes, 8) * _round_up(P, 128) * 2      # mid scratch (bf16)
                   + 18 * _round_up(planes, 8) * 128 * 2             # weights
                   + 2 * _round_up(planes, 8) * 128 * 4              # biases
                   + 8 * _round_up(L, 128) * 4)                      # mask
    vmem_limit = int(min(max(4 * tile_bytes + 2 * fixed_bytes, 1 << 20), 32 << 20))

    out_slab = pl.pallas_call(
        functools.partial(_block_kernel, W=W),
        out_shape=jax.ShapeDtypeStruct((N, planes, L), jnp.float32),
        grid_spec=pltpu.PrefetchScalarGridSpec(
            num_scalar_prefetch=0,
            grid=(N // Bt,),
            in_specs=[
                pl.BlockSpec((Bt, C, P), lambda n: (n, 0, 0)),        # padded-flat input
                pl.BlockSpec((9, planes, C), lambda n: (0, 0, 0)),    # conv1 weights (BN folded)
                pl.BlockSpec((9, planes, planes), lambda n: (0, 0, 0)),  # conv2 weights
                pl.BlockSpec((planes, 1), lambda n: (0, 0)),          # bn1 bias
                pl.BlockSpec((planes, 1), lambda n: (0, 0)),          # bn2 bias
                pl.BlockSpec((1, L), lambda n: (0, 0)),               # interior-column mask
            ],
            out_specs=pl.BlockSpec((Bt, planes, L), lambda n: (n, 0, 0)),
            scratch_shapes=[pltpu.VMEM((planes, P), jnp.bfloat16)],   # conv1 activation
        ),
        compiler_params=pltpu.CompilerParams(
            dimension_semantics=("parallel",),
            vmem_limit_bytes=vmem_limit,
        ),
        cost_estimate=pl.CostEstimate(
            flops=flops, transcendentals=0, bytes_accessed=bytes_accessed),
    )(xp, prep["w1"], prep["w2"], prep["b1"], prep["b2"], mask)

    # Undo the slab layout (wrapper-side layout plumbing only): pad back the two
    # clipped halo pixels, reshape to padded rows, drop the halo columns.
    out_rows = jnp.pad(out_slab, ((0, 0), (0, 0), (1, 1))).reshape(N, planes, H, W2)
    return out_rows[:, :, :, 1:W + 1]


# ---------------- pure-JAX reference (for correctness check) ----------------
def _ref_block(x_nchw, params):
    def conv(x, w):
        return jax.lax.conv_general_dilated(
            x, w, (1, 1), ((1, 1), (1, 1)),
            dimension_numbers=("NCHW", "OIHW", "NCHW"))

    def bn(x, g, b, m, v):
        g, b, m, v = (t[None, :, None, None] for t in (g, b, m, v))
        return (x - m) / jnp.sqrt(v + _EPS) * g + b

    out = jax.nn.relu(bn(conv(x_nchw, params["conv1_w"]),
                         params["bn1_gamma"], params["bn1_beta"],
                         params["bn1_mean"], params["bn1_var"]))
    out = bn(conv(out, params["conv2_w"]),
             params["bn2_gamma"], params["bn2_beta"],
             params["bn2_mean"], params["bn2_var"])
    return jax.nn.relu(out + x_nchw)


def _init_params(key, inplanes, planes):
    ks = jax.random.split(key, 8)
    return {
        "conv1_w": 0.1 * jax.random.normal(ks[0], (planes, inplanes, 3, 3), jnp.float32),
        "conv2_w": 0.1 * jax.random.normal(ks[1], (planes, planes, 3, 3), jnp.float32),
        "bn1_gamma": 1.0 + 0.1 * jax.random.normal(ks[2], (planes,), jnp.float32),
        "bn1_beta": 0.1 * jax.random.normal(ks[3], (planes,), jnp.float32),
        "bn1_mean": 0.05 * jax.random.normal(ks[4], (planes,), jnp.float32),
        "bn1_var": 1.0 + 0.1 * jax.random.uniform(ks[5], (planes,), jnp.float32),
        "bn2_gamma": 1.0 + 0.1 * jax.random.normal(ks[6], (planes,), jnp.float32),
        "bn2_beta": 0.1 * jax.random.normal(ks[7], (planes,), jnp.float32),
        "bn2_mean": jnp.zeros((planes,), jnp.float32),
        "bn2_var": jnp.ones((planes,), jnp.float32),
    }


if __name__ == "__main__":
    key = jax.random.PRNGKey(0)
    kx, kp = jax.random.split(key)

    N, C, H, W = 2, 4, 16, 16            # inplanes = planes = 4, stride = 1
    x = jax.random.normal(kx, (N, C, H, W), jnp.float32)
    params = _init_params(kp, C, C)
    prep = prepare_block_params(params)

    fwd = jax.jit(basic_block_enc)
    out = jax.block_until_ready(fwd(x, prep))
    ref = jax.block_until_ready(_ref_block(x, params))

    assert out.shape == (N, C, H, W)
    # bf16 MXU operands (f32 accumulation) -> slightly looser tolerance than pure f32.
    assert jnp.allclose(out, ref, atol=2e-2, rtol=2e-2), float(jnp.max(jnp.abs(out - ref)))
    print("KERNEL_OK")
</pallas_src>

<mosaic_0001>
module attributes {stable_mosaic.version = 11 : i64} {
  func.func @_block_kernel(%arg0: i32, %arg1: memref<2x4x324xf32, #tpu.memory_space<vmem>>, %arg2: memref<9x4x4xbf16, #tpu.memory_space<vmem>>, %arg3: memref<9x4x4xbf16, #tpu.memory_space<vmem>>, %arg4: memref<4x1xf32, #tpu.memory_space<vmem>>, %arg5: memref<4x1xf32, #tpu.memory_space<vmem>>, %arg6: memref<1x286xf32, #tpu.memory_space<vmem>>, %arg7: memref<2x4x286xf32, #tpu.memory_space<vmem>>, %arg8: memref<4x324xbf16, #tpu.memory_space<vmem>>) attributes {dimension_semantics = [#tpu.dimension_semantics<parallel>], iteration_bounds = array<i64: 1>, scalar_prefetch = 0 : i64, scratch_operands = 1 : i64, tpu.core_type = #tpu.core_type<tc>, window_params = [{transform_indices = @transform_0, window_bounds = array<i64: 2, 4, 324>}, {pipeline_mode = #tpu.pipeline_mode<synchronous>, transform_indices = @transform_1, window_bounds = array<i64: 9, 4, 4>}, {pipeline_mode = #tpu.pipeline_mode<synchronous>, transform_indices = @transform_2, window_bounds = array<i64: 9, 4, 4>}, {pipeline_mode = #tpu.pipeline_mode<synchronous>, transform_indices = @transform_3, window_bounds = array<i64: 4, 1>}, {pipeline_mode = #tpu.pipeline_mode<synchronous>, transform_indices = @transform_4, window_bounds = array<i64: 4, 1>}, {pipeline_mode = #tpu.pipeline_mode<synchronous>, transform_indices = @transform_5, window_bounds = array<i64: 1, 286>}, {transform_indices = @transform_6, window_bounds = array<i64: 2, 4, 286>}]} {
    %cst = arith.constant 0.000000e+00 : bf16
    %0 = vector.broadcast %cst : bf16 to vector<4x19xbf16>
    %c0 = arith.constant 0 : index
    %c0_0 = arith.constant 0 : index
    %1 = vector.load %arg8[%c0, %c0_0] : memref<4x324xbf16, #tpu.memory_space<vmem>>, vector<4x19xbf16>
    tpu.vector_store %arg8[%c0, %c0_0], %0 {strides = array<i32>} : memref<4x324xbf16, #tpu.memory_space<vmem>>, vector<4x19xbf16>,
    %cst_1 = arith.constant 0.000000e+00 : bf16
    %2 = vector.broadcast %cst_1 : bf16 to vector<4x19xbf16>
    %c0_2 = arith.constant 0 : index
    %c305 = arith.constant 305 : index
    %3 = vector.load %arg8[%c0_2, %c305] : memref<4x324xbf16, #tpu.memory_space<vmem>>, vector<4x19xbf16>
    tpu.vector_store %arg8[%c0_2, %c305], %2 {strides = array<i32>} : memref<4x324xbf16, #tpu.memory_space<vmem>>, vector<4x19xbf16>,
    %c0_3 = arith.constant 0 : index
    %c0_4 = arith.constant 0 : index
    %4 = vector.load %arg6[%c0_3, %c0_4] : memref<1x286xf32, #tpu.memory_space<vmem>>, vector<1x286xf32>
    %c0_5 = arith.constant 0 : index
    %c0_6 = arith.constant 0 : index
    %5 = vector.load %arg4[%c0_5, %c0_6] : memref<4x1xf32, #tpu.memory_space<vmem>>, vector<4x1xf32>
    %c0_7 = arith.constant 0 : index
    %c0_8 = arith.constant 0 : index
    %6 = vector.load %arg5[%c0_7, %c0_8] : memref<4x1xf32, #tpu.memory_space<vmem>>, vector<4x1xf32>
    %c0_9 = arith.constant 0 : index
    %c0_10 = arith.constant 0 : index
    %c0_11 = arith.constant 0 : index
    %7 = vector.load %arg2[%c0_9, %c0_10, %c0_11] : memref<9x4x4xbf16, #tpu.memory_space<vmem>>, vector<1x4x4xbf16>
    %8 = vector.shape_cast %7 : vector<1x4x4xbf16> to vector<4x4xbf16>
    %c1 = arith.constant 1 : index
    %c0_12 = arith.constant 0 : index
    %c0_13 = arith.constant 0 : index
    %9 = vector.load %arg2[%c1, %c0_12, %c0_13] : memref<9x4x4xbf16, #tpu.memory_space<vmem>>, vector<1x4x4xbf16>
    %10 = vector.shape_cast %9 : vector<1x4x4xbf16> to vector<4x4xbf16>
    %c2 = arith.constant 2 : index
    %c0_14 = arith.constant 0 : index
    %c0_15 = arith.constant 0 : index
    %11 = vector.load %arg2[%c2, %c0_14, %c0_15] : memref<9x4x4xbf16, #tpu.memory_space<vmem>>, vector<1x4x4xbf16>
    %12 = vector.shape_cast %11 : vector<1x4x4xbf16> to vector<4x4xbf16>
    %c3 = arith.constant 3 : index
    %c0_16 = arith.constant 0 : index
    %c0_17 = arith.constant 0 : index
    %13 = vector.load %arg2[%c3, %c0_16, %c0_17] : memref<9x4x4xbf16, #tpu.memory_space<vmem>>, vector<1x4x4xbf16>
    %14 = vector.shape_cast %13 : vector<1x4x4xbf16> to vector<4x4xbf16>
    %c4 = arith.constant 4 : index
    %c0_18 = arith.constant 0 : index
    %c0_19 = arith.constant 0 : index
    %15 = vector.load %arg2[%c4, %c0_18, %c0_19] : memref<9x4x4xbf16, #tpu.memory_space<vmem>>, vector<1x4x4xbf16>
    %16 = vector.shape_cast %15 : vector<1x4x4xbf16> to vector<4x4xbf16>
    %c5 = arith.constant 5 : index
    %c0_20 = arith.constant 0 : index
    %c0_21 = arith.constant 0 : index
    %17 = vector.load %arg2[%c5, %c0_20, %c0_21] : memref<9x4x4xbf16, #tpu.memory_space<vmem>>, vector<1x4x4xbf16>
    %18 = vector.shape_cast %17 : vector<1x4x4xbf16> to vector<4x4xbf16>
    %c6 = arith.constant 6 : index
    %c0_22 = arith.constant 0 : index
    %c0_23 = arith.constant 0 : index
    %19 = vector.load %arg2[%c6, %c0_22, %c0_23] : memref<9x4x4xbf16, #tpu.memory_space<vmem>>, vector<1x4x4xbf16>
    %20 = vector.shape_cast %19 : vector<1x4x4xbf16> to vector<4x4xbf16>
    %c7 = arith.constant 7 : index
    %c0_24 = arith.constant 0 : index
    %c0_25 = arith.constant 0 : index
    %21 = vector.load %arg2[%c7, %c0_24, %c0_25] : memref<9x4x4xbf16, #tpu.memory_space<vmem>>, vector<1x4x4xbf16>
    %22 = vector.shape_cast %21 : vector<1x4x4xbf16> to vector<4x4xbf16>
    %c8 = arith.constant 8 : index
    %c0_26 = arith.constant 0 : index
    %c0_27 = arith.constant 0 : index
    %23 = vector.load %arg2[%c8, %c0_26, %c0_27] : memref<9x4x4xbf16, #tpu.memory_space<vmem>>, vector<1x4x4xbf16>
    %24 = vector.shape_cast %23 : vector<1x4x4xbf16> to vector<4x4xbf16>
    %c0_28 = arith.constant 0 : index
    %c0_29 = arith.constant 0 : index
    %c0_30 = arith.constant 0 : index
    %25 = vector.load %arg3[%c0_28, %c0_29, %c0_30] : memref<9x4x4xbf16, #tpu.memory_space<vmem>>, vector<1x4x4xbf16>
    %26 = vector.shape_cast %25 : vector<1x4x4xbf16> to vector<4x4xbf16>
    %c1_31 = arith.constant 1 : index
    %c0_32 = arith.constant 0 : index
    %c0_33 = arith.constant 0 : index
    %27 = vector.load %arg3[%c1_31, %c0_32, %c0_33] : memref<9x4x4xbf16, #tpu.memory_space<vmem>>, vector<1x4x4xbf16>
    %28 = vector.shape_cast %27 : vector<1x4x4xbf16> to vector<4x4xbf16>
    %c2_34 = arith.constant 2 : index
    %c0_35 = arith.constant 0 : index
    %c0_36 = arith.constant 0 : index
    %29 = vector.load %arg3[%c2_34, %c0_35, %c0_36] : memref<9x4x4xbf16, #tpu.memory_space<vmem>>, vector<1x4x4xbf16>
    %30 = vector.shape_cast %29 : vector<1x4x4xbf16> to vector<4x4xbf16>
    %c3_37 = arith.constant 3 : index
    %c0_38 = arith.constant 0 : index
    %c0_39 = arith.constant 0 : index
    %31 = vector.load %arg3[%c3_37, %c0_38, %c0_39] : memref<9x4x4xbf16, #tpu.memory_space<vmem>>, vector<1x4x4xbf16>
    %32 = vector.shape_cast %31 : vector<1x4x4xbf16> to vector<4x4xbf16>
    %c4_40 = arith.constant 4 : index
    %c0_41 = arith.constant 0 : index
    %c0_42 = arith.constant 0 : index
    %33 = vector.load %arg3[%c4_40, %c0_41, %c0_42] : memref<9x4x4xbf16, #tpu.memory_space<vmem>>, vector<1x4x4xbf16>
    %34 = vector.shape_cast %33 : vector<1x4x4xbf16> to vector<4x4xbf16>
    %c5_43 = arith.constant 5 : index
    %c0_44 = arith.constant 0 : index
    %c0_45 = arith.constant 0 : index
    %35 = vector.load %arg3[%c5_43, %c0_44, %c0_45] : memref<9x4x4xbf16, #tpu.memory_space<vmem>>, vector<1x4x4xbf16>
    %36 = vector.shape_cast %35 : vector<1x4x4xbf16> to vector<4x4xbf16>
    %c6_46 = arith.constant 6 : index
    %c0_47 = arith.constant 0 : index
    %c0_48 = arith.constant 0 : index
    %37 = vector.load %arg3[%c6_46, %c0_47, %c0_48] : memref<9x4x4xbf16, #tpu.memory_space<vmem>>, vector<1x4x4xbf16>
    %38 = vector.shape_cast %37 : vector<1x4x4xbf16> to vector<4x4xbf16>
    %c7_49 = arith.constant 7 : index
    %c0_50 = arith.constant 0 : index
    %c0_51 = arith.constant 0 : index
    %39 = vector.load %arg3[%c7_49, %c0_50, %c0_51] : memref<9x4x4xbf16, #tpu.memory_space<vmem>>, vector<1x4x4xbf16>
    %40 = vector.shape_cast %39 : vector<1x4x4xbf16> to vector<4x4xbf16>
    %c8_52 = arith.constant 8 : index
    %c0_53 = arith.constant 0 : index
    %c0_54 = arith.constant 0 : index
    %41 = vector.load %arg3[%c8_52, %c0_53, %c0_54] : memref<9x4x4xbf16, #tpu.memory_space<vmem>>, vector<1x4x4xbf16>
    %42 = vector.shape_cast %41 : vector<1x4x4xbf16> to vector<4x4xbf16>
    %c0_55 = arith.constant 0 : index
    %c0_56 = arith.constant 0 : index
    %c0_57 = arith.constant 0 : index
    %43 = vector.load %arg1[%c0_55, %c0_56, %c0_57] : memref<2x4x324xf32, #tpu.memory_space<vmem>>, vector<1x4x324xf32>
    %44 = vector.shape_cast %43 : vector<1x4x324xf32> to vector<4x324xf32>
    %45 = arith.truncf %44 : vector<4x324xf32> to vector<4x324xbf16>
    %46 = vector.extract_strided_slice %45 {offsets = [0, 0], sizes = [4, 286], strides = [1, 1]} : vector<4x324xbf16> to vector<4x286xbf16>
    %cst_58 = arith.constant dense<0.000000e+00> : vector<4x286xf32>
    %47 = tpu.matmul %8, %46, %cst_58 {dimension_numbers = #tpu.dot_dimension_numbers<[1], [0], [0], [1], [0, 0, 1, 1], [], []>} : vector<4x4xbf16>, vector<4x286xbf16>, vector<4x286xf32> -> vector<4x286xf32>
    %48 = vector.extract_strided_slice %45 {offsets = [0, 1], sizes = [4, 286], strides = [1, 1]} : vector<4x324xbf16> to vector<4x286xbf16>
    %cst_59 = arith.constant dense<0.000000e+00> : vector<4x286xf32>
    %49 = tpu.matmul %10, %48, %cst_59 {dimension_numbers = #tpu.dot_dimension_numbers<[1], [0], [0], [1], [0, 0, 1, 1], [], []>} : vector<4x4xbf16>, vector<4x286xbf16>, vector<4x286xf32> -> vector<4x286xf32>
    %50 = arith.addf %47, %49 : vector<4x286xf32>
    %51 = vector.extract_strided_slice %45 {offsets = [0, 2], sizes = [4, 286], strides = [1, 1]} : vector<4x324xbf16> to vector<4x286xbf16>
    %cst_60 = arith.constant dense<0.000000e+00> : vector<4x286xf32>
    %52 = tpu.matmul %12, %51, %cst_60 {dimension_numbers = #tpu.dot_dimension_numbers<[1], [0], [0], [1], [0, 0, 1, 1], [], []>} : vector<4x4xbf16>, vector<4x286xbf16>, vector<4x286xf32> -> vector<4x286xf32>
    %53 = arith.addf %50, %52 : vector<4x286xf32>
    %54 = vector.extract_strided_slice %45 {offsets = [0, 18], sizes = [4, 286], strides = [1, 1]} : vector<4x324xbf16> to vector<4x286xbf16>
    %cst_61 = arith.constant dense<0.000000e+00> : vector<4x286xf32>
    %55 = tpu.matmul %14, %54, %cst_61 {dimension_numbers = #tpu.dot_dimension_numbers<[1], [0], [0], [1], [0, 0, 1, 1], [], []>} : vector<4x4xbf16>, vector<4x286xbf16>, vector<4x286xf32> -> vector<4x286xf32>
    %56 = arith.addf %53, %55 : vector<4x286xf32>
    %57 = vector.extract_strided_slice %45 {offsets = [0, 19], sizes = [4, 286], strides = [1, 1]} : vector<4x324xbf16> to vector<4x286xbf16>
    %cst_62 = arith.constant dense<0.000000e+00> : vector<4x286xf32>
    %58 = tpu.matmul %16, %57, %cst_62 {dimension_numbers = #tpu.dot_dimension_numbers<[1], [0], [0], [1], [0, 0, 1, 1], [], []>} : vector<4x4xbf16>, vector<4x286xbf16>, vector<4x286xf32> -> vector<4x286xf32>
    %59 = arith.addf %56, %58 : vector<4x286xf32>
    %60 = vector.extract_strided_slice %45 {offsets = [0, 20], sizes = [4, 286], strides = [1, 1]} : vector<4x324xbf16> to vector<4x286xbf16>
    %cst_63 = arith.constant dense<0.000000e+00> : vector<4x286xf32>
    %61 = tpu.matmul %18, %60, %cst_63 {dimension_numbers = #tpu.dot_dimension_numbers<[1], [0], [0], [1], [0, 0, 1, 1], [], []>} : vector<4x4xbf16>, vector<4x286xbf16>, vector<4x286xf32> -> vector<4x286xf32>
    %62 = arith.addf %59, %61 : vector<4x286xf32>
    %63 = vector.extract_strided_slice %45 {offsets = [0, 36], sizes = [4, 286], strides = [1, 1]} : vector<4x324xbf16> to vector<4x286xbf16>
    %cst_64 = arith.constant dense<0.000000e+00> : vector<4x286xf32>
    %64 = tpu.matmul %20, %63, %cst_64 {dimension_numbers = #tpu.dot_dimension_numbers<[1], [0], [0], [1], [0, 0, 1, 1], [], []>} : vector<4x4xbf16>, vector<4x286xbf16>, vector<4x286xf32> -> vector<4x286xf32>
    %65 = arith.addf %62, %64 : vector<4x286xf32>
    %66 = vector.extract_strided_slice %45 {offsets = [0, 37], sizes = [4, 286], strides = [1, 1]} : vector<4x324xbf16> to vector<4x286xbf16>
    %cst_65 = arith.constant dense<0.000000e+00> : vector<4x286xf32>
    %67 = tpu.matmul %22, %66, %cst_65 {dimension_numbers = #tpu.dot_dimension_numbers<[1], [0], [0], [1], [0, 0, 1, 1], [], []>} : vector<4x4xbf16>, vector<4x286xbf16>, vector<4x286xf32> -> vector<4x286xf32>
    %68 = arith.addf %65, %67 : vector<4x286xf32>
    %69 = vector.extract_strided_slice %45 {offsets = [0, 38], sizes = [4, 286], strides = [1, 1]} : vector<4x324xbf16> to vector<4x286xbf16>
    %cst_66 = arith.constant dense<0.000000e+00> : vector<4x286xf32>
    %70 = tpu.matmul %24, %69, %cst_66 {dimension_numbers = #tpu.dot_dimension_numbers<[1], [0], [0], [1], [0, 0, 1, 1], [], []>} : vector<4x4xbf16>, vector<4x286xbf16>, vector<4x286xf32> -> vector<4x286xf32>
    %71 = arith.addf %68, %70 : vector<4x286xf32>
    %72 = vector.broadcast %5 : vector<4x1xf32> to vector<4x286xf32>
    %73 = arith.addf %71, %72 : vector<4x286xf32>
    %cst_67 = arith.constant 0.000000e+00 : f32
    %74 = vector.broadcast %cst_67 : f32 to vector<4x286xf32>
    %75 = arith.maximumf %73, %74 : vector<4x286xf32>
    %76 = vector.broadcast %4 : vector<1x286xf32> to vector<4x286xf32>
    %77 = arith.mulf %75, %76 : vector<4x286xf32>
    %78 = arith.truncf %77 : vector<4x286xf32> to vector<4x286xbf16>
    %c0_68 = arith.constant 0 : index
    %c19 = arith.constant 19 : index
    %79 = vector.load %arg8[%c0_68, %c19] : memref<4x324xbf16, #tpu.memory_space<vmem>>, vector<4x286xbf16>
    tpu.vector_store %arg8[%c0_68, %c19], %78 {strides = array<i32>} : memref<4x324xbf16, #tpu.memory_space<vmem>>, vector<4x286xbf16>,
    %c0_69 = arith.constant 0 : index
    %c0_70 = arith.constant 0 : index
    %80 = vector.load %arg8[%c0_69, %c0_70] : memref<4x324xbf16, #tpu.memory_space<vmem>>, vector<4x286xbf16>
    %cst_71 = arith.constant dense<0.000000e+00> : vector<4x286xf32>
    %81 = tpu.matmul %26, %80, %cst_71 {dimension_numbers = #tpu.dot_dimension_numbers<[1], [0], [0], [1], [0, 0, 1, 1], [], []>} : vector<4x4xbf16>, vector<4x286xbf16>, vector<4x286xf32> -> vector<4x286xf32>
    %c0_72 = arith.constant 0 : index
    %c1_73 = arith.constant 1 : index
    %82 = vector.load %arg8[%c0_72, %c1_73] : memref<4x324xbf16, #tpu.memory_space<vmem>>, vector<4x286xbf16>
    %cst_74 = arith.constant dense<0.000000e+00> : vector<4x286xf32>
    %83 = tpu.matmul %28, %82, %cst_74 {dimension_numbers = #tpu.dot_dimension_numbers<[1], [0], [0], [1], [0, 0, 1, 1], [], []>} : vector<4x4xbf16>, vector<4x286xbf16>, vector<4x286xf32> -> vector<4x286xf32>
    %84 = arith.addf %81, %83 : vector<4x286xf32>
    %c0_75 = arith.constant 0 : index
    %c2_76 = arith.constant 2 : index
    %85 = vector.load %arg8[%c0_75, %c2_76] : memref<4x324xbf16, #tpu.memory_space<vmem>>, vector<4x286xbf16>
    %cst_77 = arith.constant dense<0.000000e+00> : vector<4x286xf32>
    %86 = tpu.matmul %30, %85, %cst_77 {dimension_numbers = #tpu.dot_dimension_numbers<[1], [0], [0], [1], [0, 0, 1, 1], [], []>} : vector<4x4xbf16>, vector<4x286xbf16>, vector<4x286xf32> -> vector<4x286xf32>
    %87 = arith.addf %84, %86 : vector<4x286xf32>
    %c0_78 = arith.constant 0 : index
    %c18 = arith.constant 18 : index
    %88 = vector.load %arg8[%c0_78, %c18] : memref<4x324xbf16, #tpu.memory_space<vmem>>, vector<4x286xbf16>
    %cst_79 = arith.constant dense<0.000000e+00> : vector<4x286xf32>
    %89 = tpu.matmul %32, %88, %cst_79 {dimension_numbers = #tpu.dot_dimension_numbers<[1], [0], [0], [1], [0, 0, 1, 1], [], []>} : vector<4x4xbf16>, vector<4x286xbf16>, vector<4x286xf32> -> vector<4x286xf32>
    %90 = arith.addf %87, %89 : vector<4x286xf32>
    %c0_80 = arith.constant 0 : index
    %c19_81 = arith.constant 19 : index
    %91 = vector.load %arg8[%c0_80, %c19_81] : memref<4x324xbf16, #tpu.memory_space<vmem>>, vector<4x286xbf16>
    %cst_82 = arith.constant dense<0.000000e+00> : vector<4x286xf32>
    %92 = tpu.matmul %34, %91, %cst_82 {dimension_numbers = #tpu.dot_dimension_numbers<[1], [0], [0], [1], [0, 0, 1, 1], [], []>} : vector<4x4xbf16>, vector<4x286xbf16>, vector<4x286xf32> -> vector<4x286xf32>
    %93 = arith.addf %90, %92 : vector<4x286xf32>
    %c0_83 = arith.constant 0 : index
    %c20 = arith.constant 20 : index
    %94 = vector.load %arg8[%c0_83, %c20] : memref<4x324xbf16, #tpu.memory_space<vmem>>, vector<4x286xbf16>
    %cst_84 = arith.constant dense<0.000000e+00> : vector<4x286xf32>
    %95 = tpu.matmul %36, %94, %cst_84 {dimension_numbers = #tpu.dot_dimension_numbers<[1], [0], [0], [1], [0, 0, 1, 1], [], []>} : vector<4x4xbf16>, vector<4x286xbf16>, vector<4x286xf32> -> vector<4x286xf32>
    %96 = arith.addf %93, %95 : vector<4x286xf32>
    %c0_85 = arith.constant 0 : index
    %c36 = arith.constant 36 : index
    %97 = vector.load %arg8[%c0_85, %c36] : memref<4x324xbf16, #tpu.memory_space<vmem>>, vector<4x286xbf16>
    %cst_86 = arith.constant dense<0.000000e+00> : vector<4x286xf32>
    %98 = tpu.matmul %38, %97, %cst_86 {dimension_numbers = #tpu.dot_dimension_numbers<[1], [0], [0], [1], [0, 0, 1, 1], [], []>} : vector<4x4xbf16>, vector<4x286xbf16>, vector<4x286xf32> -> vector<4x286xf32>
    %99 = arith.addf %96, %98 : vector<4x286xf32>
    %c0_87 = arith.constant 0 : index
    %c37 = arith.constant 37 : index
    %100 = vector.load %arg8[%c0_87, %c37] : memref<4x324xbf16, #tpu.memory_space<vmem>>, vector<4x286xbf16>
    %cst_88 = arith.constant dense<0.000000e+00> : vector<4x286xf32>
    %101 = tpu.matmul %40, %100, %cst_88 {dimension_numbers = #tpu.dot_dimension_numbers<[1], [0], [0], [1], [0, 0, 1, 1], [], []>} : vector<4x4xbf16>, vector<4x286xbf16>, vector<4x286xf32> -> vector<4x286xf32>
    %102 = arith.addf %99, %101 : vector<4x286xf32>
    %c0_89 = arith.constant 0 : index
    %c38 = arith.constant 38 : index
    %103 = vector.load %arg8[%c0_89, %c38] : memref<4x324xbf16, #tpu.memory_space<vmem>>, vector<4x286xbf16>
    %cst_90 = arith.constant dense<0.000000e+00> : vector<4x286xf32>
    %104 = tpu.matmul %42, %103, %cst_90 {dimension_numbers = #tpu.dot_dimension_numbers<[1], [0], [0], [1], [0, 0, 1, 1], [], []>} : vector<4x4xbf16>, vector<4x286xbf16>, vector<4x286xf32> -> vector<4x286xf32>
    %105 = arith.addf %102, %104 : vector<4x286xf32>
    %106 = vector.extract_strided_slice %44 {offsets = [0, 19], sizes = [4, 286], strides = [1, 1]} : vector<4x324xf32> to vector<4x286xf32>
    %107 = vector.broadcast %6 : vector<4x1xf32> to vector<4x286xf32>
    %108 = arith.addf %105, %107 : vector<4x286xf32>
    %109 = arith.addf %108, %106 : vector<4x286xf32>
    %cst_91 = arith.constant 0.000000e+00 : f32
    %110 = vector.broadcast %cst_91 : f32 to vector<4x286xf32>
    %111 = arith.maximumf %109, %110 : vector<4x286xf32>
    %c0_92 = arith.constant 0 : index
    %c0_93 = arith.constant 0 : index
    %c0_94 = arith.constant 0 : index
    %112 = vector.load %arg7[%c0_92, %c0_93, %c0_94] : memref<2x4x286xf32, #tpu.memory_space<vmem>>, vector<1x4x286xf32>
    %113 = vector.shape_cast %112 : vector<1x4x286xf32> to vector<4x286xf32>
    %114 = vector.shape_cast %111 : vector<4x286xf32> to vector<1x4x286xf32>
    tpu.vector_store %arg7[%c0_92, %c0_93, %c0_94], %114 {strides = array<i32>} : memref<2x4x286xf32, #tpu.memory_space<vmem>>, vector<1x4x286xf32>,
    %c1_95 = arith.constant 1 : index
    %c0_96 = arith.constant 0 : index
    %c0_97 = arith.constant 0 : index
    %115 = vector.load %arg1[%c1_95, %c0_96, %c0_97] : memref<2x4x324xf32, #tpu.memory_space<vmem>>, vector<1x4x324xf32>
    %116 = vector.shape_cast %115 : vector<1x4x324xf32> to vector<4x324xf32>
    %117 = arith.truncf %116 : vector<4x324xf32> to vector<4x324xbf16>
    %118 = vector.extract_strided_slice %117 {offsets = [0, 0], sizes = [4, 286], strides = [1, 1]} : vector<4x324xbf16> to vector<4x286xbf16>
    %cst_98 = arith.constant dense<0.000000e+00> : vector<4x286xf32>
    %119 = tpu.matmul %8, %118, %cst_98 {dimension_numbers = #tpu.dot_dimension_numbers<[1], [0], [0], [1], [0, 0, 1, 1], [], []>} : vector<4x4xbf16>, vector<4x286xbf16>, vector<4x286xf32> -> vector<4x286xf32>
    %120 = vector.extract_strided_slice %117 {offsets = [0, 1], sizes = [4, 286], strides = [1, 1]} : vector<4x324xbf16> to vector<4x286xbf16>
    %cst_99 = arith.constant dense<0.000000e+00> : vector<4x286xf32>
    %121 = tpu.matmul %10, %120, %cst_99 {dimension_numbers = #tpu.dot_dimension_numbers<[1], [0], [0], [1], [0, 0, 1, 1], [], []>} : vector<4x4xbf16>, vector<4x286xbf16>, vector<4x286xf32> -> vector<4x286xf32>
    %122 = arith.addf %119, %121 : vector<4x286xf32>
    %123 = vector.extract_strided_slice %117 {offsets = [0, 2], sizes = [4, 286], strides = [1, 1]} : vector<4x324xbf16> to vector<4x286xbf16>
    %cst_100 = arith.constant dense<0.000000e+00> : vector<4x286xf32>
    %124 = tpu.matmul %12, %123, %cst_100 {dimension_numbers = #tpu.dot_dimension_numbers<[1], [0], [0], [1], [0, 0, 1, 1], [], []>} : vector<4x4xbf16>, vector<4x286xbf16>, vector<4x286xf32> -> vector<4x286xf32>
    %125 = arith.addf %122, %124 : vector<4x286xf32>
    %126 = vector.extract_strided_slice %117 {offsets = [0, 18], sizes = [4, 286], strides = [1, 1]} : vector<4x324xbf16> to vector<4x286xbf16>
    %cst_101 = arith.constant dense<0.000000e+00> : vector<4x286xf32>
    %127 = tpu.matmul %14, %126, %cst_101 {dimension_numbers = #tpu.dot_dimension_numbers<[1], [0], [0], [1], [0, 0, 1, 1], [], []>} : vector<4x4xbf16>, vector<4x286xbf16>, vector<4x286xf32> -> vector<4x286xf32>
    %128 = arith.addf %125, %127 : vector<4x286xf32>
    %129 = vector.extract_strided_slice %117 {offsets = [0, 19], sizes = [4, 286], strides = [1, 1]} : vector<4x324xbf16> to vector<4x286xbf16>
    %cst_102 = arith.constant dense<0.000000e+00> : vector<4x286xf32>
    %130 = tpu.matmul %16, %129, %cst_102 {dimension_numbers = #tpu.dot_dimension_numbers<[1], [0], [0], [1], [0, 0, 1, 1], [], []>} : vector<4x4xbf16>, vector<4x286xbf16>, vector<4x286xf32> -> vector<4x286xf32>
    %131 = arith.addf %128, %130 : vector<4x286xf32>
    %132 = vector.extract_strided_slice %117 {offsets = [0, 20], sizes = [4, 286], strides = [1, 1]} : vector<4x324xbf16> to vector<4x286xbf16>
    %cst_103 = arith.constant dense<0.000000e+00> : vector<4x286xf32>
    %133 = tpu.matmul %18, %132, %cst_103 {dimension_numbers = #tpu.dot_dimension_numbers<[1], [0], [0], [1], [0, 0, 1, 1], [], []>} : vector<4x4xbf16>, vector<4x286xbf16>, vector<4x286xf32> -> vector<4x286xf32>
    %134 = arith.addf %131, %133 : vector<4x286xf32>
    %135 = vector.extract_strided_slice %117 {offsets = [0, 36], sizes = [4, 286], strides = [1, 1]} : vector<4x324xbf16> to vector<4x286xbf16>
    %cst_104 = arith.constant dense<0.000000e+00> : vector<4x286xf32>
    %136 = tpu.matmul %20, %135, %cst_104 {dimension_numbers = #tpu.dot_dimension_numbers<[1], [0], [0], [1], [0, 0, 1, 1], [], []>} : vector<4x4xbf16>, vector<4x286xbf16>, vector<4x286xf32> -> vector<4x286xf32>
    %137 = arith.addf %134, %136 : vector<4x286xf32>
    %138 = vector.extract_strided_slice %117 {offsets = [0, 37], sizes = [4, 286], strides = [1, 1]} : vector<4x324xbf16> to vector<4x286xbf16>
    %cst_105 = arith.constant dense<0.000000e+00> : vector<4x286xf32>
    %139 = tpu.matmul %22, %138, %cst_105 {dimension_numbers = #tpu.dot_dimension_numbers<[1], [0], [0], [1], [0, 0, 1, 1], [], []>} : vector<4x4xbf16>, vector<4x286xbf16>, vector<4x286xf32> -> vector<4x286xf32>
    %140 = arith.addf %137, %139 : vector<4x286xf32>
    %141 = vector.extract_strided_slice %117 {offsets = [0, 38], sizes = [4, 286], strides = [1, 1]} : vector<4x324xbf16> to vector<4x286xbf16>
    %cst_106 = arith.constant dense<0.000000e+00> : vector<4x286xf32>
    %142 = tpu.matmul %24, %141, %cst_106 {dimension_numbers = #tpu.dot_dimension_numbers<[1], [0], [0], [1], [0, 0, 1, 1], [], []>} : vector<4x4xbf16>, vector<4x286xbf16>, vector<4x286xf32> -> vector<4x286xf32>
    %143 = arith.addf %140, %142 : vector<4x286xf32>
    %144 = vector.broadcast %5 : vector<4x1xf32> to vector<4x286xf32>
    %145 = arith.addf %143, %144 : vector<4x286xf32>
    %cst_107 = arith.constant 0.000000e+00 : f32
    %146 = vector.broadcast %cst_107 : f32 to vector<4x286xf32>
    %147 = arith.maximumf %145, %146 : vector<4x286xf32>
    %148 = vector.broadcast %4 : vector<1x286xf32> to vector<4x286xf32>
    %149 = arith.mulf %147, %148 : vector<4x286xf32>
    %150 = arith.truncf %149 : vector<4x286xf32> to vector<4x286xbf16>
    %c0_108 = arith.constant 0 : index
    %c19_109 = arith.constant 19 : index
    %151 = vector.load %arg8[%c0_108, %c19_109] : memref<4x324xbf16, #tpu.memory_space<vmem>>, vector<4x286xbf16>
    tpu.vector_store %arg8[%c0_108, %c19_109], %150 {strides = array<i32>} : memref<4x324xbf16, #tpu.memory_space<vmem>>, vector<4x286xbf16>,
    %c0_110 = arith.constant 0 : index
    %c0_111 = arith.constant 0 : index
    %152 = vector.load %arg8[%c0_110, %c0_111] : memref<4x324xbf16, #tpu.memory_space<vmem>>, vector<4x286xbf16>
    %cst_112 = arith.constant dense<0.000000e+00> : vector<4x286xf32>
    %153 = tpu.matmul %26, %152, %cst_112 {dimension_numbers = #tpu.dot_dimension_numbers<[1], [0], [0], [1], [0, 0, 1, 1], [], []>} : vector<4x4xbf16>, vector<4x286xbf16>, vector<4x286xf32> -> vector<4x286xf32>
    %c0_113 = arith.constant 0 : index
    %c1_114 = arith.constant 1 : index
    %154 = vector.load %arg8[%c0_113, %c1_114] : memref<4x324xbf16, #tpu.memory_space<vmem>>, vector<4x286xbf16>
    %cst_115 = arith.constant dense<0.000000e+00> : vector<4x286xf32>
    %155 = tpu.matmul %28, %154, %cst_115 {dimension_numbers = #tpu.dot_dimension_numbers<[1], [0], [0], [1], [0, 0, 1, 1], [], []>} : vector<4x4xbf16>, vector<4x286xbf16>, vector<4x286xf32> -> vector<4x286xf32>
    %156 = arith.addf %153, %155 : vector<4x286xf32>
    %c0_116 = arith.constant 0 : index
    %c2_117 = arith.constant 2 : index
    %157 = vector.load %arg8[%c0_116, %c2_117] : memref<4x324xbf16, #tpu.memory_space<vmem>>, vector<4x286xbf16>
    %cst_118 = arith.constant dense<0.000000e+00> : vector<4x286xf32>
    %158 = tpu.matmul %30, %157, %cst_118 {dimension_numbers = #tpu.dot_dimension_numbers<[1], [0], [0], [1], [0, 0, 1, 1], [], []>} : vector<4x4xbf16>, vector<4x286xbf16>, vector<4x286xf32> -> vector<4x286xf32>
    %159 = arith.addf %156, %158 : vector<4x286xf32>
    %c0_119 = arith.constant 0 : index
    %c18_120 = arith.constant 18 : index
    %160 = vector.load %arg8[%c0_119, %c18_120] : memref<4x324xbf16, #tpu.memory_space<vmem>>, vector<4x286xbf16>
    %cst_121 = arith.constant dense<0.000000e+00> : vector<4x286xf32>
    %161 = tpu.matmul %32, %160, %cst_121 {dimension_numbers = #tpu.dot_dimension_numbers<[1], [0], [0], [1], [0, 0, 1, 1], [], []>} : vector<4x4xbf16>, vector<4x286xbf16>, vector<4x286xf32> -> vector<4x286xf32>
    %162 = arith.addf %159, %161 : vector<4x286xf32>
    %c0_122 = arith.constant 0 : index
    %c19_123 = arith.constant 19 : index
    %163 = vector.load %arg8[%c0_122, %c19_123] : memref<4x324xbf16, #tpu.memory_space<vmem>>, vector<4x286xbf16>
    %cst_124 = arith.constant dense<0.000000e+00> : vector<4x286xf32>
    %164 = tpu.matmul %34, %163, %cst_124 {dimension_numbers = #tpu.dot_dimension_numbers<[1], [0], [0], [1], [0, 0, 1, 1], [], []>} : vector<4x4xbf16>, vector<4x286xbf16>, vector<4x286xf32> -> vector<4x286xf32>
    %165 = arith.addf %162, %164 : vector<4x286xf32>
    %c0_125 = arith.constant 0 : index
    %c20_126 = arith.constant 20 : index
    %166 = vector.load %arg8[%c0_125, %c20_126] : memref<4x324xbf16, #tpu.memory_space<vmem>>, vector<4x286xbf16>
    %cst_127 = arith.constant dense<0.000000e+00> : vector<4x286xf32>
    %167 = tpu.matmul %36, %166, %cst_127 {dimension_numbers = #tpu.dot_dimension_numbers<[1], [0], [0], [1], [0, 0, 1, 1], [], []>} : vector<4x4xbf16>, vector<4x286xbf16>, vector<4x286xf32> -> vector<4x286xf32>
    %168 = arith.addf %165, %167 : vector<4x286xf32>
    %c0_128 = arith.constant 0 : index
    %c36_129 = arith.constant 36 : index
    %169 = vector.load %arg8[%c0_128, %c36_129] : memref<4x324xbf16, #tpu.memory_space<vmem>>, vector<4x286xbf16>
    %cst_130 = arith.constant dense<0.000000e+00> : vector<4x286xf32>
    %170 = tpu.matmul %38, %169, %cst_130 {dimension_numbers = #tpu.dot_dimension_numbers<[1], [0], [0], [1], [0, 0, 1, 1], [], []>} : vector<4x4xbf16>, vector<4x286xbf16>, vector<4x286xf32> -> vector<4x286xf32>
    %171 = arith.addf %168, %170 : vector<4x286xf32>
    %c0_131 = arith.constant 0 : index
    %c37_132 = arith.constant 37 : index
    %172 = vector.load %arg8[%c0_131, %c37_132] : memref<4x324xbf16, #tpu.memory_space<vmem>>, vector<4x286xbf16>
    %cst_133 = arith.constant dense<0.000000e+00> : vector<4x286xf32>
    %173 = tpu.matmul %40, %172, %cst_133 {dimension_numbers = #tpu.dot_dimension_numbers<[1], [0], [0], [1], [0, 0, 1, 1], [], []>} : vector<4x4xbf16>, vector<4x286xbf16>, vector<4x286xf32> -> vector<4x286xf32>
    %174 = arith.addf %171, %173 : vector<4x286xf32>
    %c0_134 = arith.constant 0 : index
    %c38_135 = arith.constant 38 : index
    %175 = vector.load %arg8[%c0_134, %c38_135] : memref<4x324xbf16, #tpu.memory_space<vmem>>, vector<4x286xbf16>
    %cst_136 = arith.constant dense<0.000000e+00> : vector<4x286xf32>
    %176 = tpu.matmul %42, %175, %cst_136 {dimension_numbers = #tpu.dot_dimension_numbers<[1], [0], [0], [1], [0, 0, 1, 1], [], []>} : vector<4x4xbf16>, vector<4x286xbf16>, vector<4x286xf32> -> vector<4x286xf32>
    %177 = arith.addf %174, %176 : vector<4x286xf32>
    %178 = vector.extract_strided_slice %116 {offsets = [0, 19], sizes = [4, 286], strides = [1, 1]} : vector<4x324xf32> to vector<4x286xf32>
    %179 = vector.broadcast %6 : vector<4x1xf32> to vector<4x286xf32>
    %180 = arith.addf %177, %179 : vector<4x286xf32>
    %181 = arith.addf %180, %178 : vector<4x286xf32>
    %cst_137 = arith.constant 0.000000e+00 : f32
    %182 = vector.broadcast %cst_137 : f32 to vector<4x286xf32>
    %183 = arith.maximumf %181, %182 : vector<4x286xf32>
    %c1_138 = arith.constant 1 : index
    %c0_139 = arith.constant 0 : index
    %c0_140 = arith.constant 0 : index
    %184 = vector.load %arg7[%c1_138, %c0_139, %c0_140] : memref<2x4x286xf32, #tpu.memory_space<vmem>>, vector<1x4x286xf32>
    %185 = vector.shape_cast %184 : vector<1x4x286xf32> to vector<4x286xf32>
    %186 = vector.shape_cast %183 : vector<4x286xf32> to vector<1x4x286xf32>
    tpu.vector_store %arg7[%c1_138, %c0_139, %c0_140], %186 {strides = array<i32>} : memref<2x4x286xf32, #tpu.memory_space<vmem>>, vector<1x4x286xf32>,
    return
  }
  func.func @transform_0(%arg0: i32) -> (i32, i32, i32) {
    %c0_i32 = arith.constant 0 : i32
    %c0_i32_0 = arith.constant 0 : i32
    %c0_i32_1 = arith.constant 0 : i32
    return %arg0, %c0_i32, %c0_i32_0 : i32, i32, i32
  }
  func.func @transform_1(%arg0: i32) -> (i32, i32, i32) {
    %c0_i32 = arith.constant 0 : i32
    %c0_i32_0 = arith.constant 0 : i32
    %c0_i32_1 = arith.constant 0 : i32
    %c0_i32_2 = arith.constant 0 : i32
    return %c0_i32, %c0_i32_0, %c0_i32_1 : i32, i32, i32
  }
  func.func @transform_2(%arg0: i32) -> (i32, i32, i32) {
    %c0_i32 = arith.constant 0 : i32
    %c0_i32_0 = arith.constant 0 : i32
    %c0_i32_1 = arith.constant 0 : i32
    %c0_i32_2 = arith.constant 0 : i32
    return %c0_i32, %c0_i32_0, %c0_i32_1 : i32, i32, i32
  }
  func.func @transform_3(%arg0: i32) -> (i32, i32) {
    %c0_i32 = arith.constant 0 : i32
    %c0_i32_0 = arith.constant 0 : i32
    %c0_i32_1 = arith.constant 0 : i32
    return %c0_i32, %c0_i32_0 : i32, i32
  }
  func.func @transform_4(%arg0: i32) -> (i32, i32) {
    %c0_i32 = arith.constant 0 : i32
    %c0_i32_0 = arith.constant 0 : i32
    %c0_i32_1 = arith.constant 0 : i32
    return %c0_i32, %c0_i32_0 : i32, i32
  }
  func.func @transform_5(%arg0: i32) -> (i32, i32) {
    %c0_i32 = arith.constant 0 : i32
    %c0_i32_0 = arith.constant 0 : i32
    %c0_i32_1 = arith.constant 0 : i32
    return %c0_i32, %c0_i32_0 : i32, i32
  }
  func.func @transform_6(%arg0: i32) -> (i32, i32, i32) {
    %c0_i32 = arith.constant 0 : i32
    %c0_i32_0 = arith.constant 0 : i32
    %c0_i32_1 = arith.constant 0 : i32
    return %arg0, %c0_i32, %c0_i32_0 : i32, i32, i32
  }
}

</mosaic_0001>

<llo_original>
// kernel: basic_block_enc.1
$region0: #{basic_block_enc.1}
  #allocation0 [shape = 'u32[]', space=smem, size = 0x4, offset = 0x4, fixed_abs, tag = 'smem constant byte address 0x4 - core index']
  #allocation1 [shape = 'u32[144,128]{1,0:T(1,128)}', space=vmem, size = 0x12000, scoped, tag = 'internal scratch']
  #allocation2 [shape = 'bf16[4,324]{1,0:T(4,128)(2,1)}', space=vmem, size = 0xc00, scoped, tag = 'scratch operand']
  %s0 = inlined_call_operand.vmem [shape: f32[2,4,324], index: 0, kind: input, shape index: {}]
  %s1 = inlined_call_operand.vmem [shape: bf16[9,4,4], index: 1, kind: input, shape index: {}]
  %s2 = inlined_call_operand.vmem [shape: bf16[9,4,4], index: 2, kind: input, shape index: {}]
  %s3 = inlined_call_operand.vmem [shape: f32[4,1], index: 3, kind: input, shape index: {}]
  %s4 = inlined_call_operand.vmem [shape: f32[4,1], index: 4, kind: input, shape index: {}]
  %s5 = inlined_call_operand.vmem [shape: f32[1,286], index: 5, kind: input, shape index: {}]
  %s6 = inlined_call_operand.vmem [shape: f32[2,4,286], index: 6, kind: output, shape index: {}]
  %s7 = sld [smem:[#allocation0]]
  $region34: #{basic_block_enc.1} parent=0
    _
  %s9 = ssub.s32 1, %s7
  %s10 = scalar_select 0, %s9, %s7
  // Predicated region
  $region2: #{basic_block_enc.1} parent=0 // pred_check
    _
  $region3: #{basic_block_enc.1} parent=0 // pred_check_branch
    %12 = sbr.rel (0) target = $region5
  $region4: #{basic_block_enc.1} parent=0 // pred_region
    _
  $region5: #{basic_block_enc.1} parent=0 // pred_fallthru
    _
  // Predicated region
  $region6: #{basic_block_enc.1} parent=0 // pred_check
    _
  $region7: #{basic_block_enc.1} parent=0 // pred_check_branch
    %14 = sbr.rel (0) target = $region9
  $region8: #{basic_block_enc.1} parent=0 // pred_region
    _
  $region9: #{basic_block_enc.1} parent=0 // pred_fallthru
    _
  // Predicated region
  $region10: #{basic_block_enc.1} parent=0 // pred_check
    _
  $region11: #{basic_block_enc.1} parent=0 // pred_check_branch
    %16 = sbr.rel (0) target = $region13
  $region12: #{basic_block_enc.1} parent=0 // pred_region
    _
  $region13: #{basic_block_enc.1} parent=0 // pred_fallthru
    _
  // Predicated region
  $region14: #{basic_block_enc.1} parent=0 // pred_check
    _
  $region15: #{basic_block_enc.1} parent=0 // pred_check_branch
    %18 = sbr.rel (0) target = $region17
  $region16: #{basic_block_enc.1} parent=0 // pred_region
    _
  $region17: #{basic_block_enc.1} parent=0 // pred_fallthru
    _
  // Predicated region
  $region18: #{basic_block_enc.1} parent=0 // pred_check
    _
  $region19: #{basic_block_enc.1} parent=0 // pred_check_branch
    %20 = sbr.rel (0) target = $region21
  $region20: #{basic_block_enc.1} parent=0 // pred_region
    _
  $region21: #{basic_block_enc.1} parent=0 // pred_fallthru
    _
  // Predicated region
  $region22: #{basic_block_enc.1} parent=0 // pred_check
    _
  $region23: #{basic_block_enc.1} parent=0 // pred_check_branch
    %22 = sbr.rel (0) target = $region25
  $region24: #{basic_block_enc.1} parent=0 // pred_region
    _
  $region25: #{basic_block_enc.1} parent=0 // pred_fallthru
    _
  %vm24 = vcmask 148480
  %25 = vst.msk [vmem:[#allocation2] sm:$0x3] %vm24, 0
  %vm26 = vcmask 550280
  %27 = vst.msk [vmem:[#allocation2 + $0x4] sm:$0x3] %vm26, 0
  %v28 = vld [vmem:[%s5] sm:$0x7]
  %v29 = vld [vmem:[%s3] sm:$0xf]
  %v30 = vld [vmem:[%s4] sm:$0xf]
  %v31 = vld [vmem:[%s1] sm:$0x3]
  %s32 = scalar_lea.vmem %s1, 2
  %v33 = vld [vmem:[%s32] sm:$0x3]
  %s34 = scalar_lea.vmem %s1, 4
  %v35 = vld [vmem:[%s34] sm:$0x3]
  %s36 = scalar_lea.vmem %s1, 6
  %v37 = vld [vmem:[%s36] sm:$0x3]
  %s38 = scalar_lea.vmem %s1, 8
  %v39 = vld [vmem:[%s38] sm:$0x3]
  %s40 = scalar_lea.vmem %s1, 10
  %v41 = vld [vmem:[%s40] sm:$0x3]
  %s42 = scalar_lea.vmem %s1, 12
  %v43 = vld [vmem:[%s42] sm:$0x3]
  %s44 = scalar_lea.vmem %s1, 14
  %v45 = vld [vmem:[%s44] sm:$0x3]
  %s46 = scalar_lea.vmem %s1, 16
  %v47 = vld [vmem:[%s46] sm:$0x3]
  %v48 = vld [vmem:[%s2] sm:$0x3]
  %s49 = scalar_lea.vmem %s2, 2
  %v50 = vld [vmem:[%s49] sm:$0x3]
  %s51 = scalar_lea.vmem %s2, 4
  %v52 = vld [vmem:[%s51] sm:$0x3]
  %s53 = scalar_lea.vmem %s2, 6
  %v54 = vld [vmem:[%s53] sm:$0x3]
  %s55 = scalar_lea.vmem %s2, 8
  %v56 = vld [vmem:[%s55] sm:$0x3]
  %s57 = scalar_lea.vmem %s2, 10
  %v58 = vld [vmem:[%s57] sm:$0x3]
  %s59 = scalar_lea.vmem %s2, 12
  %v60 = vld [vmem:[%s59] sm:$0x3]
  %s61 = scalar_lea.vmem %s2, 14
  %v62 = vld [vmem:[%s61] sm:$0x3]
  %s63 = scalar_lea.vmem %s2, 16
  %v64 = vld [vmem:[%s63] sm:$0x3]
  %v65 = vld [vmem:[%s0] sm:$0xff]
  %v66 = vld [vmem:[%s0 + $0x8] sm:$0xf]
  %v69 = vcombine.high %v65, %v65
  %v71 = vpack.c.bf16 %v65, %v65
  %v72 = vpack.c.bf16 %v69, %v69
  %v73 = vpack.c.bf16 %v66, %v66
  %77 = vrot.lane.b32.xlu0 %v71, 127
  %v78 = vpop.permute.xlu0 %77
  %79 = vrot.lane.b32.xlu0 %v72, 127
  %v80 = vpop.permute.xlu0 %79
  %81 = vrot.lane.b32.xlu0 %v73, 127
  %v82 = vpop.permute.xlu0 %81
  %vm83 = vcmask 1039360
  %v84 = vsel %vm83, %v78, %v80
  %v85 = vsel %vm83, %v80, %v82
  %vm86 = vcmask 31744
  %v88 = vsel %vm86, %v33, 0
  %vm90 = vcmask 1041408
  %v92 = vsel %vm90, %v84, 0
  %v95 = vsel %vm90, %v85, 0
  %v98 = vsel %vm90, %v82, 0
  %100 = vmatprep.subr.bf16.mxu0 %v95
  %101 = vmatpush1.bf16.msra.mxu0 %v92
  %102 = vmatprep.subr.bf16.mxu0 0
  %103 = vmatpush1.bf16.msra.mxu0 0
  %104 = vmatprep.subr.bf16.mxu0 0
  %105 = vmatpush1.bf16.msra.mxu0 0
  %106 = vmatprep.subr.bf16.mxu0 0
  %107 = vmatpush1.bf16.msra.mxu0 0
  %108 = vmatprep.subr.bf16.mxu0 0
  %109 = vmatpush1.bf16.msra.mxu0 0
  %110 = vmatprep.subr.bf16.mxu0 0
  %111 = vmatpush1.bf16.msra.mxu0 0
  %112 = vmatprep.subr.bf16.mxu0 0
  %113 = vmatpush1.bf16.msra.mxu0 0
  %114 = vmatprep.subr.bf16.mxu0 0
  %115 = vmatpush1.bf16.msra.mxu0 0
  %116 = vmatprep.subr.bf16.mxu0 0
  %117 = vmatpush1.bf16.msra.mxu0 0
  %118 = vmatprep.subr.bf16.mxu0 0
  %119 = vmatpush1.bf16.msra.mxu0 0
  %120 = vmatprep.subr.bf16.mxu0 0
  %121 = vmatpush1.bf16.msra.mxu0 0
  %122 = vmatprep.subr.bf16.mxu0 0
  %123 = vmatpush1.bf16.msra.mxu0 0
  %124 = vmatprep.subr.bf16.mxu0 0
  %125 = vmatpush1.bf16.msra.mxu0 0
  %126 = vmatprep.subr.bf16.mxu0 0
  %127 = vmatpush1.bf16.msra.mxu0 0
  %128 = vmatprep.subr.bf16.mxu0 0
  %129 = vmatpush1.bf16.msra.mxu0 0
  %130 = vmatprep.subr.bf16.mxu0 0
  %131 = vmatpush1.bf16.msra.mxu0 0
  %132 = vmatprep.mubr.bf16.mxu0 0
  %133 = vmatmul.mubr.bf16.gmra.mrb[0].mxu0 %v88
  %v134 = vpop.f32.mrb[0].mxu0
  %v135 = vadd.f32 0.0, %v134
  %v136 = vpop.f32.mrb[0].mxu0
  %v137 = vadd.f32 0.0, %v136
  %v138 = vpop.f32.mrb[0].mxu0
  %v139 = vpop.f32.mrb[0].mxu0
  %140 = vdwg.mxu0
  %141 = vmatprep.subr.bf16.mxu0 0
  %142 = vmatpush1.bf16.msra.mxu0 %v98
  %143 = vmatprep.subr.bf16.mxu0 0
  %144 = vmatpush1.bf16.msra.mxu0 0
  %145 = vmatprep.subr.bf16.mxu0 0
  %146 = vmatpush1.bf16.msra.mxu0 0
  %147 = vmatprep.subr.bf16.mxu0 0
  %148 = vmatpush1.bf16.msra.mxu0 0
  %149 = vmatprep.subr.bf16.mxu0 0
  %150 = vmatpush1.bf16.msra.mxu0 0
  %151 = vmatprep.subr.bf16.mxu0 0
  %152 = vmatpush1.bf16.msra.mxu0 0
  %153 = vmatprep.subr.bf16.mxu0 0
  %154 = vmatpush1.bf16.msra.mxu0 0
  %155 = vmatprep.subr.bf16.mxu0 0
  %156 = vmatpush1.bf16.msra.mxu0 0
  %157 = vmatprep.subr.bf16.mxu0 0
  %158 = vmatpush1.bf16.msra.mxu0 0
  %159 = vmatprep.subr.bf16.mxu0 0
  %160 = vmatpush1.bf16.msra.mxu0 0
  %161 = vmatprep.subr.bf16.mxu0 0
  %162 = vmatpush1.bf16.msra.mxu0 0
  %163 = vmatprep.subr.bf16.mxu0 0
  %164 = vmatpush1.bf16.msra.mxu0 0
  %165 = vmatprep.subr.bf16.mxu0 0
  %166 = vmatpush1.bf16.msra.mxu0 0
  %167 = vmatprep.subr.bf16.mxu0 0
  %168 = vmatpush1.bf16.msra.mxu0 0
  %169 = vmatprep.subr.bf16.mxu0 0
  %170 = vmatpush1.bf16.msra.mxu0 0
  %171 = vmatprep.subr.bf16.mxu0 0
  %172 = vmatpush1.bf16.msra.mxu0 0
  %173 = vmatprep.mubr.bf16.mxu0 0
  %174 = vmatmul.mubr.bf16.gmra.mrb[0].mxu0 %v88
  %v175 = vpop.f32.mrb[0].mxu0
  %v176 = vadd.f32 0.0, %v175
  %v177 = vpop.f32.mrb[0].mxu0
  %v178 = vpop.f32.mrb[0].mxu0
  %v179 = vpop.f32.mrb[0].mxu0
  %180 = vdwg.mxu0
  %v182 = vsel %vm86, %v31, 0
  %v185 = vsel %vm90, %v71, 0
  %v188 = vsel %vm90, %v72, 0
  %v191 = vsel %vm90, %v73, 0
  %193 = vmatprep.subr.bf16.mxu0 %v188
  %194 = vmatpush1.bf16.msra.mxu0 %v185
  %195 = vmatprep.subr.bf16.mxu0 0
  %196 = vmatpush1.bf16.msra.mxu0 0
  %197 = vmatprep.subr.bf16.mxu0 0
  %198 = vmatpush1.bf16.msra.mxu0 0
  %199 = vmatprep.subr.bf16.mxu0 0
  %200 = vmatpush1.bf16.msra.mxu0 0
  %201 = vmatprep.subr.bf16.mxu0 0
  %202 = vmatpush1.bf16.msra.mxu0 0
  %203 = vmatprep.subr.bf16.mxu0 0
  %204 = vmatpush1.bf16.msra.mxu0 0
  %205 = vmatprep.subr.bf16.mxu0 0
  %206 = vmatpush1.bf16.msra.mxu0 0
  %207 = vmatprep.subr.bf16.mxu0 0
  %208 = vmatpush1.bf16.msra.mxu0 0
  %209 = vmatprep.subr.bf16.mxu0 0
  %210 = vmatpush1.bf16.msra.mxu0 0
  %211 = vmatprep.subr.bf16.mxu0 0
  %212 = vmatpush1.bf16.msra.mxu0 0
  %213 = vmatprep.subr.bf16.mxu0 0
  %214 = vmatpush1.bf16.msra.mxu0 0
  %215 = vmatprep.subr.bf16.mxu0 0
  %216 = vmatpush1.bf16.msra.mxu0 0
  %217 = vmatprep.subr.bf16.mxu0 0
  %218 = vmatpush1.bf16.msra.mxu0 0
  %219 = vmatprep.subr.bf16.mxu0 0
  %220 = vmatpush1.bf16.msra.mxu0 0
  %221 = vmatprep.subr.bf16.mxu0 0
  %222 = vmatpush1.bf16.msra.mxu0 0
  %223 = vmatprep.subr.bf16.mxu0 0
  %224 = vmatpush1.bf16.msra.mxu0 0
  %225 = vmatprep.mubr.bf16.mxu0 0
  %226 = vmatmul.mubr.bf16.gmra.mrb[0].mxu0 %v182
  %v227 = vpop.f32.mrb[0].mxu0
  %v228 = vadd.f32 %v135, %v227
  %v229 = vpop.f32.mrb[0].mxu0
  %v230 = vadd.f32 %v137, %v229
  %v231 = vpop.f32.mrb[0].mxu0
  %v232 = vpop.f32.mrb[0].mxu0
  %233 = vdwg.mxu0
  %234 = vmatprep.subr.bf16.mxu0 0
  %235 = vmatpush1.bf16.msra.mxu0 %v191
  %236 = vmatprep.subr.bf16.mxu0 0
  %237 = vmatpush1.bf16.msra.mxu0 0
  %238 = vmatprep.subr.bf16.mxu0 0
  %239 = vmatpush1.bf16.msra.mxu0 0
  %240 = vmatprep.subr.bf16.mxu0 0
  %241 = vmatpush1.bf16.msra.mxu0 0
  %242 = vmatprep.subr.bf16.mxu0 0
  %243 = vmatpush1.bf16.msra.mxu0 0
  %244 = vmatprep.subr.bf16.mxu0 0
  %245 = vmatpush1.bf16.msra.mxu0 0
  %246 = vmatprep.subr.bf16.mxu0 0
  %247 = vmatpush1.bf16.msra.mxu0 0
  %248 = vmatprep.subr.bf16.mxu0 0
  %249 = vmatpush1.bf16.msra.mxu0 0
  %250 = vmatprep.subr.bf16.mxu0 0
  %251 = vmatpush1.bf16.msra.mxu0 0
  %252 = vmatprep.subr.bf16.mxu0 0
  %253 = vmatpush1.bf16.msra.mxu0 0
  %254 = vmatprep.subr.bf16.mxu0 0
  %255 = vmatpush1.bf16.msra.mxu0 0
  %256 = vmatprep.subr.bf16.mxu0 0
  %257 = vmatpush1.bf16.msra.mxu0 0
  %258 = vmatprep.subr.bf16.mxu0 0
  %259 = vmatpush1.bf16.msra.mxu0 0
  %260 = vmatprep.subr.bf16.mxu0 0
  %261 = vmatpush1.bf16.msra.mxu0 0
  %262 = vmatprep.subr.bf16.mxu0 0
  %263 = vmatpush1.bf16.msra.mxu0 0
  %264 = vmatprep.subr.bf16.mxu0 0
  %265 = vmatpush1.bf16.msra.mxu0 0
  %266 = vmatprep.mubr.bf16.mxu0 0
  %267 = vmatmul.mubr.bf16.gmra.mrb[0].mxu0 %v182
  %v268 = vpop.f32.mrb[0].mxu0
  %v269 = vadd.f32 %v176, %v268
  %v270 = vpop.f32.mrb[0].mxu0
  %v271 = vpop.f32.mrb[0].mxu0
  %v272 = vpop.f32.mrb[0].mxu0
  %273 = vdwg.mxu0
  %274 = vrot.lane.b32.xlu0 %v71, 126
  %v275 = vpop.permute.xlu0 %274
  %276 = vrot.lane.b32.xlu0 %v72, 126
  %v277 = vpop.permute.xlu0 %276
  %278 = vrot.lane.b32.xlu0 %v73, 126
  %v279 = vpop.permute.xlu0 %278
  %vm280 = vcmask 1031168
  %v281 = vsel %vm280, %v275, %v277
  %v282 = vsel %vm280, %v277, %v279
  %v284 = vsel %vm86, %v35, 0
  %v287 = vsel %vm90, %v281, 0
  %v290 = vsel %vm90, %v282, 0
  %v293 = vsel %vm90, %v279, 0
  %295 = vmatprep.subr.bf16.mxu0 %v290
  %296 = vmatpush1.bf16.msra.mxu0 %v287
  %297 = vmatprep.subr.bf16.mxu0 0
  %298 = vmatpush1.bf16.msra.mxu0 0
  %299 = vmatprep.subr.bf16.mxu0 0
  %300 = vmatpush1.bf16.msra.mxu0 0
  %301 = vmatprep.subr.bf16.mxu0 0
  %302 = vmatpush1.bf16.msra.mxu0 0
  %303 = vmatprep.subr.bf16.mxu0 0
  %304 = vmatpush1.bf16.msra.mxu0 0
  %305 = vmatprep.subr.bf16.mxu0 0
  %306 = vmatpush1.bf16.msra.mxu0 0
  %307 = vmatprep.subr.bf16.mxu0 0
  %308 = vmatpush1.bf16.msra.mxu0 0
  %309 = vmatprep.subr.bf16.mxu0 0
  %310 = vmatpush1.bf16.msra.mxu0 0
  %311 = vmatprep.subr.bf16.mxu0 0
  %312 = vmatpush1.bf16.msra.mxu0 0
  %313 = vmatprep.subr.bf16.mxu0 0
  %314 = vmatpush1.bf16.msra.mxu0 0
  %315 = vmatprep.subr.bf16.mxu0 0
  %316 = vmatpush1.bf16.msra.mxu0 0
  %317 = vmatprep.subr.bf16.mxu0 0
  %318 = vmatpush1.bf16.msra.mxu0 0
  %319 = vmatprep.subr.bf16.mxu0 0
  %320 = vmatpush1.bf16.msra.mxu0 0
  %321 = vmatprep.subr.bf16.mxu0 0
  %322 = vmatpush1.bf16.msra.mxu0 0
  %323 = vmatprep.subr.bf16.mxu0 0
  %324 = vmatpush1.bf16.msra.mxu0 0
  %325 = vmatprep.subr.bf16.mxu0 0
  %326 = vmatpush1.bf16.msra.mxu0 0
  %327 = vmatprep.mubr.bf16.mxu0 0
  %328 = vmatmul.mubr.bf16.gmra.mrb[0].mxu0 %v284
  %v329 = vpop.f32.mrb[0].mxu0
  %v330 = vadd.f32 0.0, %v329
  %v331 = vpop.f32.mrb[0].mxu0
  %v332 = vadd.f32 0.0, %v331
  %v333 = vpop.f32.mrb[0].mxu0
  %v334 = vpop.f32.mrb[0].mxu0
  %335 = vdwg.mxu0
  %336 = vmatprep.subr.bf16.mxu0 0
  %337 = vmatpush1.bf16.msra.mxu0 %v293
  %338 = vmatprep.subr.bf16.mxu0 0
  %339 = vmatpush1.bf16.msra.mxu0 0
  %340 = vmatprep.subr.bf16.mxu0 0
  %341 = vmatpush1.bf16.msra.mxu0 0
  %342 = vmatprep.subr.bf16.mxu0 0
  %343 = vmatpush1.bf16.msra.mxu0 0
  %344 = vmatprep.subr.bf16.mxu0 0
  %345 = vmatpush1.bf16.msra.mxu0 0
  %346 = vmatprep.subr.bf16.mxu0 0
  %347 = vmatpush1.bf16.msra.mxu0 0
  %348 = vmatprep.subr.bf16.mxu0 0
  %349 = vmatpush1.bf16.msra.mxu0 0
  %350 = vmatprep.subr.bf16.mxu0 0
  %351 = vmatpush1.bf16.msra.mxu0 0
  %352 = vmatprep.subr.bf16.mxu0 0
  %353 = vmatpush1.bf16.msra.mxu0 0
  %354 = vmatprep.subr.bf16.mxu0 0
  %355 = vmatpush1.bf16.msra.mxu0 0
  %356 = vmatprep.subr.bf16.mxu0 0
  %357 = vmatpush1.bf16.msra.mxu0 0
  %358 = vmatprep.subr.bf16.mxu0 0
  %359 = vmatpush1.bf16.msra.mxu0 0
  %360 = vmatprep.subr.bf16.mxu0 0
  %361 = vmatpush1.bf16.msra.mxu0 0
  %362 = vmatprep.subr.bf16.mxu0 0
  %363 = vmatpush1.bf16.msra.mxu0 0
  %364 = vmatprep.subr.bf16.mxu0 0
  %365 = vmatpush1.bf16.msra.mxu0 0
  %366 = vmatprep.subr.bf16.mxu0 0
  %367 = vmatpush1.bf16.msra.mxu0 0
  %368 = vmatprep.mubr.bf16.mxu0 0
  %369 = vmatmul.mubr.bf16.gmra.mrb[0].mxu0 %v284
  %v370 = vpop.f32.mrb[0].mxu0
  %v371 = vadd.f32 0.0, %v370
  %v372 = vpop.f32.mrb[0].mxu0
  %v373 = vpop.f32.mrb[0].mxu0
  %v374 = vpop.f32.mrb[0].mxu0
  %375 = vdwg.mxu0
  %v376 = vadd.f32 %v228, %v330
  %v377 = vadd.f32 %v230, %v332
  %v378 = vadd.f32 %v269, %v371
  %379 = vrot.lane.b32.xlu0 %v71, 110
  %v380 = vpop.permute.xlu0 %379
  %381 = vrot.lane.b32.xlu0 %v72, 110
  %v382 = vpop.permute.xlu0 %381
  %383 = vrot.lane.b32.xlu0 %v73, 110
  %v384 = vpop.permute.xlu0 %383
  %vm385 = vcmask 900096
  %v386 = vsel %vm385, %v380, %v382
  %v387 = vsel %vm385, %v382, %v384
  %v389 = vsel %vm86, %v37, 0
  %v392 = vsel %vm90, %v386, 0
  %v395 = vsel %vm90, %v387, 0
  %v398 = vsel %vm90, %v384, 0
  %400 = vmatprep.subr.bf16.mxu0 %v395
  %401 = vmatpush1.bf16.msra.mxu0 %v392
  %402 = vmatprep.subr.bf16.mxu0 0
  %403 = vmatpush1.bf16.msra.mxu0 0
  %404 = vmatprep.subr.bf16.mxu0 0
  %405 = vmatpush1.bf16.msra.mxu0 0
  %406 = vmatprep.subr.bf16.mxu0 0
  %407 = vmatpush1.bf16.msra.mxu0 0
  %408 = vmatprep.subr.bf16.mxu0 0
  %409 = vmatpush1.bf16.msra.mxu0 0
  %410 = vmatprep.subr.bf16.mxu0 0
  %411 = vmatpush1.bf16.msra.mxu0 0
  %412 = vmatprep.subr.bf16.mxu0 0
  %413 = vmatpush1.bf16.msra.mxu0 0
  %414 = vmatprep.subr.bf16.mxu0 0
  %415 = vmatpush1.bf16.msra.mxu0 0
  %416 = vmatprep.subr.bf16.mxu0 0
  %417 = vmatpush1.bf16.msra.mxu0 0
  %418 = vmatprep.subr.bf16.mxu0 0
  %419 = vmatpush1.bf16.msra.mxu0 0
  %420 = vmatprep.subr.bf16.mxu0 0
  %421 = vmatpush1.bf16.msra.mxu0 0
  %422 = vmatprep.subr.bf16.mxu0 0
  %423 = vmatpush1.bf16.msra.mxu0 0
  %424 = vmatprep.subr.bf16.mxu0 0
  %425 = vmatpush1.bf16.msra.mxu0 0
  %426 = vmatprep.subr.bf16.mxu0 0
  %427 = vmatpush1.bf16.msra.mxu0 0
  %428 = vmatprep.subr.bf16.mxu0 0
  %429 = vmatpush1.bf16.msra.mxu0 0
  %430 = vmatprep.subr.bf16.mxu0 0
  %431 = vmatpush1.bf16.msra.mxu0 0
  %432 = vmatprep.mubr.bf16.mxu0 0
  %433 = vmatmul.mubr.bf16.gmra.mrb[0].mxu0 %v389
  %v434 = vpop.f32.mrb[0].mxu0
  %v435 = vadd.f32 0.0, %v434
  %v436 = vpop.f32.mrb[0].mxu0
  %v437 = vadd.f32 0.0, %v436
  %v438 = vpop.f32.mrb[0].mxu0
  %v439 = vpop.f32.mrb[0].mxu0
  %440 = vdwg.mxu0
  %441 = vmatprep.subr.bf16.mxu0 0
  %442 = vmatpush1.bf16.msra.mxu0 %v398
  %443 = vmatprep.subr.bf16.mxu0 0
  %444 = vmatpush1.bf16.msra.mxu0 0
  %445 = vmatprep.subr.bf16.mxu0 0
  %446 = vmatpush1.bf16.msra.mxu0 0
  %447 = vmatprep.subr.bf16.mxu0 0
  %448 = vmatpush1.bf16.msra.mxu0 0
  %449 = vmatprep.subr.bf16.mxu0 0
  %450 = vmatpush1.bf16.msra.mxu0 0
  %451 = vmatprep.subr.bf16.mxu0 0
  %452 = vmatpush1.bf16.msra.mxu0 0
  %453 = vmatprep.subr.bf16.mxu0 0
  %454 = vmatpush1.bf16.msra.mxu0 0
  %455 = vmatprep.subr.bf16.mxu0 0
  %456 = vmatpush1.bf16.msra.mxu0 0
  %457 = vmatprep.subr.bf16.mxu0 0
  %458 = vmatpush1.bf16.msra.mxu0 0
  %459 = vmatprep.subr.bf16.mxu0 0
  %460 = vmatpush1.bf16.msra.mxu0 0
  %461 = vmatprep.subr.bf16.mxu0 0
  %462 = vmatpush1.bf16.msra.mxu0 0
  %463 = vmatprep.subr.bf16.mxu0 0
  %464 = vmatpush1.bf16.msra.mxu0 0
  %465 = vmatprep.subr.bf16.mxu0 0
  %466 = vmatpush1.bf16.msra.mxu0 0
  %467 = vmatprep.subr.bf16.mxu0 0
  %468 = vmatpush1.bf16.msra.mxu0 0
  %469 = vmatprep.subr.bf16.mxu0 0
  %470 = vmatpush1.bf16.msra.mxu0 0
  %471 = vmatprep.subr.bf16.mxu0 0
  %472 = vmatpush1.bf16.msra.mxu0 0
  %473 = vmatprep.mubr.bf16.mxu0 0
  %474 = vmatmul.mubr.bf16.gmra.mrb[0].mxu0 %v389
  %v475 = vpop.f32.mrb[0].mxu0
  %v476 = vadd.f32 0.0, %v475
  %v477 = vpop.f32.mrb[0].mxu0
  %v478 = vpop.f32.mrb[0].mxu0
  %v479 = vpop.f32.mrb[0].mxu0
  %480 = vdwg.mxu0
  %v481 = vadd.f32 %v376, %v435
  %v482 = vadd.f32 %v377, %v437
  %v483 = vadd.f32 %v378, %v476
  %484 = vrot.lane.b32.xlu0 %v71, 109
  %v485 = vpop.permute.xlu0 %484
  %486 = vrot.lane.b32.xlu0 %v72, 109
  %v487 = vpop.permute.xlu0 %486
  %488 = vrot.lane.b32.xlu0 %v73, 109
  %v489 = vpop.permute.xlu0 %488
  %vm490 = vcmask 891904
  %v491 = vsel %vm490, %v485, %v487
  %v492 = vsel %vm490, %v487, %v489
  %v494 = vsel %vm86, %v39, 0
  %v497 = vsel %vm90, %v491, 0
  %v500 = vsel %vm90, %v492, 0
  %v503 = vsel %vm90, %v489, 0
  %505 = vmatprep.subr.bf16.mxu0 %v500
  %506 = vmatpush1.bf16.msra.mxu0 %v497
  %507 = vmatprep.subr.bf16.mxu0 0
  %508 = vmatpush1.bf16.msra.mxu0 0
  %509 = vmatprep.subr.bf16.mxu0 0
  %510 = vmatpush1.bf16.msra.mxu0 0
  %511 = vmatprep.subr.bf16.mxu0 0
  %512 = vmatpush1.bf16.msra.mxu0 0
  %513 = vmatprep.subr.bf16.mxu0 0
  %514 = vmatpush1.bf16.msra.mxu0 0
  %515 = vmatprep.subr.bf16.mxu0 0
  %516 = vmatpush1.bf16.msra.mxu0 0
  %517 = vmatprep.subr.bf16.mxu0 0
  %518 = vmatpush1.bf16.msra.mxu0 0
  %519 = vmatprep.subr.bf16.mxu0 0
  %520 = vmatpush1.bf16.msra.mxu0 0
  %521 = vmatprep.subr.bf16.mxu0 0
  %522 = vmatpush1.bf16.msra.mxu0 0
  %523 = vmatprep.subr.bf16.mxu0 0
  %524 = vmatpush1.bf16.msra.mxu0 0
  %525 = vmatprep.subr.bf16.mxu0 0
  %526 = vmatpush1.bf16.msra.mxu0 0
  %527 = vmatprep.subr.bf16.mxu0 0
  %528 = vmatpush1.bf16.msra.mxu0 0
  %529 = vmatprep.subr.bf16.mxu0 0
  %530 = vmatpush1.bf16.msra.mxu0 0
  %531 = vmatprep.subr.bf16.mxu0 0
  %532 = vmatpush1.bf16.msra.mxu0 0
  %533 = vmatprep.subr.bf16.mxu0 0
  %534 = vmatpush1.bf16.msra.mxu0 0
  %535 = vmatprep.subr.bf16.mxu0 0
  %536 = vmatpush1.bf16.msra.mxu0 0
  %537 = vmatprep.mubr.bf16.mxu0 0
  %538 = vmatmul.mubr.bf16.gmra.mrb[0].mxu0 %v494
  %v539 = vpop.f32.mrb[0].mxu0
  %v540 = vadd.f32 0.0, %v539
  %v541 = vpop.f32.mrb[0].mxu0
  %v542 = vadd.f32 0.0, %v541
  %v543 = vpop.f32.mrb[0].mxu0
  %v544 = vpop.f32.mrb[0].mxu0
  %545 = vdwg.mxu0
  %546 = vmatprep.subr.bf16.mxu0 0
  %547 = vmatpush1.bf16.msra.mxu0 %v503
  %548 = vmatprep.subr.bf16.mxu0 0
  %549 = vmatpush1.bf16.msra.mxu0 0
  %550 = vmatprep.subr.bf16.mxu0 0
  %551 = vmatpush1.bf16.msra.mxu0 0
  %552 = vmatprep.subr.bf16.mxu0 0
  %553 = vmatpush1.bf16.msra.mxu0 0
  %554 = vmatprep.subr.bf16.mxu0 0
  %555 = vmatpush1.bf16.msra.mxu0 0
  %556 = vmatprep.subr.bf16.mxu0 0
  %557 = vmatpush1.bf16.msra.mxu0 0
  %558 = vmatprep.subr.bf16.mxu0 0
  %559 = vmatpush1.bf16.msra.mxu0 0
  %560 = vmatprep.subr.bf16.mxu0 0
  %561 = vmatpush1.bf16.msra.mxu0 0
  %562 = vmatprep.subr.bf16.mxu0 0
  %563 = vmatpush1.bf16.msra.mxu0 0
  %564 = vmatprep.subr.bf16.mxu0 0
  %565 = vmatpush1.bf16.msra.mxu0 0
  %566 = vmatprep.subr.bf16.mxu0 0
  %567 = vmatpush1.bf16.msra.mxu0 0
  %568 = vmatprep.subr.bf16.mxu0 0
  %569 = vmatpush1.bf16.msra.mxu0 0
  %570 = vmatprep.subr.bf16.mxu0 0
  %571 = vmatpush1.bf16.msra.mxu0 0
  %572 = vmatprep.subr.bf16.mxu0 0
  %573 = vmatpush1.bf16.msra.mxu0 0
  %574 = vmatprep.subr.bf16.mxu0 0
  %575 = vmatpush1.bf16.msra.mxu0 0
  %576 = vmatprep.subr.bf16.mxu0 0
  %577 = vmatpush1.bf16.msra.mxu0 0
  %578 = vmatprep.mubr.bf16.mxu0 0
  %579 = vmatmul.mubr.bf16.gmra.mrb[0].mxu0 %v494
  %v580 = vpop.f32.mrb[0].mxu0
  %v581 = vadd.f32 0.0, %v580
  %v582 = vpop.f32.mrb[0].mxu0
  %v583 = vpop.f32.mrb[0].mxu0
  %v584 = vpop.f32.mrb[0].mxu0
  %585 = vdwg.mxu0
  %v586 = vadd.f32 %v481, %v540
  %v587 = vadd.f32 %v482, %v542
  %v588 = vadd.f32 %v483, %v581
  %589 = vrot.lane.b32.xlu0 %v71, 108
  %v590 = vpop.permute.xlu0 %589
  %591 = vrot.lane.b32.xlu0 %v72, 108
  %v592 = vpop.permute.xlu0 %591
  %593 = vrot.lane.b32.xlu0 %v73, 108
  %v594 = vpop.permute.xlu0 %593
  %vm595 = vcmask 883712
  %v596 = vsel %vm595, %v590, %v592
  %v597 = vsel %vm595, %v592, %v594
  %v599 = vsel %vm86, %v41, 0
  %v602 = vsel %vm90, %v596, 0
  %v605 = vsel %vm90, %v597, 0
  %v608 = vsel %vm90, %v594, 0
  %610 = vmatprep.subr.bf16.mxu0 %v605
  %611 = vmatpush1.bf16.msra.mxu0 %v602
  %612 = vmatprep.subr.bf16.mxu0 0
  %613 = vmatpush1.bf16.msra.mxu0 0
  %614 = vmatprep.subr.bf16.mxu0 0
  %615 = vmatpush1.bf16.msra.mxu0 0
  %616 = vmatprep.subr.bf16.mxu0 0
  %617 = vmatpush1.bf16.msra.mxu0 0
  %618 = vmatprep.subr.bf16.mxu0 0
  %619 = vmatpush1.bf16.msra.mxu0 0
  %620 = vmatprep.subr.bf16.mxu0 0
  %621 = vmatpush1.bf16.msra.mxu0 0
  %622 = vmatprep.subr.bf16.mxu0 0
  %623 = vmatpush1.bf16.msra.mxu0 0
  %624 = vmatprep.subr.bf16.mxu0 0
  %625 = vmatpush1.bf16.msra.mxu0 0
  %626 = vmatprep.subr.bf16.mxu0 0
  %627 = vmatpush1.bf16.msra.mxu0 0
  %628 = vmatprep.subr.bf16.mxu0 0
  %629 = vmatpush1.bf16.msra.mxu0 0
  %630 = vmatprep.subr.bf16.mxu0 0
  %631 = vmatpush1.bf16.msra.mxu0 0
  %632 = vmatprep.subr.bf16.mxu0 0
  %633 = vmatpush1.bf16.msra.mxu0 0
  %634 = vmatprep.subr.bf16.mxu0 0
  %635 = vmatpush1.bf16.msra.mxu0 0
  %636 = vmatprep.subr.bf16.mxu0 0
  %637 = vmatpush1.bf16.msra.mxu0 0
  %638 = vmatprep.subr.bf16.mxu0 0
  %639 = vmatpush1.bf16.msra.mxu0 0
  %640 = vmatprep.subr.bf16.mxu0 0
  %641 = vmatpush1.bf16.msra.mxu0 0
  %642 = vmatprep.mubr.bf16.mxu0 0
  %643 = vmatmul.mubr.bf16.gmra.mrb[0].mxu0 %v599
  %v644 = vpop.f32.mrb[0].mxu0
  %v645 = vadd.f32 0.0, %v644
  %v646 = vpop.f32.mrb[0].mxu0
  %v647 = vadd.f32 0.0, %v646
  %v648 = vpop.f32.mrb[0].mxu0
  %v649 = vpop.f32.mrb[0].mxu0
  %650 = vdwg.mxu0
  %651 = vmatprep.subr.bf16.mxu0 0
  %652 = vmatpush1.bf16.msra.mxu0 %v608
  %653 = vmatprep.subr.bf16.mxu0 0
  %654 = vmatpush1.bf16.msra.mxu0 0
  %655 = vmatprep.subr.bf16.mxu0 0
  %656 = vmatpush1.bf16.msra.mxu0 0
  %657 = vmatprep.subr.bf16.mxu0 0
  %658 = vmatpush1.bf16.msra.mxu0 0
  %659 = vmatprep.subr.bf16.mxu0 0
  %660 = vmatpush1.bf16.msra.mxu0 0
  %661 = vmatprep.subr.bf16.mxu0 0
  %662 = vmatpush1.bf16.msra.mxu0 0
  %663 = vmatprep.subr.bf16.mxu0 0
  %664 = vmatpush1.bf16.msra.mxu0 0
  %665 = vmatprep.subr.bf16.mxu0 0
  %666 = vmatpush1.bf16.msra.mxu0 0
  %667 = vmatprep.subr.bf16.mxu0 0
  %668 = vmatpush1.bf16.msra.mxu0 0
  %669 = vmatprep.subr.bf16.mxu0 0
  %670 = vmatpush1.bf16.msra.mxu0 0
  %671 = vmatprep.subr.bf16.mxu0 0
  %672 = vmatpush1.bf16.msra.mxu0 0
  %673 = vmatprep.subr.bf16.mxu0 0
  %674 = vmatpush1.bf16.msra.mxu0 0
  %675 = vmatprep.subr.bf16.mxu0 0
  %676 = vmatpush1.bf16.msra.mxu0 0
  %677 = vmatprep.subr.bf16.mxu0 0
  %678 = vmatpush1.bf16.msra.mxu0 0
  %679 = vmatprep.subr.bf16.mxu0 0
  %680 = vmatpush1.bf16.msra.mxu0 0
  %681 = vmatprep.subr.bf16.mxu0 0
  %682 = vmatpush1.bf16.msra.mxu0 0
  %683 = vmatprep.mubr.bf16.mxu0 0
  %684 = vmatmul.mubr.bf16.gmra.mrb[0].mxu0 %v599
  %v685 = vpop.f32.mrb[0].mxu0
  %v686 = vadd.f32 0.0, %v685
  %v687 = vpop.f32.mrb[0].mxu0
  %v688 = vpop.f32.mrb[0].mxu0
  %v689 = vpop.f32.mrb[0].mxu0
  %690 = vdwg.mxu0
  %v691 = vadd.f32 %v586, %v645
  %v692 = vadd.f32 %v587, %v647
  %v693 = vadd.f32 %v588, %v686
  %694 = vrot.lane.b32.xlu0 %v71, 92
  %v695 = vpop.permute.xlu0 %694
  %696 = vrot.lane.b32.xlu0 %v72, 92
  %v697 = vpop.permute.xlu0 %696
  %698 = vrot.lane.b32.xlu0 %v73, 92
  %v699 = vpop.permute.xlu0 %698
  %vm700 = vcmask 752640
  %v701 = vsel %vm700, %v695, %v697
  %v702 = vsel %vm700, %v697, %v699
  %v704 = vsel %vm86, %v43, 0
  %v707 = vsel %vm90, %v701, 0
  %v710 = vsel %vm90, %v702, 0
  %v713 = vsel %vm90, %v699, 0
  %715 = vmatprep.subr.bf16.mxu0 %v710
  %716 = vmatpush1.bf16.msra.mxu0 %v707
  %717 = vmatprep.subr.bf16.mxu0 0
  %718 = vmatpush1.bf16.msra.mxu0 0
  %719 = vmatprep.subr.bf16.mxu0 0
  %720 = vmatpush1.bf16.msra.mxu0 0
  %721 = vmatprep.subr.bf16.mxu0 0
  %722 = vmatpush1.bf16.msra.mxu0 0
  %723 = vmatprep.subr.bf16.mxu0 0
  %724 = vmatpush1.bf16.msra.mxu0 0
  %725 = vmatprep.subr.bf16.mxu0 0
  %726 = vmatpush1.bf16.msra.mxu0 0
  %727 = vmatprep.subr.bf16.mxu0 0
  %728 = vmatpush1.bf16.msra.mxu0 0
  %729 = vmatprep.subr.bf16.mxu0 0
  %730 = vmatpush1.bf16.msra.mxu0 0
  %731 = vmatprep.subr.bf16.mxu0 0
  %732 = vmatpush1.bf16.msra.mxu0 0
  %733 = vmatprep.subr.bf16.mxu0 0
  %734 = vmatpush1.bf16.msra.mxu0 0
  %735 = vmatprep.subr.bf16.mxu0 0
  %736 = vmatpush1.bf16.msra.mxu0 0
  %737 = vmatprep.subr.bf16.mxu0 0
  %738 = vmatpush1.bf16.msra.mxu0 0
  %739 = vmatprep.subr.bf16.mxu0 0
  %740 = vmatpush1.bf16.msra.mxu0 0
  %741 = vmatprep.subr.bf16.mxu0 0
  %742 = vmatpush1.bf16.msra.mxu0 0
  %743 = vmatprep.subr.bf16.mxu0 0
  %744 = vmatpush1.bf16.msra.mxu0 0
  %745 = vmatprep.subr.bf16.mxu0 0
  %746 = vmatpush1.bf16.msra.mxu0 0
  %747 = vmatprep.mubr.bf16.mxu0 0
  %748 = vmatmul.mubr.bf16.gmra.mrb[0].mxu0 %v704
  %v749 = vpop.f32.mrb[0].mxu0
  %v750 = vadd.f32 0.0, %v749
  %v751 = vpop.f32.mrb[0].mxu0
  %v752 = vadd.f32 0.0, %v751
  %v753 = vpop.f32.mrb[0].mxu0
  %v754 = vpop.f32.mrb[0].mxu0
  %755 = vdwg.mxu0
  %756 = vmatprep.subr.bf16.mxu0 0
  %757 = vmatpush1.bf16.msra.mxu0 %v713
  %758 = vmatprep.subr.bf16.mxu0 0
  %759 = vmatpush1.bf16.msra.mxu0 0
  %760 = vmatprep.subr.bf16.mxu0 0
  %761 = vmatpush1.bf16.msra.mxu0 0
  %762 = vmatprep.subr.bf16.mxu0 0
  %763 = vmatpush1.bf16.msra.mxu0 0
  %764 = vmatprep.subr.bf16.mxu0 0
  %765 = vmatpush1.bf16.msra.mxu0 0
  %766 = vmatprep.subr.bf16.mxu0 0
  %767 = vmatpush1.bf16.msra.mxu0 0
  %768 = vmatprep.subr.bf16.mxu0 0
  %769 = vmatpush1.bf16.msra.mxu0 0
  %770 = vmatprep.subr.bf16.mxu0 0
  %771 = vmatpush1.bf16.msra.mxu0 0
  %772 = vmatprep.subr.bf16.mxu0 0
  %773 = vmatpush1.bf16.msra.mxu0 0
  %774 = vmatprep.subr.bf16.mxu0 0
  %775 = vmatpush1.bf16.msra.mxu0 0
  %776 = vmatprep.subr.bf16.mxu0 0
  %777 = vmatpush1.bf16.msra.mxu0 0
  %778 = vmatprep.subr.bf16.mxu0 0
  %779 = vmatpush1.bf16.msra.mxu0 0
  %780 = vmatprep.subr.bf16.mxu0 0
  %781 = vmatpush1.bf16.msra.mxu0 0
  %782 = vmatprep.subr.bf16.mxu0 0
  %783 = vmatpush1.bf16.msra.mxu0 0
  %784 = vmatprep.subr.bf16.mxu0 0
  %785 = vmatpush1.bf16.msra.mxu0 0
  %786 = vmatprep.subr.bf16.mxu0 0
  %787 = vmatpush1.bf16.msra.mxu0 0
  %788 = vmatprep.mubr.bf16.mxu0 0
  %789 = vmatmul.mubr.bf16.gmra.mrb[0].mxu0 %v704
  %v790 = vpop.f32.mrb[0].mxu0
  %v791 = vadd.f32 0.0, %v790
  %v792 = vpop.f32.mrb[0].mxu0
  %v793 = vpop.f32.mrb[0].mxu0
  %v794 = vpop.f32.mrb[0].mxu0
  %795 = vdwg.mxu0
  %v796 = vadd.f32 %v691, %v750
  %v797 = vadd.f32 %v692, %v752
  %v798 = vadd.f32 %v693, %v791
  %799 = vrot.lane.b32.xlu0 %v71, 91
  %v800 = vpop.permute.xlu0 %799
  %801 = vrot.lane.b32.xlu0 %v72, 91
  %v802 = vpop.permute.xlu0 %801
  %803 = vrot.lane.b32.xlu0 %v73, 91
  %v804 = vpop.permute.xlu0 %803
  %vm805 = vcmask 744448
  %v806 = vsel %vm805, %v800, %v802
  %v807 = vsel %vm805, %v802, %v804
  %v809 = vsel %vm86, %v45, 0
  %v812 = vsel %vm90, %v806, 0
  %v815 = vsel %vm90, %v807, 0
  %v818 = vsel %vm90, %v804, 0
  %820 = vmatprep.subr.bf16.mxu0 %v815
  %821 = vmatpush1.bf16.msra.mxu0 %v812
  %822 = vmatprep.subr.bf16.mxu0 0
  %823 = vmatpush1.bf16.msra.mxu0 0
  %824 = vmatprep.subr.bf16.mxu0 0
  %825 = vmatpush1.bf16.msra.mxu0 0
  %826 = vmatprep.subr.bf16.mxu0 0
  %827 = vmatpush1.bf16.msra.mxu0 0
  %828 = vmatprep.subr.bf16.mxu0 0
  %829 = vmatpush1.bf16.msra.mxu0 0
  %830 = vmatprep.subr.bf16.mxu0 0
  %831 = vmatpush1.bf16.msra.mxu0 0
  %832 = vmatprep.subr.bf16.mxu0 0
  %833 = vmatpush1.bf16.msra.mxu0 0
  %834 = vmatprep.subr.bf16.mxu0 0
  %835 = vmatpush1.bf16.msra.mxu0 0
  %836 = vmatprep.subr.bf16.mxu0 0
  %837 = vmatpush1.bf16.msra.mxu0 0
  %838 = vmatprep.subr.bf16.mxu0 0
  %839 = vmatpush1.bf16.msra.mxu0 0
  %840 = vmatprep.subr.bf16.mxu0 0
  %841 = vmatpush1.bf16.msra.mxu0 0
  %842 = vmatprep.subr.bf16.mxu0 0
  %843 = vmatpush1.bf16.msra.mxu0 0
  %844 = vmatprep.subr.bf16.mxu0 0
  %845 = vmatpush1.bf16.msra.mxu0 0
  %846 = vmatprep.subr.bf16.mxu0 0
  %847 = vmatpush1.bf16.msra.mxu0 0
  %848 = vmatprep.subr.bf16.mxu0 0
  %849 = vmatpush1.bf16.msra.mxu0 0
  %850 = vmatprep.subr.bf16.mxu0 0
  %851 = vmatpush1.bf16.msra.mxu0 0
  %852 = vmatprep.mubr.bf16.mxu0 0
  %853 = vmatmul.mubr.bf16.gmra.mrb[0].mxu0 %v809
  %v854 = vpop.f32.mrb[0].mxu0
  %v855 = vadd.f32 0.0, %v854
  %v856 = vpop.f32.mrb[0].mxu0
  %v857 = vadd.f32 0.0, %v856
  %v858 = vpop.f32.mrb[0].mxu0
  %v859 = vpop.f32.mrb[0].mxu0
  %860 = vdwg.mxu0
  %861 = vmatprep.subr.bf16.mxu0 0
  %862 = vmatpush1.bf16.msra.mxu0 %v818
  %863 = vmatprep.subr.bf16.mxu0 0
  %864 = vmatpush1.bf16.msra.mxu0 0
  %865 = vmatprep.subr.bf16.mxu0 0
  %866 = vmatpush1.bf16.msra.mxu0 0
  %867 = vmatprep.subr.bf16.mxu0 0
  %868 = vmatpush1.bf16.msra.mxu0 0
  %869 = vmatprep.subr.bf16.mxu0 0
  %870 = vmatpush1.bf16.msra.mxu0 0
  %871 = vmatprep.subr.bf16.mxu0 0
  %872 = vmatpush1.bf16.msra.mxu0 0
  %873 = vmatprep.subr.bf16.mxu0 0
  %874 = vmatpush1.bf16.msra.mxu0 0
  %875 = vmatprep.subr.bf16.mxu0 0
  %876 = vmatpush1.bf16.msra.mxu0 0
  %877 = vmatprep.subr.bf16.mxu0 0
  %878 = vmatpush1.bf16.msra.mxu0 0
  %879 = vmatprep.subr.bf16.mxu0 0
  %880 = vmatpush1.bf16.msra.mxu0 0
  %881 = vmatprep.subr.bf16.mxu0 0
  %882 = vmatpush1.bf16.msra.mxu0 0
  %883 = vmatprep.subr.bf16.mxu0 0
  %884 = vmatpush1.bf16.msra.mxu0 0
  %885 = vmatprep.subr.bf16.mxu0 0
  %886 = vmatpush1.bf16.msra.mxu0 0
  %887 = vmatprep.subr.bf16.mxu0 0
  %888 = vmatpush1.bf16.msra.mxu0 0
  %889 = vmatprep.subr.bf16.mxu0 0
  %890 = vmatpush1.bf16.msra.mxu0 0
  %891 = vmatprep.subr.bf16.mxu0 0
  %892 = vmatpush1.bf16.msra.mxu0 0
  %893 = vmatprep.mubr.bf16.mxu0 0
  %894 = vmatmul.mubr.bf16.gmra.mrb[0].mxu0 %v809
  %v895 = vpop.f32.mrb[0].mxu0
  %v896 = vadd.f32 0.0, %v895
  %v897 = vpop.f32.mrb[0].mxu0
  %v898 = vpop.f32.mrb[0].mxu0
  %v899 = vpop.f32.mrb[0].mxu0
  %900 = vdwg.mxu0
  %v901 = vadd.f32 %v796, %v855
  %v902 = vadd.f32 %v797, %v857
  %v903 = vadd.f32 %v798, %v896
  %904 = vrot.lane.b32.xlu0 %v71, 90
  %v905 = vpop.permute.xlu0 %904
  %906 = vrot.lane.b32.xlu0 %v72, 90
  %v907 = vpop.permute.xlu0 %906
  %908 = vrot.lane.b32.xlu0 %v73, 90
  %v909 = vpop.permute.xlu0 %908
  %vm910 = vcmask 736256
  %v911 = vsel %vm910, %v905, %v907
  %v912 = vsel %vm910, %v907, %v909
  %v914 = vsel %vm86, %v47, 0
  %v917 = vsel %vm90, %v911, 0
  %v920 = vsel %vm90, %v912, 0
  %v923 = vsel %vm90, %v909, 0
  %925 = vmatprep.subr.bf16.mxu0 %v920
  %926 = vmatpush1.bf16.msra.mxu0 %v917
  %927 = vmatprep.subr.bf16.mxu0 0
  %928 = vmatpush1.bf16.msra.mxu0 0
  %929 = vmatprep.subr.bf16.mxu0 0
  %930 = vmatpush1.bf16.msra.mxu0 0
  %931 = vmatprep.subr.bf16.mxu0 0
  %932 = vmatpush1.bf16.msra.mxu0 0
  %933 = vmatprep.subr.bf16.mxu0 0
  %934 = vmatpush1.bf16.msra.mxu0 0
  %935 = vmatprep.subr.bf16.mxu0 0
  %936 = vmatpush1.bf16.msra.mxu0 0
  %937 = vmatprep.subr.bf16.mxu0 0
  %938 = vmatpush1.bf16.msra.mxu0 0
  %939 = vmatprep.subr.bf16.mxu0 0
  %940 = vmatpush1.bf16.msra.mxu0 0
  %941 = vmatprep.subr.bf16.mxu0 0
  %942 = vmatpush1.bf16.msra.mxu0 0
  %943 = vmatprep.subr.bf16.mxu0 0
  %944 = vmatpush1.bf16.msra.mxu0 0
  %945 = vmatprep.subr.bf16.mxu0 0
  %946 = vmatpush1.bf16.msra.mxu0 0
  %947 = vmatprep.subr.bf16.mxu0 0
  %948 = vmatpush1.bf16.msra.mxu0 0
  %949 = vmatprep.subr.bf16.mxu0 0
  %950 = vmatpush1.bf16.msra.mxu0 0
  %951 = vmatprep.subr.bf16.mxu0 0
  %952 = vmatpush1.bf16.msra.mxu0 0
  %953 = vmatprep.subr.bf16.mxu0 0
  %954 = vmatpush1.bf16.msra.mxu0 0
  %955 = vmatprep.subr.bf16.mxu0 0
  %956 = vmatpush1.bf16.msra.mxu0 0
  %957 = vmatprep.mubr.bf16.mxu0 0
  %958 = vmatmul.mubr.bf16.gmra.mrb[0].mxu0 %v914
  %v959 = vpop.f32.mrb[0].mxu0
  %v960 = vadd.f32 0.0, %v959
  %v961 = vpop.f32.mrb[0].mxu0
  %v962 = vadd.f32 0.0, %v961
  %v963 = vpop.f32.mrb[0].mxu0
  %v964 = vpop.f32.mrb[0].mxu0
  %965 = vdwg.mxu0
  %966 = vmatprep.subr.bf16.mxu0 0
  %967 = vmatpush1.bf16.msra.mxu0 %v923
  %968 = vmatprep.subr.bf16.mxu0 0
  %969 = vmatpush1.bf16.msra.mxu0 0
  %970 = vmatprep.subr.bf16.mxu0 0
  %971 = vmatpush1.bf16.msra.mxu0 0
  %972 = vmatprep.subr.bf16.mxu0 0
  %973 = vmatpush1.bf16.msra.mxu0 0
  %974 = vmatprep.subr.bf16.mxu0 0
  %975 = vmatpush1.bf16.msra.mxu0 0
  %976 = vmatprep.subr.bf16.mxu0 0
  %977 = vmatpush1.bf16.msra.mxu0 0
  %978 = vmatprep.subr.bf16.mxu0 0
  %979 = vmatpush1.bf16.msra.mxu0 0
  %980 = vmatprep.subr.bf16.mxu0 0
  %981 = vmatpush1.bf16.msra.mxu0 0
  %982 = vmatprep.subr.bf16.mxu0 0
  %983 = vmatpush1.bf16.msra.mxu0 0
  %984 = vmatprep.subr.bf16.mxu0 0
  %985 = vmatpush1.bf16.msra.mxu0 0
  %986 = vmatprep.subr.bf16.mxu0 0
  %987 = vmatpush1.bf16.msra.mxu0 0
  %988 = vmatprep.subr.bf16.mxu0 0
  %989 = vmatpush1.bf16.msra.mxu0 0
  %990 = vmatprep.subr.bf16.mxu0 0
  %991 = vmatpush1.bf16.msra.mxu0 0
  %992 = vmatprep.subr.bf16.mxu0 0
  %993 = vmatpush1.bf16.msra.mxu0 0
  %994 = vmatprep.subr.bf16.mxu0 0
  %995 = vmatpush1.bf16.msra.mxu0 0
  %996 = vmatprep.subr.bf16.mxu0 0
  %997 = vmatpush1.bf16.msra.mxu0 0
  %998 = vmatprep.mubr.bf16.mxu0 0
  %999 = vmatmul.mubr.bf16.gmra.mrb[0].mxu0 %v914
  %v1000 = vpop.f32.mrb[0].mxu0
  %v1001 = vadd.f32 0.0, %v1000
  %v1002 = vpop.f32.mrb[0].mxu0
  %v1003 = vpop.f32.mrb[0].mxu0
  %v1004 = vpop.f32.mrb[0].mxu0
  %1005 = vdwg.mxu0
  %v1006 = vadd.f32 %v901, %v960
  %v1007 = vadd.f32 %v902, %v962
  %v1008 = vadd.f32 %v903, %v1001
  %1010 = vset.pattern.permute.xlu0 0
  %1011 = vperm.xlu0 %1010, %v29
  %v1012 = vpop.permute.xlu0 %1011
  %v1014 = vadd.f32 %v1006, %v1012
  %v1015 = vadd.f32 %v1007, %v1012
  %v1016 = vadd.f32 %v1008, %v1012
  %v1017 = vmax.f32 %v1014, 0.0
  %v1018 = vmax.f32 %v1015, 0.0
  %v1019 = vmax.f32 %v1016, 0.0
  %v1021 = vlaneseq
  %v1022 = vshrl.u32 %v1021, 7
  %v1023 = vsub.s32 0, %v1022
  %v1024 = vrot.slane %v28, %v1023
  %v1025 = vlaneseq
  %v1026 = vshrl.u32 %v1025, 7
  %v1027 = vsub.s32 1, %v1026
  %v1028 = vrot.slane %v28, %v1027
  %v1029 = vlaneseq
  %v1030 = vshrl.u32 %v1029, 7
  %v1031 = vsub.s32 2, %v1030
  %v1032 = vrot.slane %v28, %v1031
  %v1036 = vmul.f32 %v1017, %v1024
  %v1037 = vmul.f32 %v1018, %v1028
  %v1038 = vmul.f32 %v1019, %v1032
  %v1039 = vpack.c.bf16 %v1036, %v1036
  %v1040 = vpack.c.bf16 %v1037, %v1037
  %v1041 = vpack.c.bf16 %v1038, %v1038
  %v1045 = vcombine.low %v1039, %v1040
  %v1047 = vunpack.c.l.s4 1983009808
  %v1048 = vunpack.c.0.s8 %v1047
  %v1049 = vlaneseq
  %v1050 = vshrl.u32 %v1049, 7
  %v1051 = vsub.s32 %v1048, %v1050
  %v1052 = vrot.slane %v1045, %v1051
  %v1054 = vunpack.c.l.s4 1983009808
  %v1055 = vunpack.c.0.s8 %v1054
  %v1056 = vlaneseq
  %v1057 = vshrl.u32 %v1056, 7
  %v1058 = vsub.s32 %v1055, %v1057
  %v1059 = vrot.slane %v1041, %v1058
  %v1060 = vcombine.low %v1052, %v1059
  %1061 = vrot.lane.b32.xlu0 %v1060, 19
  %v1062 = vpop.permute.xlu0 %1061
  %v1063 = vrot.slane %v1062, 6
  %vm1064 = vcmask 154624
  %v1065 = vsel %vm1064, %v1063, %v1062
  %vm1067 = vcmask 1041560
  %vm1068 = vcmask 1043458
  %vm1069 = vmor %vm1068, %vm1067
  %vm1070 = vcmask 398340
  %vm1071 = vmor %vm1070, %vm1069
  %1072 = vst.msk [vmem:[#allocation2] sm:$0x3f] %vm1071, %v1065
  %v1073 = vld [vmem:[#allocation2] sm:$0x3f]
  %v1075 = vcombine.high %v1073, %v1073
  %v1077 = vunpack.c.l.s4 1983009808
  %v1078 = vunpack.c.0.s8 %v1077
  %v1079 = vlaneseq
  %v1080 = vshrl.u32 %v1079, 7
  %v1081 = vsub.s32 %v1078, %v1080
  %v1082 = vrot.slane %v1073, %v1081
  %v1084 = vunpack.c.l.s4 1983009808
  %v1085 = vunpack.c.0.s8 %v1084
  %v1086 = vlaneseq
  %v1087 = vshrl.u32 %v1086, 7
  %v1088 = vsub.s32 %v1085, %v1087
  %v1089 = vrot.slane %v1075, %v1088
  %v1090 = vcombine.high %v1082, %v1082
  %1091 = vrot.lane.b32.xlu0 %v1082, 127
  %v1092 = vpop.permute.xlu0 %1091
  %1093 = vrot.lane.b32.xlu0 %v1090, 127
  %v1094 = vpop.permute.xlu0 %1093
  %1095 = vrot.lane.b32.xlu0 %v1089, 127
  %v1096 = vpop.permute.xlu0 %1095
  %v1097 = vsel %vm83, %v1092, %v1094
  %v1098 = vsel %vm83, %v1094, %v1096
  %v1100 = vsel %vm86, %v50, 0
  %v1103 = vsel %vm90, %v1097, 0
  %v1106 = vsel %vm90, %v1098, 0
  %v1109 = vsel %vm90, %v1096, 0
  %1111 = vmatprep.subr.bf16.mxu0 %v1106
  %1112 = vmatpush1.bf16.msra.mxu0 %v1103
  %1113 = vmatprep.subr.bf16.mxu0 0
  %1114 = vmatpush1.bf16.msra.mxu0 0
  %1115 = vmatprep.subr.bf16.mxu0 0
  %1116 = vmatpush1.bf16.msra.mxu0 0
  %1117 = vmatprep.subr.bf16.mxu0 0
  %1118 = vmatpush1.bf16.msra.mxu0 0
  %1119 = vmatprep.subr.bf16.mxu0 0
  %1120 = vmatpush1.bf16.msra.mxu0 0
  %1121 = vmatprep.subr.bf16.mxu0 0
  %1122 = vmatpush1.bf16.msra.mxu0 0
  %1123 = vmatprep.subr.bf16.mxu0 0
  %1124 = vmatpush1.bf16.msra.mxu0 0
  %1125 = vmatprep.subr.bf16.mxu0 0
  %1126 = vmatpush1.bf16.msra.mxu0 0
  %1127 = vmatprep.subr.bf16.mxu0 0
  %1128 = vmatpush1.bf16.msra.mxu0 0
  %1129 = vmatprep.subr.bf16.mxu0 0
  %1130 = vmatpush1.bf16.msra.mxu0 0
  %1131 = vmatprep.subr.bf16.mxu0 0
  %1132 = vmatpush1.bf16.msra.mxu0 0
  %1133 = vmatprep.subr.bf16.mxu0 0
  %1134 = vmatpush1.bf16.msra.mxu0 0
  %1135 = vmatprep.subr.bf16.mxu0 0
  %1136 = vmatpush1.bf16.msra.mxu0 0
  %1137 = vmatprep.subr.bf16.mxu0 0
  %1138 = vmatpush1.bf16.msra.mxu0 0
  %1139 = vmatprep.subr.bf16.mxu0 0
  %1140 = vmatpush1.bf16.msra.mxu0 0
  %1141 = vmatprep.subr.bf16.mxu0 0
  %1142 = vmatpush1.bf16.msra.mxu0 0
  %1143 = vmatprep.mubr.bf16.mxu0 0
  %1144 = vmatmul.mubr.bf16.gmra.mrb[0].mxu0 %v1100
  %v1145 = vpop.f32.mrb[0].mxu0
  %v1146 = vadd.f32 0.0, %v1145
  %v1147 = vpop.f32.mrb[0].mxu0
  %v1148 = vadd.f32 0.0, %v1147
  %v1149 = vpop.f32.mrb[0].mxu0
  %v1150 = vpop.f32.mrb[0].mxu0
  %1151 = vdwg.mxu0
  %1152 = vmatprep.subr.bf16.mxu0 0
  %1153 = vmatpush1.bf16.msra.mxu0 %v1109
  %1154 = vmatprep.subr.bf16.mxu0 0
  %1155 = vmatpush1.bf16.msra.mxu0 0
  %1156 = vmatprep.subr.bf16.mxu0 0
  %1157 = vmatpush1.bf16.msra.mxu0 0
  %1158 = vmatprep.subr.bf16.mxu0 0
  %1159 = vmatpush1.bf16.msra.mxu0 0
  %1160 = vmatprep.subr.bf16.mxu0 0
  %1161 = vmatpush1.bf16.msra.mxu0 0
  %1162 = vmatprep.subr.bf16.mxu0 0
  %1163 = vmatpush1.bf16.msra.mxu0 0
  %1164 = vmatprep.subr.bf16.mxu0 0
  %1165 = vmatpush1.bf16.msra.mxu0 0
  %1166 = vmatprep.subr.bf16.mxu0 0
  %1167 = vmatpush1.bf16.msra.mxu0 0
  %1168 = vmatprep.subr.bf16.mxu0 0
  %1169 = vmatpush1.bf16.msra.mxu0 0
  %1170 = vmatprep.subr.bf16.mxu0 0
  %1171 = vmatpush1.bf16.msra.mxu0 0
  %1172 = vmatprep.subr.bf16.mxu0 0
  %1173 = vmatpush1.bf16.msra.mxu0 0
  %1174 = vmatprep.subr.bf16.mxu0 0
  %1175 = vmatpush1.bf16.msra.mxu0 0
  %1176 = vmatprep.subr.bf16.mxu0 0
  %1177 = vmatpush1.bf16.msra.mxu0 0
  %1178 = vmatprep.subr.bf16.mxu0 0
  %1179 = vmatpush1.bf16.msra.mxu0 0
  %1180 = vmatprep.subr.bf16.mxu0 0
  %1181 = vmatpush1.bf16.msra.mxu0 0
  %1182 = vmatprep.subr.bf16.mxu0 0
  %1183 = vmatpush1.bf16.msra.mxu0 0
  %1184 = vmatprep.mubr.bf16.mxu0 0
  %1185 = vmatmul.mubr.bf16.gmra.mrb[0].mxu0 %v1100
  %v1186 = vpop.f32.mrb[0].mxu0
  %v1187 = vadd.f32 0.0, %v1186
  %v1188 = vpop.f32.mrb[0].mxu0
  %v1189 = vpop.f32.mrb[0].mxu0
  %v1190 = vpop.f32.mrb[0].mxu0
  %1191 = vdwg.mxu0
  %v1193 = vsel %vm86, %v48, 0
  %v1196 = vsel %vm90, %v1082, 0
  %v1199 = vsel %vm90, %v1090, 0
  %v1202 = vsel %vm90, %v1089, 0
  %1204 = vmatprep.subr.bf16.mxu0 %v1199
  %1205 = vmatpush1.bf16.msra.mxu0 %v1196
  %1206 = vmatprep.subr.bf16.mxu0 0
  %1207 = vmatpush1.bf16.msra.mxu0 0
  %1208 = vmatprep.subr.bf16.mxu0 0
  %1209 = vmatpush1.bf16.msra.mxu0 0
  %1210 = vmatprep.subr.bf16.mxu0 0
  %1211 = vmatpush1.bf16.msra.mxu0 0
  %1212 = vmatprep.subr.bf16.mxu0 0
  %1213 = vmatpush1.bf16.msra.mxu0 0
  %1214 = vmatprep.subr.bf16.mxu0 0
  %1215 = vmatpush1.bf16.msra.mxu0 0
  %1216 = vmatprep.subr.bf16.mxu0 0
  %1217 = vmatpush1.bf16.msra.mxu0 0
  %1218 = vmatprep.subr.bf16.mxu0 0
  %1219 = vmatpush1.bf16.msra.mxu0 0
  %1220 = vmatprep.subr.bf16.mxu0 0
  %1221 = vmatpush1.bf16.msra.mxu0 0
  %1222 = vmatprep.subr.bf16.mxu0 0
  %1223 = vmatpush1.bf16.msra.mxu0 0
  %1224 = vmatprep.subr.bf16.mxu0 0
  %1225 = vmatpush1.bf16.msra.mxu0 0
  %1226 = vmatprep.subr.bf16.mxu0 0
  %1227 = vmatpush1.bf16.msra.mxu0 0
  %1228 = vmatprep.subr.bf16.mxu0 0
  %1229 = vmatpush1.bf16.msra.mxu0 0
  %1230 = vmatprep.subr.bf16.mxu0 0
  %1231 = vmatpush1.bf16.msra.mxu0 0
  %1232 = vmatprep.subr.bf16.mxu0 0
  %1233 = vmatpush1.bf16.msra.mxu0 0
  %1234 = vmatprep.subr.bf16.mxu0 0
  %1235 = vmatpush1.bf16.msra.mxu0 0
  %1236 = vmatprep.mubr.bf16.mxu0 0
  %1237 = vmatmul.mubr.bf16.gmra.mrb[0].mxu0 %v1193
  %v1238 = vpop.f32.mrb[0].mxu0
  %v1239 = vadd.f32 %v1146, %v1238
  %v1240 = vpop.f32.mrb[0].mxu0
  %v1241 = vadd.f32 %v1148, %v1240
  %v1242 = vpop.f32.mrb[0].mxu0
  %v1243 = vpop.f32.mrb[0].mxu0
  %1244 = vdwg.mxu0
  %1245 = vmatprep.subr.bf16.mxu0 0
  %1246 = vmatpush1.bf16.msra.mxu0 %v1202
  %1247 = vmatprep.subr.bf16.mxu0 0
  %1248 = vmatpush1.bf16.msra.mxu0 0
  %1249 = vmatprep.subr.bf16.mxu0 0
  %1250 = vmatpush1.bf16.msra.mxu0 0
  %1251 = vmatprep.subr.bf16.mxu0 0
  %1252 = vmatpush1.bf16.msra.mxu0 0
  %1253 = vmatprep.subr.bf16.mxu0 0
  %1254 = vmatpush1.bf16.msra.mxu0 0
  %1255 = vmatprep.subr.bf16.mxu0 0
  %1256 = vmatpush1.bf16.msra.mxu0 0
  %1257 = vmatprep.subr.bf16.mxu0 0
  %1258 = vmatpush1.bf16.msra.mxu0 0
  %1259 = vmatprep.subr.bf16.mxu0 0
  %1260 = vmatpush1.bf16.msra.mxu0 0
  %1261 = vmatprep.subr.bf16.mxu0 0
  %1262 = vmatpush1.bf16.msra.mxu0 0
  %1263 = vmatprep.subr.bf16.mxu0 0
  %1264 = vmatpush1.bf16.msra.mxu0 0
  %1265 = vmatprep.subr.bf16.mxu0 0
  %1266 = vmatpush1.bf16.msra.mxu0 0
  %1267 = vmatprep.subr.bf16.mxu0 0
  %1268 = vmatpush1.bf16.msra.mxu0 0
  %1269 = vmatprep.subr.bf16.mxu0 0
  %1270 = vmatpush1.bf16.msra.mxu0 0
  %1271 = vmatprep.subr.bf16.mxu0 0
  %1272 = vmatpush1.bf16.msra.mxu0 0
  %1273 = vmatprep.subr.bf16.mxu0 0
  %1274 = vmatpush1.bf16.msra.mxu0 0
  %1275 = vmatprep.subr.bf16.mxu0 0
  %1276 = vmatpush1.bf16.msra.mxu0 0
  %1277 = vmatprep.mubr.bf16.mxu0 0
  %1278 = vmatmul.mubr.bf16.gmra.mrb[0].mxu0 %v1193
  %v1279 = vpop.f32.mrb[0].mxu0
  %v1280 = vadd.f32 %v1187, %v1279
  %v1281 = vpop.f32.mrb[0].mxu0
  %v1282 = vpop.f32.mrb[0].mxu0
  %v1283 = vpop.f32.mrb[0].mxu0
  %1284 = vdwg.mxu0
  %v1285 = vld [vmem:[#allocation2] sm:$0x3f]
  %v1287 = vcombine.high %v1285, %v1285
  %v1289 = vunpack.c.l.s4 1983009808
  %v1290 = vunpack.c.0.s8 %v1289
  %v1291 = vlaneseq
  %v1292 = vshrl.u32 %v1291, 7
  %v1293 = vsub.s32 %v1290, %v1292
  %v1294 = vrot.slane %v1285, %v1293
  %v1296 = vunpack.c.l.s4 1983009808
  %v1297 = vunpack.c.0.s8 %v1296
  %v1298 = vlaneseq
  %v1299 = vshrl.u32 %v1298, 7
  %v1300 = vsub.s32 %v1297, %v1299
  %v1301 = vrot.slane %v1287, %v1300
  %v1302 = vcombine.high %v1294, %v1294
  %1303 = vrot.lane.b32.xlu0 %v1294, 126
  %v1304 = vpop.permute.xlu0 %1303
  %1305 = vrot.lane.b32.xlu0 %v1302, 126
  %v1306 = vpop.permute.xlu0 %1305
  %1307 = vrot.lane.b32.xlu0 %v1301, 126
  %v1308 = vpop.permute.xlu0 %1307
  %v1309 = vsel %vm280, %v1304, %v1306
  %v1310 = vsel %vm280, %v1306, %v1308
  %v1312 = vsel %vm86, %v52, 0
  %v1315 = vsel %vm90, %v1309, 0
  %v1318 = vsel %vm90, %v1310, 0
  %v1321 = vsel %vm90, %v1308, 0
  %1323 = vmatprep.subr.bf16.mxu0 %v1318
  %1324 = vmatpush1.bf16.msra.mxu0 %v1315
  %1325 = vmatprep.subr.bf16.mxu0 0
  %1326 = vmatpush1.bf16.msra.mxu0 0
  %1327 = vmatprep.subr.bf16.mxu0 0
  %1328 = vmatpush1.bf16.msra.mxu0 0
  %1329 = vmatprep.subr.bf16.mxu0 0
  %1330 = vmatpush1.bf16.msra.mxu0 0
  %1331 = vmatprep.subr.bf16.mxu0 0
  %1332 = vmatpush1.bf16.msra.mxu0 0
  %1333 = vmatprep.subr.bf16.mxu0 0
  %1334 = vmatpush1.bf16.msra.mxu0 0
  %1335 = vmatprep.subr.bf16.mxu0 0
  %1336 = vmatpush1.bf16.msra.mxu0 0
  %1337 = vmatprep.subr.bf16.mxu0 0
  %1338 = vmatpush1.bf16.msra.mxu0 0
  %1339 = vmatprep.subr.bf16.mxu0 0
  %1340 = vmatpush1.bf16.msra.mxu0 0
  %1341 = vmatprep.subr.bf16.mxu0 0
  %1342 = vmatpush1.bf16.msra.mxu0 0
  %1343 = vmatprep.subr.bf16.mxu0 0
  %1344 = vmatpush1.bf16.msra.mxu0 0
  %1345 = vmatprep.subr.bf16.mxu0 0
  %1346 = vmatpush1.bf16.msra.mxu0 0
  %1347 = vmatprep.subr.bf16.mxu0 0
  %1348 = vmatpush1.bf16.msra.mxu0 0
  %1349 = vmatprep.subr.bf16.mxu0 0
  %1350 = vmatpush1.bf16.msra.mxu0 0
  %1351 = vmatprep.subr.bf16.mxu0 0
  %1352 = vmatpush1.bf16.msra.mxu0 0
  %1353 = vmatprep.subr.bf16.mxu0 0
  %1354 = vmatpush1.bf16.msra.mxu0 0
  %1355 = vmatprep.mubr.bf16.mxu0 0
  %1356 = vmatmul.mubr.bf16.gmra.mrb[0].mxu0 %v1312
  %v1357 = vpop.f32.mrb[0].mxu0
  %v1358 = vadd.f32 0.0, %v1357
  %v1359 = vpop.f32.mrb[0].mxu0
  %v1360 = vadd.f32 0.0, %v1359
  %v1361 = vpop.f32.mrb[0].mxu0
  %v1362 = vpop.f32.mrb[0].mxu0
  %1363 = vdwg.mxu0
  %1364 = vmatprep.subr.bf16.mxu0 0
  %1365 = vmatpush1.bf16.msra.mxu0 %v1321
  %1366 = vmatprep.subr.bf16.mxu0 0
  %1367 = vmatpush1.bf16.msra.mxu0 0
  %1368 = vmatprep.subr.bf16.mxu0 0
  %1369 = vmatpush1.bf16.msra.mxu0 0
  %1370 = vmatprep.subr.bf16.mxu0 0
  %1371 = vmatpush1.bf16.msra.mxu0 0
  %1372 = vmatprep.subr.bf16.mxu0 0
  %1373 = vmatpush1.bf16.msra.mxu0 0
  %1374 = vmatprep.subr.bf16.mxu0 0
  %1375 = vmatpush1.bf16.msra.mxu0 0
  %1376 = vmatprep.subr.bf16.mxu0 0
  %1377 = vmatpush1.bf16.msra.mxu0 0
  %1378 = vmatprep.subr.bf16.mxu0 0
  %1379 = vmatpush1.bf16.msra.mxu0 0
  %1380 = vmatprep.subr.bf16.mxu0 0
  %1381 = vmatpush1.bf16.msra.mxu0 0
  %1382 = vmatprep.subr.bf16.mxu0 0
  %1383 = vmatpush1.bf16.msra.mxu0 0
  %1384 = vmatprep.subr.bf16.mxu0 0
  %1385 = vmatpush1.bf16.msra.mxu0 0
  %1386 = vmatprep.subr.bf16.mxu0 0
  %1387 = vmatpush1.bf16.msra.mxu0 0
  %1388 = vmatprep.subr.bf16.mxu0 0
  %1389 = vmatpush1.bf16.msra.mxu0 0
  %1390 = vmatprep.subr.bf16.mxu0 0
  %1391 = vmatpush1.bf16.msra.mxu0 0
  %1392 = vmatprep.subr.bf16.mxu0 0
  %1393 = vmatpush1.bf16.msra.mxu0 0
  %1394 = vmatprep.subr.bf16.mxu0 0
  %1395 = vmatpush1.bf16.msra.mxu0 0
  %1396 = vmatprep.mubr.bf16.mxu0 0
  %1397 = vmatmul.mubr.bf16.gmra.mrb[0].mxu0 %v1312
  %v1398 = vpop.f32.mrb[0].mxu0
  %v1399 = vadd.f32 0.0, %v1398
  %v1400 = vpop.f32.mrb[0].mxu0
  %v1401 = vpop.f32.mrb[0].mxu0
  %v1402 = vpop.f32.mrb[0].mxu0
  %1403 = vdwg.mxu0
  %v1404 = vadd.f32 %v1239, %v1358
  %v1405 = vadd.f32 %v1241, %v1360
  %v1406 = vadd.f32 %v1280, %v1399
  %v1407 = vld [vmem:[#allocation2] sm:$0x3f]
  %v1409 = vcombine.high %v1407, %v1407
  %v1411 = vunpack.c.l.s4 1983009808
  %v1412 = vunpack.c.0.s8 %v1411
  %v1413 = vlaneseq
  %v1414 = vshrl.u32 %v1413, 7
  %v1415 = vsub.s32 %v1412, %v1414
  %v1416 = vrot.slane %v1407, %v1415
  %v1418 = vunpack.c.l.s4 1983009808
  %v1419 = vunpack.c.0.s8 %v1418
  %v1420 = vlaneseq
  %v1421 = vshrl.u32 %v1420, 7
  %v1422 = vsub.s32 %v1419, %v1421
  %v1423 = vrot.slane %v1409, %v1422
  %v1424 = vcombine.high %v1416, %v1416
  %1425 = vrot.lane.b32.xlu0 %v1416, 110
  %v1426 = vpop.permute.xlu0 %1425
  %1427 = vrot.lane.b32.xlu0 %v1424, 110
  %v1428 = vpop.permute.xlu0 %1427
  %1429 = vrot.lane.b32.xlu0 %v1423, 110
  %v1430 = vpop.permute.xlu0 %1429
  %v1431 = vsel %vm385, %v1426, %v1428
  %v1432 = vsel %vm385, %v1428, %v1430
  %v1434 = vsel %vm86, %v54, 0
  %v1437 = vsel %vm90, %v1431, 0
  %v1440 = vsel %vm90, %v1432, 0
  %v1443 = vsel %vm90, %v1430, 0
  %1445 = vmatprep.subr.bf16.mxu0 %v1440
  %1446 = vmatpush1.bf16.msra.mxu0 %v1437
  %1447 = vmatprep.subr.bf16.mxu0 0
  %1448 = vmatpush1.bf16.msra.mxu0 0
  %1449 = vmatprep.subr.bf16.mxu0 0
  %1450 = vmatpush1.bf16.msra.mxu0 0
  %1451 = vmatprep.subr.bf16.mxu0 0
  %1452 = vmatpush1.bf16.msra.mxu0 0
  %1453 = vmatprep.subr.bf16.mxu0 0
  %1454 = vmatpush1.bf16.msra.mxu0 0
  %1455 = vmatprep.subr.bf16.mxu0 0
  %1456 = vmatpush1.bf16.msra.mxu0 0
  %1457 = vmatprep.subr.bf16.mxu0 0
  %1458 = vmatpush1.bf16.msra.mxu0 0
  %1459 = vmatprep.subr.bf16.mxu0 0
  %1460 = vmatpush1.bf16.msra.mxu0 0
  %1461 = vmatprep.subr.bf16.mxu0 0
  %1462 = vmatpush1.bf16.msra.mxu0 0
  %1463 = vmatprep.subr.bf16.mxu0 0
  %1464 = vmatpush1.bf16.msra.mxu0 0
  %1465 = vmatprep.subr.bf16.mxu0 0
  %1466 = vmatpush1.bf16.msra.mxu0 0
  %1467 = vmatprep.subr.bf16.mxu0 0
  %1468 = vmatpush1.bf16.msra.mxu0 0
  %1469 = vmatprep.subr.bf16.mxu0 0
  %1470 = vmatpush1.bf16.msra.mxu0 0
  %1471 = vmatprep.subr.bf16.mxu0 0
  %1472 = vmatpush1.bf16.msra.mxu0 0
  %1473 = vmatprep.subr.bf16.mxu0 0
  %1474 = vmatpush1.bf16.msra.mxu0 0
  %1475 = vmatprep.subr.bf16.mxu0 0
  %1476 = vmatpush1.bf16.msra.mxu0 0
  %1477 = vmatprep.mubr.bf16.mxu0 0
  %1478 = vmatmul.mubr.bf16.gmra.mrb[0].mxu0 %v1434
  %v1479 = vpop.f32.mrb[0].mxu0
  %v1480 = vadd.f32 0.0, %v1479
  %v1481 = vpop.f32.mrb[0].mxu0
  %v1482 = vadd.f32 0.0, %v1481
  %v1483 = vpop.f32.mrb[0].mxu0
  %v1484 = vpop.f32.mrb[0].mxu0
  %1485 = vdwg.mxu0
  %1486 = vmatprep.subr.bf16.mxu0 0
  %1487 = vmatpush1.bf16.msra.mxu0 %v1443
  %1488 = vmatprep.subr.bf16.mxu0 0
  %1489 = vmatpush1.bf16.msra.mxu0 0
  %1490 = vmatprep.subr.bf16.mxu0 0
  %1491 = vmatpush1.bf16.msra.mxu0 0
  %1492 = vmatprep.subr.bf16.mxu0 0
  %1493 = vmatpush1.bf16.msra.mxu0 0
  %1494 = vmatprep.subr.bf16.mxu0 0
  %1495 = vmatpush1.bf16.msra.mxu0 0
  %1496 = vmatprep.subr.bf16.mxu0 0
  %1497 = vmatpush1.bf16.msra.mxu0 0
  %1498 = vmatprep.subr.bf16.mxu0 0
  %1499 = vmatpush1.bf16.msra.mxu0 0
  %1500 = vmatprep.subr.bf16.mxu0 0
  %1501 = vmatpush1.bf16.msra.mxu0 0
  %1502 = vmatprep.subr.bf16.mxu0 0
  %1503 = vmatpush1.bf16.msra.mxu0 0
  %1504 = vmatprep.subr.bf16.mxu0 0
  %1505 = vmatpush1.bf16.msra.mxu0 0
  %1506 = vmatprep.subr.bf16.mxu0 0
  %1507 = vmatpush1.bf16.msra.mxu0 0
  %1508 = vmatprep.subr.bf16.mxu0 0
  %1509 = vmatpush1.bf16.msra.mxu0 0
  %1510 = vmatprep.subr.bf16.mxu0 0
  %1511 = vmatpush1.bf16.msra.mxu0 0
  %1512 = vmatprep.subr.bf16.mxu0 0
  %1513 = vmatpush1.bf16.msra.mxu0 0
  %1514 = vmatprep.subr.bf16.mxu0 0
  %1515 = vmatpush1.bf16.msra.mxu0 0
  %1516 = vmatprep.subr.bf16.mxu0 0
  %1517 = vmatpush1.bf16.msra.mxu0 0
  %1518 = vmatprep.mubr.bf16.mxu0 0
  %1519 = vmatmul.mubr.bf16.gmra.mrb[0].mxu0 %v1434
  %v1520 = vpop.f32.mrb[0].mxu0
  %v1521 = vadd.f32 0.0, %v1520
  %v1522 = vpop.f32.mrb[0].mxu0
  %v1523 = vpop.f32.mrb[0].mxu0
  %v1524 = vpop.f32.mrb[0].mxu0
  %1525 = vdwg.mxu0
  %v1526 = vadd.f32 %v1404, %v1480
  %v1527 = vadd.f32 %v1405, %v1482
  %v1528 = vadd.f32 %v1406, %v1521
  %v1529 = vld [vmem:[#allocation2] sm:$0x3f]
  %v1531 = vcombine.high %v1529, %v1529
  %v1533 = vunpack.c.l.s4 1983009808
  %v1534 = vunpack.c.0.s8 %v1533
  %v1535 = vlaneseq
  %v1536 = vshrl.u32 %v1535, 7
  %v1537 = vsub.s32 %v1534, %v1536
  %v1538 = vrot.slane %v1529, %v1537
  %v1540 = vunpack.c.l.s4 1983009808
  %v1541 = vunpack.c.0.s8 %v1540
  %v1542 = vlaneseq
  %v1543 = vshrl.u32 %v1542, 7
  %v1544 = vsub.s32 %v1541, %v1543
  %v1545 = vrot.slane %v1531, %v1544
  %v1546 = vcombine.high %v1538, %v1538
  %1547 = vrot.lane.b32.xlu0 %v1538, 109
  %v1548 = vpop.permute.xlu0 %1547
  %1549 = vrot.lane.b32.xlu0 %v1546, 109
  %v1550 = vpop.permute.xlu0 %1549
  %1551 = vrot.lane.b32.xlu0 %v1545, 109
  %v1552 = vpop.permute.xlu0 %1551
  %v1553 = vsel %vm490, %v1548, %v1550
  %v1554 = vsel %vm490, %v1550, %v1552
  %v1556 = vsel %vm86, %v56, 0
  %v1559 = vsel %vm90, %v1553, 0
  %v1562 = vsel %vm90, %v1554, 0
  %v1565 = vsel %vm90, %v1552, 0
  %1567 = vmatprep.subr.bf16.mxu0 %v1562
  %1568 = vmatpush1.bf16.msra.mxu0 %v1559
  %1569 = vmatprep.subr.bf16.mxu0 0
  %1570 = vmatpush1.bf16.msra.mxu0 0
  %1571 = vmatprep.subr.bf16.mxu0 0
  %1572 = vmatpush1.bf16.msra.mxu0 0
  %1573 = vmatprep.subr.bf16.mxu0 0
  %1574 = vmatpush1.bf16.msra.mxu0 0
  %1575 = vmatprep.subr.bf16.mxu0 0
  %1576 = vmatpush1.bf16.msra.mxu0 0
  %1577 = vmatprep.subr.bf16.mxu0 0
  %1578 = vmatpush1.bf16.msra.mxu0 0
  %1579 = vmatprep.subr.bf16.mxu0 0
  %1580 = vmatpush1.bf16.msra.mxu0 0
  %1581 = vmatprep.subr.bf16.mxu0 0
  %1582 = vmatpush1.bf16.msra.mxu0 0
  %1583 = vmatprep.subr.bf16.mxu0 0
  %1584 = vmatpush1.bf16.msra.mxu0 0
  %1585 = vmatprep.subr.bf16.mxu0 0
  %1586 = vmatpush1.bf16.msra.mxu0 0
  %1587 = vmatprep.subr.bf16.mxu0 0
  %1588 = vmatpush1.bf16.msra.mxu0 0
  %1589 = vmatprep.subr.bf16.mxu0 0
  %1590 = vmatpush1.bf16.msra.mxu0 0
  %1591 = vmatprep.subr.bf16.mxu0 0
  %1592 = vmatpush1.bf16.msra.mxu0 0
  %1593 = vmatprep.subr.bf16.mxu0 0
  %1594 = vmatpush1.bf16.msra.mxu0 0
  %1595 = vmatprep.subr.bf16.mxu0 0
  %1596 = vmatpush1.bf16.msra.mxu0 0
  %1597 = vmatprep.subr.bf16.mxu0 0
  %1598 = vmatpush1.bf16.msra.mxu0 0
  %1599 = vmatprep.mubr.bf16.mxu0 0
  %1600 = vmatmul.mubr.bf16.gmra.mrb[0].mxu0 %v1556
  %v1601 = vpop.f32.mrb[0].mxu0
  %v1602 = vadd.f32 0.0, %v1601
  %v1603 = vpop.f32.mrb[0].mxu0
  %v1604 = vadd.f32 0.0, %v1603
  %v1605 = vpop.f32.mrb[0].mxu0
  %v1606 = vpop.f32.mrb[0].mxu0
  %1607 = vdwg.mxu0
  %1608 = vmatprep.subr.bf16.mxu0 0
  %1609 = vmatpush1.bf16.msra.mxu0 %v1565
  %1610 = vmatprep.subr.bf16.mxu0 0
  %1611 = vmatpush1.bf16.msra.mxu0 0
  %1612 = vmatprep.subr.bf16.mxu0 0
  %1613 = vmatpush1.bf16.msra.mxu0 0
  %1614 = vmatprep.subr.bf16.mxu0 0
  %1615 = vmatpush1.bf16.msra.mxu0 0
  %1616 = vmatprep.subr.bf16.mxu0 0
  %1617 = vmatpush1.bf16.msra.mxu0 0
  %1618 = vmatprep.subr.bf16.mxu0 0
  %1619 = vmatpush1.bf16.msra.mxu0 0
  %1620 = vmatprep.subr.bf16.mxu0 0
  %1621 = vmatpush1.bf16.msra.mxu0 0
  %1622 = vmatprep.subr.bf16.mxu0 0
  %1623 = vmatpush1.bf16.msra.mxu0 0
  %1624 = vmatprep.subr.bf16.mxu0 0
  %1625 = vmatpush1.bf16.msra.mxu0 0
  %1626 = vmatprep.subr.bf16.mxu0 0
  %1627 = vmatpush1.bf16.msra.mxu0 0
  %1628 = vmatprep.subr.bf16.mxu0 0
  %1629 = vmatpush1.bf16.msra.mxu0 0
  %1630 = vmatprep.subr.bf16.mxu0 0
  %1631 = vmatpush1.bf16.msra.mxu0 0
  %1632 = vmatprep.subr.bf16.mxu0 0
  %1633 = vmatpush1.bf16.msra.mxu0 0
  %1634 = vmatprep.subr.bf16.mxu0 0
  %1635 = vmatpush1.bf16.msra.mxu0 0
  %1636 = vmatprep.subr.bf16.mxu0 0
  %1637 = vmatpush1.bf16.msra.mxu0 0
  %1638 = vmatprep.subr.bf16.mxu0 0
  %1639 = vmatpush1.bf16.msra.mxu0 0
  %1640 = vmatprep.mubr.bf16.mxu0 0
  %1641 = vmatmul.mubr.bf16.gmra.mrb[0].mxu0 %v1556
  %v1642 = vpop.f32.mrb[0].mxu0
  %v1643 = vadd.f32 0.0, %v1642
  %v1644 = vpop.f32.mrb[0].mxu0
  %v1645 = vpop.f32.mrb[0].mxu0
  %v1646 = vpop.f32.mrb[0].mxu0
  %1647 = vdwg.mxu0
  %v1648 = vadd.f32 %v1526, %v1602
  %v1649 = vadd.f32 %v1527, %v1604
  %v1650 = vadd.f32 %v1528, %v1643
  %v1651 = vld [vmem:[#allocation2] sm:$0x3f]
  %v1653 = vcombine.high %v1651, %v1651
  %v1655 = vunpack.c.l.s4 1983009808
  %v1656 = vunpack.c.0.s8 %v1655
  %v1657 = vlaneseq
  %v1658 = vshrl.u32 %v1657, 7
  %v1659 = vsub.s32 %v1656, %v1658
  %v1660 = vrot.slane %v1651, %v1659
  %v1662 = vunpack.c.l.s4 1983009808
  %v1663 = vunpack.c.0.s8 %v1662
  %v1664 = vlaneseq
  %v1665 = vshrl.u32 %v1664, 7
  %v1666 = vsub.s32 %v1663, %v1665
  %v1667 = vrot.slane %v1653, %v1666
  %v1668 = vcombine.high %v1660, %v1660
  %1669 = vrot.lane.b32.xlu0 %v1660, 108
  %v1670 = vpop.permute.xlu0 %1669
  %1671 = vrot.lane.b32.xlu0 %v1668, 108
  %v1672 = vpop.permute.xlu0 %1671
  %1673 = vrot.lane.b32.xlu0 %v1667, 108
  %v1674 = vpop.permute.xlu0 %1673
  %v1675 = vsel %vm595, %v1670, %v1672
  %v1676 = vsel %vm595, %v1672, %v1674
  %v1678 = vsel %vm86, %v58, 0
  %v1681 = vsel %vm90, %v1675, 0
  %v1684 = vsel %vm90, %v1676, 0
  %v1687 = vsel %vm90, %v1674, 0
  %1689 = vmatprep.subr.bf16.mxu0 %v1684
  %1690 = vmatpush1.bf16.msra.mxu0 %v1681
  %1691 = vmatprep.subr.bf16.mxu0 0
  %1692 = vmatpush1.bf16.msra.mxu0 0
  %1693 = vmatprep.subr.bf16.mxu0 0
  %1694 = vmatpush1.bf16.msra.mxu0 0
  %1695 = vmatprep.subr.bf16.mxu0 0
  %1696 = vmatpush1.bf16.msra.mxu0 0
  %1697 = vmatprep.subr.bf16.mxu0 0
  %1698 = vmatpush1.bf16.msra.mxu0 0
  %1699 = vmatprep.subr.bf16.mxu0 0
  %1700 = vmatpush1.bf16.msra.mxu0 0
  %1701 = vmatprep.subr.bf16.mxu0 0
  %1702 = vmatpush1.bf16.msra.mxu0 0
  %1703 = vmatprep.subr.bf16.mxu0 0
  %1704 = vmatpush1.bf16.msra.mxu0 0
  %1705 = vmatprep.subr.bf16.mxu0 0
  %1706 = vmatpush1.bf16.msra.mxu0 0
  %1707 = vmatprep.subr.bf16.mxu0 0
  %1708 = vmatpush1.bf16.msra.mxu0 0
  %1709 = vmatprep.subr.bf16.mxu0 0
  %1710 = vmatpush1.bf16.msra.mxu0 0
  %1711 = vmatprep.subr.bf16.mxu0 0
  %1712 = vmatpush1.bf16.msra.mxu0 0
  %1713 = vmatprep.subr.bf16.mxu0 0
  %1714 = vmatpush1.bf16.msra.mxu0 0
  %1715 = vmatprep.subr.bf16.mxu0 0
  %1716 = vmatpush1.bf16.msra.mxu0 0
  %1717 = vmatprep.subr.bf16.mxu0 0
  %1718 = vmatpush1.bf16.msra.mxu0 0
  %1719 = vmatprep.subr.bf16.mxu0 0
  %1720 = vmatpush1.bf16.msra.mxu0 0
  %1721 = vmatprep.mubr.bf16.mxu0 0
  %1722 = vmatmul.mubr.bf16.gmra.mrb[0].mxu0 %v1678
  %v1723 = vpop.f32.mrb[0].mxu0
  %v1724 = vadd.f32 0.0, %v1723
  %v1725 = vpop.f32.mrb[0].mxu0
  %v1726 = vadd.f32 0.0, %v1725
  %v1727 = vpop.f32.mrb[0].mxu0
  %v1728 = vpop.f32.mrb[0].mxu0
  %1729 = vdwg.mxu0
  %1730 = vmatprep.subr.bf16.mxu0 0
  %1731 = vmatpush1.bf16.msra.mxu0 %v1687
  %1732 = vmatprep.subr.bf16.mxu0 0
  %1733 = vmatpush1.bf16.msra.mxu0 0
  %1734 = vmatprep.subr.bf16.mxu0 0
  %1735 = vmatpush1.bf16.msra.mxu0 0
  %1736 = vmatprep.subr.bf16.mxu0 0
  %1737 = vmatpush1.bf16.msra.mxu0 0
  %1738 = vmatprep.subr.bf16.mxu0 0
  %1739 = vmatpush1.bf16.msra.mxu0 0
  %1740 = vmatprep.subr.bf16.mxu0 0
  %1741 = vmatpush1.bf16.msra.mxu0 0
  %1742 = vmatprep.subr.bf16.mxu0 0
  %1743 = vmatpush1.bf16.msra.mxu0 0
  %1744 = vmatprep.subr.bf16.mxu0 0
  %1745 = vmatpush1.bf16.msra.mxu0 0
  %1746 = vmatprep.subr.bf16.mxu0 0
  %1747 = vmatpush1.bf16.msra.mxu0 0
  %1748 = vmatprep.subr.bf16.mxu0 0
  %1749 = vmatpush1.bf16.msra.mxu0 0
  %1750 = vmatprep.subr.bf16.mxu0 0
  %1751 = vmatpush1.bf16.msra.mxu0 0
  %1752 = vmatprep.subr.bf16.mxu0 0
  %1753 = vmatpush1.bf16.msra.mxu0 0
  %1754 = vmatprep.subr.bf16.mxu0 0
  %1755 = vmatpush1.bf16.msra.mxu0 0
  %1756 = vmatprep.subr.bf16.mxu0 0
  %1757 = vmatpush1.bf16.msra.mxu0 0
  %1758 = vmatprep.subr.bf16.mxu0 0
  %1759 = vmatpush1.bf16.msra.mxu0 0
  %1760 = vmatprep.subr.bf16.mxu0 0
  %1761 = vmatpush1.bf16.msra.mxu0 0
  %1762 = vmatprep.mubr.bf16.mxu0 0
  %1763 = vmatmul.mubr.bf16.gmra.mrb[0].mxu0 %v1678
  %v1764 = vpop.f32.mrb[0].mxu0
  %v1765 = vadd.f32 0.0, %v1764
  %v1766 = vpop.f32.mrb[0].mxu0
  %v1767 = vpop.f32.mrb[0].mxu0
  %v1768 = vpop.f32.mrb[0].mxu0
  %1769 = vdwg.mxu0
  %v1770 = vadd.f32 %v1648, %v1724
  %v1771 = vadd.f32 %v1649, %v1726
  %v1772 = vadd.f32 %v1650, %v1765
  %v1773 = vld [vmem:[#allocation2] sm:$0x3f]
  %v1775 = vcombine.high %v1773, %v1773
  %v1777 = vunpack.c.l.s4 1983009808
  %v1778 = vunpack.c.0.s8 %v1777
  %v1779 = vlaneseq
  %v1780 = vshrl.u32 %v1779, 7
  %v1781 = vsub.s32 %v1778, %v1780
  %v1782 = vrot.slane %v1773, %v1781
  %v1784 = vunpack.c.l.s4 1983009808
  %v1785 = vunpack.c.0.s8 %v1784
  %v1786 = vlaneseq
  %v1787 = vshrl.u32 %v1786, 7
  %v1788 = vsub.s32 %v1785, %v1787
  %v1789 = vrot.slane %v1775, %v1788
  %v1790 = vcombine.high %v1782, %v1782
  %1791 = vrot.lane.b32.xlu0 %v1782, 92
  %v1792 = vpop.permute.xlu0 %1791
  %1793 = vrot.lane.b32.xlu0 %v1790, 92
  %v1794 = vpop.permute.xlu0 %1793
  %1795 = vrot.lane.b32.xlu0 %v1789, 92
  %v1796 = vpop.permute.xlu0 %1795
  %v1797 = vsel %vm700, %v1792, %v1794
  %v1798 = vsel %vm700, %v1794, %v1796
  %v1800 = vsel %vm86, %v60, 0
  %v1803 = vsel %vm90, %v1797, 0
  %v1806 = vsel %vm90, %v1798, 0
  %v1809 = vsel %vm90, %v1796, 0
  %1811 = vmatprep.subr.bf16.mxu0 %v1806
  %1812 = vmatpush1.bf16.msra.mxu0 %v1803
  %1813 = vmatprep.subr.bf16.mxu0 0
  %1814 = vmatpush1.bf16.msra.mxu0 0
  %1815 = vmatprep.subr.bf16.mxu0 0
  %1816 = vmatpush1.bf16.msra.mxu0 0
  %1817 = vmatprep.subr.bf16.mxu0 0
  %1818 = vmatpush1.bf16.msra.mxu0 0
  %1819 = vmatprep.subr.bf16.mxu0 0
  %1820 = vmatpush1.bf16.msra.mxu0 0
  %1821 = vmatprep.subr.bf16.mxu0 0
  %1822 = vmatpush1.bf16.msra.mxu0 0
  %1823 = vmatprep.subr.bf16.mxu0 0
  %1824 = vmatpush1.bf16.msra.mxu0 0
  %1825 = vmatprep.subr.bf16.mxu0 0
  %1826 = vmatpush1.bf16.msra.mxu0 0
  %1827 = vmatprep.subr.bf16.mxu0 0
  %1828 = vmatpush1.bf16.msra.mxu0 0
  %1829 = vmatprep.subr.bf16.mxu0 0
  %1830 = vmatpush1.bf16.msra.mxu0 0
  %1831 = vmatprep.subr.bf16.mxu0 0
  %1832 = vmatpush1.bf16.msra.mxu0 0
  %1833 = vmatprep.subr.bf16.mxu0 0
  %1834 = vmatpush1.bf16.msra.mxu0 0
  %1835 = vmatprep.subr.bf16.mxu0 0
  %1836 = vmatpush1.bf16.msra.mxu0 0
  %1837 = vmatprep.subr.bf16.mxu0 0
  %1838 = vmatpush1.bf16.msra.mxu0 0
  %1839 = vmatprep.subr.bf16.mxu0 0
  %1840 = vmatpush1.bf16.msra.mxu0 0
  %1841 = vmatprep.subr.bf16.mxu0 0
  %1842 = vmatpush1.bf16.msra.mxu0 0
  %1843 = vmatprep.mubr.bf16.mxu0 0
  %1844 = vmatmul.mubr.bf16.gmra.mrb[0].mxu0 %v1800
  %v1845 = vpop.f32.mrb[0].mxu0
  %v1846 = vadd.f32 0.0, %v1845
  %v1847 = vpop.f32.mrb[0].mxu0
  %v1848 = vadd.f32 0.0, %v1847
  %v1849 = vpop.f32.mrb[0].mxu0
  %v1850 = vpop.f32.mrb[0].mxu0
  %1851 = vdwg.mxu0
  %1852 = vmatprep.subr.bf16.mxu0 0
  %1853 = vmatpush1.bf16.msra.mxu0 %v1809
  %1854 = vmatprep.subr.bf16.mxu0 0
  %1855 = vmatpush1.bf16.msra.mxu0 0
  %1856 = vmatprep.subr.bf16.mxu0 0
  %1857 = vmatpush1.bf16.msra.mxu0 0
  %1858 = vmatprep.subr.bf16.mxu0 0
  %1859 = vmatpush1.bf16.msra.mxu0 0
  %1860 = vmatprep.subr.bf16.mxu0 0
  %1861 = vmatpush1.bf16.msra.mxu0 0
  %1862 = vmatprep.subr.bf16.mxu0 0
  %1863 = vmatpush1.bf16.msra.mxu0 0
  %1864 = vmatprep.subr.bf16.mxu0 0
  %1865 = vmatpush1.bf16.msra.mxu0 0
  %1866 = vmatprep.subr.bf16.mxu0 0
  %1867 = vmatpush1.bf16.msra.mxu0 0
  %1868 = vmatprep.subr.bf16.mxu0 0
  %1869 = vmatpush1.bf16.msra.mxu0 0
  %1870 = vmatprep.subr.bf16.mxu0 0
  %1871 = vmatpush1.bf16.msra.mxu0 0
  %1872 = vmatprep.subr.bf16.mxu0 0
  %1873 = vmatpush1.bf16.msra.mxu0 0
  %1874 = vmatprep.subr.bf16.mxu0 0
  %1875 = vmatpush1.bf16.msra.mxu0 0
  %1876 = vmatprep.subr.bf16.mxu0 0
  %1877 = vmatpush1.bf16.msra.mxu0 0
  %1878 = vmatprep.subr.bf16.mxu0 0
  %1879 = vmatpush1.bf16.msra.mxu0 0
  %1880 = vmatprep.subr.bf16.mxu0 0
  %1881 = vmatpush1.bf16.msra.mxu0 0
  %1882 = vmatprep.subr.bf16.mxu0 0
  %1883 = vmatpush1.bf16.msra.mxu0 0
  %1884 = vmatprep.mubr.bf16.mxu0 0
  %1885 = vmatmul.mubr.bf16.gmra.mrb[0].mxu0 %v1800
  %v1886 = vpop.f32.mrb[0].mxu0
  %v1887 = vadd.f32 0.0, %v1886
  %v1888 = vpop.f32.mrb[0].mxu0
  %v1889 = vpop.f32.mrb[0].mxu0
  %v1890 = vpop.f32.mrb[0].mxu0
  %1891 = vdwg.mxu0
  %v1892 = vadd.f32 %v1770, %v1846
  %v1893 = vadd.f32 %v1771, %v1848
  %v1894 = vadd.f32 %v1772, %v1887
  %v1895 = vld [vmem:[#allocation2] sm:$0x3f]
  %v1897 = vcombine.high %v1895, %v1895
  %v1899 = vunpack.c.l.s4 1983009808
  %v1900 = vunpack.c.0.s8 %v1899
  %v1901 = vlaneseq
  %v1902 = vshrl.u32 %v1901, 7
  %v1903 = vsub.s32 %v1900, %v1902
  %v1904 = vrot.slane %v1895, %v1903
  %v1906 = vunpack.c.l.s4 1983009808
  %v1907 = vunpack.c.0.s8 %v1906
  %v1908 = vlaneseq
  %v1909 = vshrl.u32 %v1908, 7
  %v1910 = vsub.s32 %v1907, %v1909
  %v1911 = vrot.slane %v1897, %v1910
  %v1912 = vcombine.high %v1904, %v1904
  %1913 = vrot.lane.b32.xlu0 %v1904, 91
  %v1914 = vpop.permute.xlu0 %1913
  %1915 = vrot.lane.b32.xlu0 %v1912, 91
  %v1916 = vpop.permute.xlu0 %1915
  %1917 = vrot.lane.b32.xlu0 %v1911, 91
  %v1918 = vpop.permute.xlu0 %1917
  %v1919 = vsel %vm805, %v1914, %v1916
  %v1920 = vsel %vm805, %v1916, %v1918
  %v1922 = vsel %vm86, %v62, 0
  %v1925 = vsel %vm90, %v1919, 0
  %v1928 = vsel %vm90, %v1920, 0
  %v1931 = vsel %vm90, %v1918, 0
  %1933 = vmatprep.subr.bf16.mxu0 %v1928
  %1934 = vmatpush1.bf16.msra.mxu0 %v1925
  %1935 = vmatprep.subr.bf16.mxu0 0
  %1936 = vmatpush1.bf16.msra.mxu0 0
  %1937 = vmatprep.subr.bf16.mxu0 0
  %1938 = vmatpush1.bf16.msra.mxu0 0
  %1939 = vmatprep.subr.bf16.mxu0 0
  %1940 = vmatpush1.bf16.msra.mxu0 0
  %1941 = vmatprep.subr.bf16.mxu0 0
  %1942 = vmatpush1.bf16.msra.mxu0 0
  %1943 = vmatprep.subr.bf16.mxu0 0
  %1944 = vmatpush1.bf16.msra.mxu0 0
  %1945 = vmatprep.subr.bf16.mxu0 0
  %1946 = vmatpush1.bf16.msra.mxu0 0
  %1947 = vmatprep.subr.bf16.mxu0 0
  %1948 = vmatpush1.bf16.msra.mxu0 0
  %1949 = vmatprep.subr.bf16.mxu0 0
  %1950 = vmatpush1.bf16.msra.mxu0 0
  %1951 = vmatprep.subr.bf16.mxu0 0
  %1952 = vmatpush1.bf16.msra.mxu0 0
  %1953 = vmatprep.subr.bf16.mxu0 0
  %1954 = vmatpush1.bf16.msra.mxu0 0
  %1955 = vmatprep.subr.bf16.mxu0 0
  %1956 = vmatpush1.bf16.msra.mxu0 0
  %1957 = vmatprep.subr.bf16.mxu0 0
  %1958 = vmatpush1.bf16.msra.mxu0 0
  %1959 = vmatprep.subr.bf16.mxu0 0
  %1960 = vmatpush1.bf16.msra.mxu0 0
  %1961 = vmatprep.subr.bf16.mxu0 0
  %1962 = vmatpush1.bf16.msra.mxu0 0
  %1963 = vmatprep.subr.bf16.mxu0 0
  %1964 = vmatpush1.bf16.msra.mxu0 0
  %1965 = vmatprep.mubr.bf16.mxu0 0
  %1966 = vmatmul.mubr.bf16.gmra.mrb[0].mxu0 %v1922
  %v1967 = vpop.f32.mrb[0].mxu0
  %v1968 = vadd.f32 0.0, %v1967
  %v1969 = vpop.f32.mrb[0].mxu0
  %v1970 = vadd.f32 0.0, %v1969
  %v1971 = vpop.f32.mrb[0].mxu0
  %v1972 = vpop.f32.mrb[0].mxu0
  %1973 = vdwg.mxu0
  %1974 = vmatprep.subr.bf16.mxu0 0
  %1975 = vmatpush1.bf16.msra.mxu0 %v1931
  %1976 = vmatprep.subr.bf16.mxu0 0
  %1977 = vmatpush1.bf16.msra.mxu0 0
  %1978 = vmatprep.subr.bf16.mxu0 0
  %1979 = vmatpush1.bf16.msra.mxu0 0
  %1980 = vmatprep.subr.bf16.mxu0 0
  %1981 = vmatpush1.bf16.msra.mxu0 0
  %1982 = vmatprep.subr.bf16.mxu0 0
  %1983 = vmatpush1.bf16.msra.mxu0 0
  %1984 = vmatprep.subr.bf16.mxu0 0
  %1985 = vmatpush1.bf16.msra.mxu0 0
  %1986 = vmatprep.subr.bf16.mxu0 0
  %1987 = vmatpush1.bf16.msra.mxu0 0
  %1988 = vmatprep.subr.bf16.mxu0 0
  %1989 = vmatpush1.bf16.msra.mxu0 0
  %1990 = vmatprep.subr.bf16.mxu0 0
  %1991 = vmatpush1.bf16.msra.mxu0 0
  %1992 = vmatprep.subr.bf16.mxu0 0
  %1993 = vmatpush1.bf16.msra.mxu0 0
  %1994 = vmatprep.subr.bf16.mxu0 0
  %1995 = vmatpush1.bf16.msra.mxu0 0
  %1996 = vmatprep.subr.bf16.mxu0 0
  %1997 = vmatpush1.bf16.msra.mxu0 0
  %1998 = vmatprep.subr.bf16.mxu0 0
  %1999 = vmatpush1.bf16.msra.mxu0 0
  %2000 = vmatprep.subr.bf16.mxu0 0
  %2001 = vmatpush1.bf16.msra.mxu0 0
  %2002 = vmatprep.subr.bf16.mxu0 0
  %2003 = vmatpush1.bf16.msra.mxu0 0
  %2004 = vmatprep.subr.bf16.mxu0 0
  %2005 = vmatpush1.bf16.msra.mxu0 0
  %2006 = vmatprep.mubr.bf16.mxu0 0
  %2007 = vmatmul.mubr.bf16.gmra.mrb[0].mxu0 %v1922
  %v2008 = vpop.f32.mrb[0].mxu0
  %v2009 = vadd.f32 0.0, %v2008
  %v2010 = vpop.f32.mrb[0].mxu0
  %v2011 = vpop.f32.mrb[0].mxu0
  %v2012 = vpop.f32.mrb[0].mxu0
  %2013 = vdwg.mxu0
  %v2014 = vadd.f32 %v1892, %v1968
  %v2015 = vadd.f32 %v1893, %v1970
  %v2016 = vadd.f32 %v1894, %v2009
  %v2017 = vld [vmem:[#allocation2] sm:$0x3f]
  %v2019 = vcombine.high %v2017, %v2017
  %v2021 = vunpack.c.l.s4 1983009808
  %v2022 = vunpack.c.0.s8 %v2021
  %v2023 = vlaneseq
  %v2024 = vshrl.u32 %v2023, 7
  %v2025 = vsub.s32 %v2022, %v2024
  %v2026 = vrot.slane %v2017, %v2025
  %v2028 = vunpack.c.l.s4 1983009808
  %v2029 = vunpack.c.0.s8 %v2028
  %v2030 = vlaneseq
  %v2031 = vshrl.u32 %v2030, 7
  %v2032 = vsub.s32 %v2029, %v2031
  %v2033 = vrot.slane %v2019, %v2032
  %v2034 = vcombine.high %v2026, %v2026
  %2035 = vrot.lane.b32.xlu0 %v2026, 90
  %v2036 = vpop.permute.xlu0 %2035
  %2037 = vrot.lane.b32.xlu0 %v2034, 90
  %v2038 = vpop.permute.xlu0 %2037
  %2039 = vrot.lane.b32.xlu0 %v2033, 90
  %v2040 = vpop.permute.xlu0 %2039
  %v2041 = vsel %vm910, %v2036, %v2038
  %v2042 = vsel %vm910, %v2038, %v2040
  %v2044 = vsel %vm86, %v64, 0
  %v2047 = vsel %vm90, %v2041, 0
  %v2050 = vsel %vm90, %v2042, 0
  %v2053 = vsel %vm90, %v2040, 0
  %2055 = vmatprep.subr.bf16.mxu0 %v2050
  %2056 = vmatpush1.bf16.msra.mxu0 %v2047
  %2057 = vmatprep.subr.bf16.mxu0 0
  %2058 = vmatpush1.bf16.msra.mxu0 0
  %2059 = vmatprep.subr.bf16.mxu0 0
  %2060 = vmatpush1.bf16.msra.mxu0 0
  %2061 = vmatprep.subr.bf16.mxu0 0
  %2062 = vmatpush1.bf16.msra.mxu0 0
  %2063 = vmatprep.subr.bf16.mxu0 0
  %2064 = vmatpush1.bf16.msra.mxu0 0
  %2065 = vmatprep.subr.bf16.mxu0 0
  %2066 = vmatpush1.bf16.msra.mxu0 0
  %2067 = vmatprep.subr.bf16.mxu0 0
  %2068 = vmatpush1.bf16.msra.mxu0 0
  %2069 = vmatprep.subr.bf16.mxu0 0
  %2070 = vmatpush1.bf16.msra.mxu0 0
  %2071 = vmatprep.subr.bf16.mxu0 0
  %2072 = vmatpush1.bf16.msra.mxu0 0
  %2073 = vmatprep.subr.bf16.mxu0 0
  %2074 = vmatpush1.bf16.msra.mxu0 0
  %2075 = vmatprep.subr.bf16.mxu0 0
  %2076 = vmatpush1.bf16.msra.mxu0 0
  %2077 = vmatprep.subr.bf16.mxu0 0
  %2078 = vmatpush1.bf16.msra.mxu0 0
  %2079 = vmatprep.subr.bf16.mxu0 0
  %2080 = vmatpush1.bf16.msra.mxu0 0
  %2081 = vmatprep.subr.bf16.mxu0 0
  %2082 = vmatpush1.bf16.msra.mxu0 0
  %2083 = vmatprep.subr.bf16.mxu0 0
  %2084 = vmatpush1.bf16.msra.mxu0 0
  %2085 = vmatprep.subr.bf16.mxu0 0
  %2086 = vmatpush1.bf16.msra.mxu0 0
  %2087 = vmatprep.mubr.bf16.mxu0 0
  %2088 = vmatmul.mubr.bf16.gmra.mrb[0].mxu0 %v2044
  %v2089 = vpop.f32.mrb[0].mxu0
  %v2090 = vadd.f32 0.0, %v2089
  %v2091 = vpop.f32.mrb[0].mxu0
  %v2092 = vadd.f32 0.0, %v2091
  %v2093 = vpop.f32.mrb[0].mxu0
  %v2094 = vpop.f32.mrb[0].mxu0
  %2095 = vdwg.mxu0
  %2096 = vmatprep.subr.bf16.mxu0 0
  %2097 = vmatpush1.bf16.msra.mxu0 %v2053
  %2098 = vmatprep.subr.bf16.mxu0 0
  %2099 = vmatpush1.bf16.msra.mxu0 0
  %2100 = vmatprep.subr.bf16.mxu0 0
  %2101 = vmatpush1.bf16.msra.mxu0 0
  %2102 = vmatprep.subr.bf16.mxu0 0
  %2103 = vmatpush1.bf16.msra.mxu0 0
  %2104 = vmatprep.subr.bf16.mxu0 0
  %2105 = vmatpush1.bf16.msra.mxu0 0
  %2106 = vmatprep.subr.bf16.mxu0 0
  %2107 = vmatpush1.bf16.msra.mxu0 0
  %2108 = vmatprep.subr.bf16.mxu0 0
  %2109 = vmatpush1.bf16.msra.mxu0 0
  %2110 = vmatprep.subr.bf16.mxu0 0
  %2111 = vmatpush1.bf16.msra.mxu0 0
  %2112 = vmatprep.subr.bf16.mxu0 0
  %2113 = vmatpush1.bf16.msra.mxu0 0
  %2114 = vmatprep.subr.bf16.mxu0 0
  %2115 = vmatpush1.bf16.msra.mxu0 0
  %2116 = vmatprep.subr.bf16.mxu0 0
  %2117 = vmatpush1.bf16.msra.mxu0 0
  %2118 = vmatprep.subr.bf16.mxu0 0
  %2119 = vmatpush1.bf16.msra.mxu0 0
  %2120 = vmatprep.subr.bf16.mxu0 0
  %2121 = vmatpush1.bf16.msra.mxu0 0
  %2122 = vmatprep.subr.bf16.mxu0 0
  %2123 = vmatpush1.bf16.msra.mxu0 0
  %2124 = vmatprep.subr.bf16.mxu0 0
  %2125 = vmatpush1.bf16.msra.mxu0 0
  %2126 = vmatprep.subr.bf16.mxu0 0
  %2127 = vmatpush1.bf16.msra.mxu0 0
  %2128 = vmatprep.mubr.bf16.mxu0 0
  %2129 = vmatmul.mubr.bf16.gmra.mrb[0].mxu0 %v2044
  %v2130 = vpop.f32.mrb[0].mxu0
  %v2131 = vadd.f32 0.0, %v2130
  %v2132 = vpop.f32.mrb[0].mxu0
  %v2133 = vpop.f32.mrb[0].mxu0
  %v2134 = vpop.f32.mrb[0].mxu0
  %2135 = vdwg.mxu0
  %v2136 = vadd.f32 %v2014, %v2090
  %v2137 = vadd.f32 %v2015, %v2092
  %v2138 = vadd.f32 %v2016, %v2131
  %2140 = vset.pattern.permute.xlu0 0
  %2141 = vperm.xlu0 %2140, %v30
  %v2142 = vpop.permute.xlu0 %2141
  %v2144 = vadd.f32 %v2136, %v2142
  %v2145 = vadd.f32 %v2137, %v2142
  %v2146 = vadd.f32 %v2138, %v2142
  %2147 = vrot.lane.b32.xlu0 %v65, 109
  %v2148 = vpop.permute.xlu0 %2147
  %2149 = vrot.lane.b32.xlu0 %v69, 109
  %v2150 = vpop.permute.xlu0 %2149
  %2151 = vrot.lane.b32.xlu0 %v66, 109
  %v2152 = vpop.permute.xlu0 %2151
  %vm2153 = vcmask 891904
  %v2154 = vsel %vm2153, %v2148, %v2150
  %v2155 = vsel %vm2153, %v2150, %v2152
  %v2159 = vadd.f32 %v2144, %v2154
  %v2160 = vadd.f32 %v2145, %v2155
  %v2161 = vadd.f32 %v2146, %v2152
  %v2162 = vmax.f32 %v2159, 0.0
  %v2163 = vmax.f32 %v2160, 0.0
  %v2164 = vmax.f32 %v2161, 0.0
  %v2167 = vcombine.low %v2162, %v2163
  %2169 = vst [vmem:[%s6] sm:$0xff] %v2167
  %vm2170 = vcmask 240640
  %2171 = vst.msk [vmem:[%s6 + $0x8] sm:$0xf] %vm2170, %v2164
  %s2172 = scalar_lea.vmem %s0, 12
  %v2173 = vld [vmem:[%s2172] sm:$0xff]
  %v2174 = vld [vmem:[%s2172 + $0x8] sm:$0xf]
  %v2177 = vcombine.high %v2173, %v2173
  %v2179 = vpack.c.bf16 %v2173, %v2173
  %v2180 = vpack.c.bf16 %v2177, %v2177
  %v2181 = vpack.c.bf16 %v2174, %v2174
  %2185 = vrot.lane.b32.xlu0 %v2179, 127
  %v2186 = vpop.permute.xlu0 %2185
  %2187 = vrot.lane.b32.xlu0 %v2180, 127
  %v2188 = vpop.permute.xlu0 %2187
  %2189 = vrot.lane.b32.xlu0 %v2181, 127
  %v2190 = vpop.permute.xlu0 %2189
  %v2191 = vsel %vm83, %v2186, %v2188
  %v2192 = vsel %vm83, %v2188, %v2190
  %v2194 = vsel %vm90, %v2191, 0
  %v2197 = vsel %vm90, %v2192, 0
  %v2200 = vsel %vm90, %v2190, 0
  %2202 = vmatprep.subr.bf16.mxu0 %v2197
  %2203 = vmatpush1.bf16.msra.mxu0 %v2194
  %2204 = vmatprep.subr.bf16.mxu0 0
  %2205 = vmatpush1.bf16.msra.mxu0 0
  %2206 = vmatprep.subr.bf16.mxu0 0
  %2207 = vmatpush1.bf16.msra.mxu0 0
  %2208 = vmatprep.subr.bf16.mxu0 0
  %2209 = vmatpush1.bf16.msra.mxu0 0
  %2210 = vmatprep.subr.bf16.mxu0 0
  %2211 = vmatpush1.bf16.msra.mxu0 0
  %2212 = vmatprep.subr.bf16.mxu0 0
  %2213 = vmatpush1.bf16.msra.mxu0 0
  %2214 = vmatprep.subr.bf16.mxu0 0
  %2215 = vmatpush1.bf16.msra.mxu0 0
  %2216 = vmatprep.subr.bf16.mxu0 0
  %2217 = vmatpush1.bf16.msra.mxu0 0
  %2218 = vmatprep.subr.bf16.mxu0 0
  %2219 = vmatpush1.bf16.msra.mxu0 0
  %2220 = vmatprep.subr.bf16.mxu0 0
  %2221 = vmatpush1.bf16.msra.mxu0 0
  %2222 = vmatprep.subr.bf16.mxu0 0
  %2223 = vmatpush1.bf16.msra.mxu0 0
  %2224 = vmatprep.subr.bf16.mxu0 0
  %2225 = vmatpush1.bf16.msra.mxu0 0
  %2226 = vmatprep.subr.bf16.mxu0 0
  %2227 = vmatpush1.bf16.msra.mxu0 0
  %2228 = vmatprep.subr.bf16.mxu0 0
  %2229 = vmatpush1.bf16.msra.mxu0 0
  %2230 = vmatprep.subr.bf16.mxu0 0
  %2231 = vmatpush1.bf16.msra.mxu0 0
  %2232 = vmatprep.subr.bf16.mxu0 0
  %2233 = vmatpush1.bf16.msra.mxu0 0
  %2234 = vmatprep.mubr.bf16.mxu0 0
  %2235 = vmatmul.mubr.bf16.gmra.mrb[0].mxu0 %v88
  %v2236 = vpop.f32.mrb[0].mxu0
  %v2237 = vadd.f32 0.0, %v2236
  %v2238 = vpop.f32.mrb[0].mxu0
  %v2239 = vadd.f32 0.0, %v2238
  %v2240 = vpop.f32.mrb[0].mxu0
  %v2241 = vpop.f32.mrb[0].mxu0
  %2242 = vdwg.mxu0
  %2243 = vmatprep.subr.bf16.mxu0 0
  %2244 = vmatpush1.bf16.msra.mxu0 %v2200
  %2245 = vmatprep.subr.bf16.mxu0 0
  %2246 = vmatpush1.bf16.msra.mxu0 0
  %2247 = vmatprep.subr.bf16.mxu0 0
  %2248 = vmatpush1.bf16.msra.mxu0 0
  %2249 = vmatprep.subr.bf16.mxu0 0
  %2250 = vmatpush1.bf16.msra.mxu0 0
  %2251 = vmatprep.subr.bf16.mxu0 0
  %2252 = vmatpush1.bf16.msra.mxu0 0
  %2253 = vmatprep.subr.bf16.mxu0 0
  %2254 = vmatpush1.bf16.msra.mxu0 0
  %2255 = vmatprep.subr.bf16.mxu0 0
  %2256 = vmatpush1.bf16.msra.mxu0 0
  %2257 = vmatprep.subr.bf16.mxu0 0
  %2258 = vmatpush1.bf16.msra.mxu0 0
  %2259 = vmatprep.subr.bf16.mxu0 0
  %2260 = vmatpush1.bf16.msra.mxu0 0
  %2261 = vmatprep.subr.bf16.mxu0 0
  %2262 = vmatpush1.bf16.msra.mxu0 0
  %2263 = vmatprep.subr.bf16.mxu0 0
  %2264 = vmatpush1.bf16.msra.mxu0 0
  %2265 = vmatprep.subr.bf16.mxu0 0
  %2266 = vmatpush1.bf16.msra.mxu0 0
  %2267 = vmatprep.subr.bf16.mxu0 0
  %2268 = vmatpush1.bf16.msra.mxu0 0
  %2269 = vmatprep.subr.bf16.mxu0 0
  %2270 = vmatpush1.bf16.msra.mxu0 0
  %2271 = vmatprep.subr.bf16.mxu0 0
  %2272 = vmatpush1.bf16.msra.mxu0 0
  %2273 = vmatprep.subr.bf16.mxu0 0
  %2274 = vmatpush1.bf16.msra.mxu0 0
  %2275 = vmatprep.mubr.bf16.mxu0 0
  %2276 = vmatmul.mubr.bf16.gmra.mrb[0].mxu0 %v88
  %v2277 = vpop.f32.mrb[0].mxu0
  %v2278 = vadd.f32 0.0, %v2277
  %v2279 = vpop.f32.mrb[0].mxu0
  %v2280 = vpop.f32.mrb[0].mxu0
  %v2281 = vpop.f32.mrb[0].mxu0
  %2282 = vdwg.mxu0
  %v2284 = vsel %vm90, %v2179, 0
  %v2287 = vsel %vm90, %v2180, 0
  %v2290 = vsel %vm90, %v2181, 0
  %2292 = vmatprep.subr.bf16.mxu0 %v2287
  %2293 = vmatpush1.bf16.msra.mxu0 %v2284
  %2294 = vmatprep.subr.bf16.mxu0 0
  %2295 = vmatpush1.bf16.msra.mxu0 0
  %2296 = vmatprep.subr.bf16.mxu0 0
  %2297 = vmatpush1.bf16.msra.mxu0 0
  %2298 = vmatprep.subr.bf16.mxu0 0
  %2299 = vmatpush1.bf16.msra.mxu0 0
  %2300 = vmatprep.subr.bf16.mxu0 0
  %2301 = vmatpush1.bf16.msra.mxu0 0
  %2302 = vmatprep.subr.bf16.mxu0 0
  %2303 = vmatpush1.bf16.msra.mxu0 0
  %2304 = vmatprep.subr.bf16.mxu0 0
  %2305 = vmatpush1.bf16.msra.mxu0 0
  %2306 = vmatprep.subr.bf16.mxu0 0
  %2307 = vmatpush1.bf16.msra.mxu0 0
  %2308 = vmatprep.subr.bf16.mxu0 0
  %2309 = vmatpush1.bf16.msra.mxu0 0
  %2310 = vmatprep.subr.bf16.mxu0 0
  %2311 = vmatpush1.bf16.msra.mxu0 0
  %2312 = vmatprep.subr.bf16.mxu0 0
  %2313 = vmatpush1.bf16.msra.mxu0 0
  %2314 = vmatprep.subr.bf16.mxu0 0
  %2315 = vmatpush1.bf16.msra.mxu0 0
  %2316 = vmatprep.subr.bf16.mxu0 0
  %2317 = vmatpush1.bf16.msra.mxu0 0
  %2318 = vmatprep.subr.bf16.mxu0 0
  %2319 = vmatpush1.bf16.msra.mxu0 0
  %2320 = vmatprep.subr.bf16.mxu0 0
  %2321 = vmatpush1.bf16.msra.mxu0 0
  %2322 = vmatprep.subr.bf16.mxu0 0
  %2323 = vmatpush1.bf16.msra.mxu0 0
  %2324 = vmatprep.mubr.bf16.mxu0 0
  %2325 = vmatmul.mubr.bf16.gmra.mrb[0].mxu0 %v182
  %v2326 = vpop.f32.mrb[0].mxu0
  %v2327 = vadd.f32 %v2237, %v2326
  %v2328 = vpop.f32.mrb[0].mxu0
  %v2329 = vadd.f32 %v2239, %v2328
  %v2330 = vpop.f32.mrb[0].mxu0
  %v2331 = vpop.f32.mrb[0].mxu0
  %2332 = vdwg.mxu0
  %2333 = vmatprep.subr.bf16.mxu0 0
  %2334 = vmatpush1.bf16.msra.mxu0 %v2290
  %2335 = vmatprep.subr.bf16.mxu0 0
  %2336 = vmatpush1.bf16.msra.mxu0 0
  %2337 = vmatprep.subr.bf16.mxu0 0
  %2338 = vmatpush1.bf16.msra.mxu0 0
  %2339 = vmatprep.subr.bf16.mxu0 0
  %2340 = vmatpush1.bf16.msra.mxu0 0
  %2341 = vmatprep.subr.bf16.mxu0 0
  %2342 = vmatpush1.bf16.msra.mxu0 0
  %2343 = vmatprep.subr.bf16.mxu0 0
  %2344 = vmatpush1.bf16.msra.mxu0 0
  %2345 = vmatprep.subr.bf16.mxu0 0
  %2346 = vmatpush1.bf16.msra.mxu0 0
  %2347 = vmatprep.subr.bf16.mxu0 0
  %2348 = vmatpush1.bf16.msra.mxu0 0
  %2349 = vmatprep.subr.bf16.mxu0 0
  %2350 = vmatpush1.bf16.msra.mxu0 0
  %2351 = vmatprep.subr.bf16.mxu0 0
  %2352 = vmatpush1.bf16.msra.mxu0 0
  %2353 = vmatprep.subr.bf16.mxu0 0
  %2354 = vmatpush1.bf16.msra.mxu0 0
  %2355 = vmatprep.subr.bf16.mxu0 0
  %2356 = vmatpush1.bf16.msra.mxu0 0
  %2357 = vmatprep.subr.bf16.mxu0 0
  %2358 = vmatpush1.bf16.msra.mxu0 0
  %2359 = vmatprep.subr.bf16.mxu0 0
  %2360 = vmatpush1.bf16.msra.mxu0 0
  %2361 = vmatprep.subr.bf16.mxu0 0
  %2362 = vmatpush1.bf16.msra.mxu0 0
  %2363 = vmatprep.subr.bf16.mxu0 0
  %2364 = vmatpush1.bf16.msra.mxu0 0
  %2365 = vmatprep.mubr.bf16.mxu0 0
  %2366 = vmatmul.mubr.bf16.gmra.mrb[0].mxu0 %v182
  %v2367 = vpop.f32.mrb[0].mxu0
  %v2368 = vadd.f32 %v2278, %v2367
  %v2369 = vpop.f32.mrb[0].mxu0
  %v2370 = vpop.f32.mrb[0].mxu0
  %v2371 = vpop.f32.mrb[0].mxu0
  %2372 = vdwg.mxu0
  %2373 = vrot.lane.b32.xlu0 %v2179, 126
  %v2374 = vpop.permute.xlu0 %2373
  %2375 = vrot.lane.b32.xlu0 %v2180, 126
  %v2376 = vpop.permute.xlu0 %2375
  %2377 = vrot.lane.b32.xlu0 %v2181, 126
  %v2378 = vpop.permute.xlu0 %2377
  %v2379 = vsel %vm280, %v2374, %v2376
  %v2380 = vsel %vm280, %v2376, %v2378
  %v2382 = vsel %vm90, %v2379, 0
  %v2385 = vsel %vm90, %v2380, 0
  %v2388 = vsel %vm90, %v2378, 0
  %2390 = vmatprep.subr.bf16.mxu0 %v2385
  %2391 = vmatpush1.bf16.msra.mxu0 %v2382
  %2392 = vmatprep.subr.bf16.mxu0 0
  %2393 = vmatpush1.bf16.msra.mxu0 0
  %2394 = vmatprep.subr.bf16.mxu0 0
  %2395 = vmatpush1.bf16.msra.mxu0 0
  %2396 = vmatprep.subr.bf16.mxu0 0
  %2397 = vmatpush1.bf16.msra.mxu0 0
  %2398 = vmatprep.subr.bf16.mxu0 0
  %2399 = vmatpush1.bf16.msra.mxu0 0
  %2400 = vmatprep.subr.bf16.mxu0 0
  %2401 = vmatpush1.bf16.msra.mxu0 0
  %2402 = vmatprep.subr.bf16.mxu0 0
  %2403 = vmatpush1.bf16.msra.mxu0 0
  %2404 = vmatprep.subr.bf16.mxu0 0
  %2405 = vmatpush1.bf16.msra.mxu0 0
  %2406 = vmatprep.subr.bf16.mxu0 0
  %2407 = vmatpush1.bf16.msra.mxu0 0
  %2408 = vmatprep.subr.bf16.mxu0 0
  %2409 = vmatpush1.bf16.msra.mxu0 0
  %2410 = vmatprep.subr.bf16.mxu0 0
  %2411 = vmatpush1.bf16.msra.mxu0 0
  %2412 = vmatprep.subr.bf16.mxu0 0
  %2413 = vmatpush1.bf16.msra.mxu0 0
  %2414 = vmatprep.subr.bf16.mxu0 0
  %2415 = vmatpush1.bf16.msra.mxu0 0
  %2416 = vmatprep.subr.bf16.mxu0 0
  %2417 = vmatpush1.bf16.msra.mxu0 0
  %2418 = vmatprep.subr.bf16.mxu0 0
  %2419 = vmatpush1.bf16.msra.mxu0 0
  %2420 = vmatprep.subr.bf16.mxu0 0
  %2421 = vmatpush1.bf16.msra.mxu0 0
  %2422 = vmatprep.mubr.bf16.mxu0 0
  %2423 = vmatmul.mubr.bf16.gmra.mrb[0].mxu0 %v284
  %v2424 = vpop.f32.mrb[0].mxu0
  %v2425 = vadd.f32 0.0, %v2424
  %v2426 = vpop.f32.mrb[0].mxu0
  %v2427 = vadd.f32 0.0, %v2426
  %v2428 = vpop.f32.mrb[0].mxu0
  %v2429 = vpop.f32.mrb[0].mxu0
  %2430 = vdwg.mxu0
  %2431 = vmatprep.subr.bf16.mxu0 0
  %2432 = vmatpush1.bf16.msra.mxu0 %v2388
  %2433 = vmatprep.subr.bf16.mxu0 0
  %2434 = vmatpush1.bf16.msra.mxu0 0
  %2435 = vmatprep.subr.bf16.mxu0 0
  %2436 = vmatpush1.bf16.msra.mxu0 0
  %2437 = vmatprep.subr.bf16.mxu0 0
  %2438 = vmatpush1.bf16.msra.mxu0 0
  %2439 = vmatprep.subr.bf16.mxu0 0
  %2440 = vmatpush1.bf16.msra.mxu0 0
  %2441 = vmatprep.subr.bf16.mxu0 0
  %2442 = vmatpush1.bf16.msra.mxu0 0
  %2443 = vmatprep.subr.bf16.mxu0 0
  %2444 = vmatpush1.bf16.msra.mxu0 0
  %2445 = vmatprep.subr.bf16.mxu0 0
  %2446 = vmatpush1.bf16.msra.mxu0 0
  %2447 = vmatprep.subr.bf16.mxu0 0
  %2448 = vmatpush1.bf16.msra.mxu0 0
  %2449 = vmatprep.subr.bf16.mxu0 0
  %2450 = vmatpush1.bf16.msra.mxu0 0
  %2451 = vmatprep.subr.bf16.mxu0 0
  %2452 = vmatpush1.bf16.msra.mxu0 0
  %2453 = vmatprep.subr.bf16.mxu0 0
  %2454 = vmatpush1.bf16.msra.mxu0 0
  %2455 = vmatprep.subr.bf16.mxu0 0
  %2456 = vmatpush1.bf16.msra.mxu0 0
  %2457 = vmatprep.subr.bf16.mxu0 0
  %2458 = vmatpush1.bf16.msra.mxu0 0
  %2459 = vmatprep.subr.bf16.mxu0 0
  %2460 = vmatpush1.bf16.msra.mxu0 0
  %2461 = vmatprep.subr.bf16.mxu0 0
  %2462 = vmatpush1.bf16.msra.mxu0 0
  %2463 = vmatprep.mubr.bf16.mxu0 0
  %2464 = vmatmul.mubr.bf16.gmra.mrb[0].mxu0 %v284
  %v2465 = vpop.f32.mrb[0].mxu0
  %v2466 = vadd.f32 0.0, %v2465
  %v2467 = vpop.f32.mrb[0].mxu0
  %v2468 = vpop.f32.mrb[0].mxu0
  %v2469 = vpop.f32.mrb[0].mxu0
  %2470 = vdwg.mxu0
  %v2471 = vadd.f32 %v2327, %v2425
  %v2472 = vadd.f32 %v2329, %v2427
  %v2473 = vadd.f32 %v2368, %v2466
  %2474 = vrot.lane.b32.xlu0 %v2179, 110
  %v2475 = vpop.permute.xlu0 %2474
  %2476 = vrot.lane.b32.xlu0 %v2180, 110
  %v2477 = vpop.permute.xlu0 %2476
  %2478 = vrot.lane.b32.xlu0 %v2181, 110
  %v2479 = vpop.permute.xlu0 %2478
  %v2480 = vsel %vm385, %v2475, %v2477
  %v2481 = vsel %vm385, %v2477, %v2479
  %v2483 = vsel %vm90, %v2480, 0
  %v2486 = vsel %vm90, %v2481, 0
  %v2489 = vsel %vm90, %v2479, 0
  %2491 = vmatprep.subr.bf16.mxu0 %v2486
  %2492 = vmatpush1.bf16.msra.mxu0 %v2483
  %2493 = vmatprep.subr.bf16.mxu0 0
  %2494 = vmatpush1.bf16.msra.mxu0 0
  %2495 = vmatprep.subr.bf16.mxu0 0
  %2496 = vmatpush1.bf16.msra.mxu0 0
  %2497 = vmatprep.subr.bf16.mxu0 0
  %2498 = vmatpush1.bf16.msra.mxu0 0
  %2499 = vmatprep.subr.bf16.mxu0 0
  %2500 = vmatpush1.bf16.msra.mxu0 0
  %2501 = vmatprep.subr.bf16.mxu0 0
  %2502 = vmatpush1.bf16.msra.mxu0 0
  %2503 = vmatprep.subr.bf16.mxu0 0
  %2504 = vmatpush1.bf16.msra.mxu0 0
  %2505 = vmatprep.subr.bf16.mxu0 0
  %2506 = vmatpush1.bf16.msra.mxu0 0
  %2507 = vmatprep.subr.bf16.mxu0 0
  %2508 = vmatpush1.bf16.msra.mxu0 0
  %2509 = vmatprep.subr.bf16.mxu0 0
  %2510 = vmatpush1.bf16.msra.mxu0 0
  %2511 = vmatprep.subr.bf16.mxu0 0
  %2512 = vmatpush1.bf16.msra.mxu0 0
  %2513 = vmatprep.subr.bf16.mxu0 0
  %2514 = vmatpush1.bf16.msra.mxu0 0
  %2515 = vmatprep.subr.bf16.mxu0 0
  %2516 = vmatpush1.bf16.msra.mxu0 0
  %2517 = vmatprep.subr.bf16.mxu0 0
  %2518 = vmatpush1.bf16.msra.mxu0 0
  %2519 = vmatprep.subr.bf16.mxu0 0
  %2520 = vmatpush1.bf16.msra.mxu0 0
  %2521 = vmatprep.subr.bf16.mxu0 0
  %2522 = vmatpush1.bf16.msra.mxu0 0
  %2523 = vmatprep.mubr.bf16.mxu0 0
  %2524 = vmatmul.mubr.bf16.gmra.mrb[0].mxu0 %v389
  %v2525 = vpop.f32.mrb[0].mxu0
  %v2526 = vadd.f32 0.0, %v2525
  %v2527 = vpop.f32.mrb[0].mxu0
  %v2528 = vadd.f32 0.0, %v2527
  %v2529 = vpop.f32.mrb[0].mxu0
  %v2530 = vpop.f32.mrb[0].mxu0
  %2531 = vdwg.mxu0
  %2532 = vmatprep.subr.bf16.mxu0 0
  %2533 = vmatpush1.bf16.msra.mxu0 %v2489
  %2534 = vmatprep.subr.bf16.mxu0 0
  %2535 = vmatpush1.bf16.msra.mxu0 0
  %2536 = vmatprep.subr.bf16.mxu0 0
  %2537 = vmatpush1.bf16.msra.mxu0 0
  %2538 = vmatprep.subr.bf16.mxu0 0
  %2539 = vmatpush1.bf16.msra.mxu0 0
  %2540 = vmatprep.subr.bf16.mxu0 0
  %2541 = vmatpush1.bf16.msra.mxu0 0
  %2542 = vmatprep.subr.bf16.mxu0 0
  %2543 = vmatpush1.bf16.msra.mxu0 0
  %2544 = vmatprep.subr.bf16.mxu0 0
  %2545 = vmatpush1.bf16.msra.mxu0 0
  %2546 = vmatprep.subr.bf16.mxu0 0
  %2547 = vmatpush1.bf16.msra.mxu0 0
  %2548 = vmatprep.subr.bf16.mxu0 0
  %2549 = vmatpush1.bf16.msra.mxu0 0
  %2550 = vmatprep.subr.bf16.mxu0 0
  %2551 = vmatpush1.bf16.msra.mxu0 0
  %2552 = vmatprep.subr.bf16.mxu0 0
  %2553 = vmatpush1.bf16.msra.mxu0 0
  %2554 = vmatprep.subr.bf16.mxu0 0
  %2555 = vmatpush1.bf16.msra.mxu0 0
  %2556 = vmatprep.subr.bf16.mxu0 0
  %2557 = vmatpush1.bf16.msra.mxu0 0
  %2558 = vmatprep.subr.bf16.mxu0 0
  %2559 = vmatpush1.bf16.msra.mxu0 0
  %2560 = vmatprep.subr.bf16.mxu0 0
  %2561 = vmatpush1.bf16.msra.mxu0 0
  %2562 = vmatprep.subr.bf16.mxu0 0
  %2563 = vmatpush1.bf16.msra.mxu0 0
  %2564 = vmatprep.mubr.bf16.mxu0 0
  %2565 = vmatmul.mubr.bf16.gmra.mrb[0].mxu0 %v389
  %v2566 = vpop.f32.mrb[0].mxu0
  %v2567 = vadd.f32 0.0, %v2566
  %v2568 = vpop.f32.mrb[0].mxu0
  %v2569 = vpop.f32.mrb[0].mxu0
  %v2570 = vpop.f32.mrb[0].mxu0
  %2571 = vdwg.mxu0
  %v2572 = vadd.f32 %v2471, %v2526
  %v2573 = vadd.f32 %v2472, %v2528
  %v2574 = vadd.f32 %v2473, %v2567
  %2575 = vrot.lane.b32.xlu0 %v2179, 109
  %v2576 = vpop.permute.xlu0 %2575
  %2577 = vrot.lane.b32.xlu0 %v2180, 109
  %v2578 = vpop.permute.xlu0 %2577
  %2579 = vrot.lane.b32.xlu0 %v2181, 109
  %v2580 = vpop.permute.xlu0 %2579
  %v2581 = vsel %vm490, %v2576, %v2578
  %v2582 = vsel %vm490, %v2578, %v2580
  %v2584 = vsel %vm90, %v2581, 0
  %v2587 = vsel %vm90, %v2582, 0
  %v2590 = vsel %vm90, %v2580, 0
  %2592 = vmatprep.subr.bf16.mxu0 %v2587
  %2593 = vmatpush1.bf16.msra.mxu0 %v2584
  %2594 = vmatprep.subr.bf16.mxu0 0
  %2595 = vmatpush1.bf16.msra.mxu0 0
  %2596 = vmatprep.subr.bf16.mxu0 0
  %2597 = vmatpush1.bf16.msra.mxu0 0
  %2598 = vmatprep.subr.bf16.mxu0 0
  %2599 = vmatpush1.bf16.msra.mxu0 0
  %2600 = vmatprep.subr.bf16.mxu0 0
  %2601 = vmatpush1.bf16.msra.mxu0 0
  %2602 = vmatprep.subr.bf16.mxu0 0
  %2603 = vmatpush1.bf16.msra.mxu0 0
  %2604 = vmatprep.subr.bf16.mxu0 0
  %2605 = vmatpush1.bf16.msra.mxu0 0
  %2606 = vmatprep.subr.bf16.mxu0 0
  %2607 = vmatpush1.bf16.msra.mxu0 0
  %2608 = vmatprep.subr.bf16.mxu0 0
  %2609 = vmatpush1.bf16.msra.mxu0 0
  %2610 = vmatprep.subr.bf16.mxu0 0
  %2611 = vmatpush1.bf16.msra.mxu0 0
  %2612 = vmatprep.subr.bf16.mxu0 0
  %2613 = vmatpush1.bf16.msra.mxu0 0
  %2614 = vmatprep.subr.bf16.mxu0 0
  %2615 = vmatpush1.bf16.msra.mxu0 0
  %2616 = vmatprep.subr.bf16.mxu0 0
  %2617 = vmatpush1.bf16.msra.mxu0 0
  %2618 = vmatprep.subr.bf16.mxu0 0
  %2619 = vmatpush1.bf16.msra.mxu0 0
  %2620 = vmatprep.subr.bf16.mxu0 0
  %2621 = vmatpush1.bf16.msra.mxu0 0
  %2622 = vmatprep.subr.bf16.mxu0 0
  %2623 = vmatpush1.bf16.msra.mxu0 0
  %2624 = vmatprep.mubr.bf16.mxu0 0
  %2625 = vmatmul.mubr.bf16.gmra.mrb[0].mxu0 %v494
  %v2626 = vpop.f32.mrb[0].mxu0
  %v2627 = vadd.f32 0.0, %v2626
  %v2628 = vpop.f32.mrb[0].mxu0
  %v2629 = vadd.f32 0.0, %v2628
  %v2630 = vpop.f32.mrb[0].mxu0
  %v2631 = vpop.f32.mrb[0].mxu0
  %2632 = vdwg.mxu0
  %2633 = vmatprep.subr.bf16.mxu0 0
  %2634 = vmatpush1.bf16.msra.mxu0 %v2590
  %2635 = vmatprep.subr.bf16.mxu0 0
  %2636 = vmatpush1.bf16.msra.mxu0 0
  %2637 = vmatprep.subr.bf16.mxu0 0
  %2638 = vmatpush1.bf16.msra.mxu0 0
  %2639 = vmatprep.subr.bf16.mxu0 0
  %2640 = vmatpush1.bf16.msra.mxu0 0
  %2641 = vmatprep.subr.bf16.mxu0 0
  %2642 = vmatpush1.bf16.msra.mxu0 0
  %2643 = vmatprep.subr.bf16.mxu0 0
  %2644 = vmatpush1.bf16.msra.mxu0 0
  %2645 = vmatprep.subr.bf16.mxu0 0
  %2646 = vmatpush1.bf16.msra.mxu0 0
  %2647 = vmatprep.subr.bf16.mxu0 0
  %2648 = vmatpush1.bf16.msra.mxu0 0
  %2649 = vmatprep.subr.bf16.mxu0 0
  %2650 = vmatpush1.bf16.msra.mxu0 0
  %2651 = vmatprep.subr.bf16.mxu0 0
  %2652 = vmatpush1.bf16.msra.mxu0 0
  %2653 = vmatprep.subr.bf16.mxu0 0
  %2654 = vmatpush1.bf16.msra.mxu0 0
  %2655 = vmatprep.subr.bf16.mxu0 0
  %2656 = vmatpush1.bf16.msra.mxu0 0
  %2657 = vmatprep.subr.bf16.mxu0 0
  %2658 = vmatpush1.bf16.msra.mxu0 0
  %2659 = vmatprep.subr.bf16.mxu0 0
  %2660 = vmatpush1.bf16.msra.mxu0 0
  %2661 = vmatprep.subr.bf16.mxu0 0
  %2662 = vmatpush1.bf16.msra.mxu0 0
  %2663 = vmatprep.subr.bf16.mxu0 0
  %2664 = vmatpush1.bf16.msra.mxu0 0
  %2665 = vmatprep.mubr.bf16.mxu0 0
  %2666 = vmatmul.mubr.bf16.gmra.mrb[0].mxu0 %v494
  %v2667 = vpop.f32.mrb[0].mxu0
  %v2668 = vadd.f32 0.0, %v2667
  %v2669 = vpop.f32.mrb[0].mxu0
  %v2670 = vpop.f32.mrb[0].mxu0
  %v2671 = vpop.f32.mrb[0].mxu0
  %2672 = vdwg.mxu0
  %v2673 = vadd.f32 %v2572, %v2627
  %v2674 = vadd.f32 %v2573, %v2629
  %v2675 = vadd.f32 %v2574, %v2668
  %2676 = vrot.lane.b32.xlu0 %v2179, 108
  %v2677 = vpop.permute.xlu0 %2676
  %2678 = vrot.lane.b32.xlu0 %v2180, 108
  %v2679 = vpop.permute.xlu0 %2678
  %2680 = vrot.lane.b32.xlu0 %v2181, 108
  %v2681 = vpop.permute.xlu0 %2680
  %v2682 = vsel %vm595, %v2677, %v2679
  %v2683 = vsel %vm595, %v2679, %v2681
  %v2685 = vsel %vm90, %v2682, 0
  %v2688 = vsel %vm90, %v2683, 0
  %v2691 = vsel %vm90, %v2681, 0
  %2693 = vmatprep.subr.bf16.mxu0 %v2688
  %2694 = vmatpush1.bf16.msra.mxu0 %v2685
  %2695 = vmatprep.subr.bf16.mxu0 0
  %2696 = vmatpush1.bf16.msra.mxu0 0
  %2697 = vmatprep.subr.bf16.mxu0 0
  %2698 = vmatpush1.bf16.msra.mxu0 0
  %2699 = vmatprep.subr.bf16.mxu0 0
  %2700 = vmatpush1.bf16.msra.mxu0 0
  %2701 = vmatprep.subr.bf16.mxu0 0
  %2702 = vmatpush1.bf16.msra.mxu0 0
  %2703 = vmatprep.subr.bf16.mxu0 0
  %2704 = vmatpush1.bf16.msra.mxu0 0
  %2705 = vmatprep.subr.bf16.mxu0 0
  %2706 = vmatpush1.bf16.msra.mxu0 0
  %2707 = vmatprep.subr.bf16.mxu0 0
  %2708 = vmatpush1.bf16.msra.mxu0 0
  %2709 = vmatprep.subr.bf16.mxu0 0
  %2710 = vmatpush1.bf16.msra.mxu0 0
  %2711 = vmatprep.subr.bf16.mxu0 0
  %2712 = vmatpush1.bf16.msra.mxu0 0
  %2713 = vmatprep.subr.bf16.mxu0 0
  %2714 = vmatpush1.bf16.msra.mxu0 0
  %2715 = vmatprep.subr.bf16.mxu0 0
  %2716 = vmatpush1.bf16.msra.mxu0 0
  %2717 = vmatprep.subr.bf16.mxu0 0
  %2718 = vmatpush1.bf16.msra.mxu0 0
  %2719 = vmatprep.subr.bf16.mxu0 0
  %2720 = vmatpush1.bf16.msra.mxu0 0
  %2721 = vmatprep.subr.bf16.mxu0 0
  %2722 = vmatpush1.bf16.msra.mxu0 0
  %2723 = vmatprep.subr.bf16.mxu0 0
  %2724 = vmatpush1.bf16.msra.mxu0 0
  %2725 = vmatprep.mubr.bf16.mxu0 0
  %2726 = vmatmul.mubr.bf16.gmra.mrb[0].mxu0 %v599
  %v2727 = vpop.f32.mrb[0].mxu0
  %v2728 = vadd.f32 0.0, %v2727
  %v2729 = vpop.f32.mrb[0].mxu0
  %v2730 = vadd.f32 0.0, %v2729
  %v2731 = vpop.f32.mrb[0].mxu0
  %v2732 = vpop.f32.mrb[0].mxu0
  %2733 = vdwg.mxu0
  %2734 = vmatprep.subr.bf16.mxu0 0
  %2735 = vmatpush1.bf16.msra.mxu0 %v2691
  %2736 = vmatprep.subr.bf16.mxu0 0
  %2737 = vmatpush1.bf16.msra.mxu0 0
  %2738 = vmatprep.subr.bf16.mxu0 0
  %2739 = vmatpush1.bf16.msra.mxu0 0
  %2740 = vmatprep.subr.bf16.mxu0 0
  %2741 = vmatpush1.bf16.msra.mxu0 0
  %2742 = vmatprep.subr.bf16.mxu0 0
  %2743 = vmatpush1.bf16.msra.mxu0 0
  %2744 = vmatprep.subr.bf16.mxu0 0
  %2745 = vmatpush1.bf16.msra.mxu0 0
  %2746 = vmatprep.subr.bf16.mxu0 0
  %2747 = vmatpush1.bf16.msra.mxu0 0
  %2748 = vmatprep.subr.bf16.mxu0 0
  %2749 = vmatpush1.bf16.msra.mxu0 0
  %2750 = vmatprep.subr.bf16.mxu0 0
  %2751 = vmatpush1.bf16.msra.mxu0 0
  %2752 = vmatprep.subr.bf16.mxu0 0
  %2753 = vmatpush1.bf16.msra.mxu0 0
  %2754 = vmatprep.subr.bf16.mxu0 0
  %2755 = vmatpush1.bf16.msra.mxu0 0
  %2756 = vmatprep.subr.bf16.mxu0 0
  %2757 = vmatpush1.bf16.msra.mxu0 0
  %2758 = vmatprep.subr.bf16.mxu0 0
  %2759 = vmatpush1.bf16.msra.mxu0 0
  %2760 = vmatprep.subr.bf16.mxu0 0
  %2761 = vmatpush1.bf16.msra.mxu0 0
  %2762 = vmatprep.subr.bf16.mxu0 0
  %2763 = vmatpush1.bf16.msra.mxu0 0
  %2764 = vmatprep.subr.bf16.mxu0 0
  %2765 = vmatpush1.bf16.msra.mxu0 0
  %2766 = vmatprep.mubr.bf16.mxu0 0
  %2767 = vmatmul.mubr.bf16.gmra.mrb[0].mxu0 %v599
  %v2768 = vpop.f32.mrb[0].mxu0
  %v2769 = vadd.f32 0.0, %v2768
  %v2770 = vpop.f32.mrb[0].mxu0
  %v2771 = vpop.f32.mrb[0].mxu0
  %v2772 = vpop.f32.mrb[0].mxu0
  %2773 = vdwg.mxu0
  %v2774 = vadd.f32 %v2673, %v2728
  %v2775 = vadd.f32 %v2674, %v2730
  %v2776 = vadd.f32 %v2675, %v2769
  %2777 = vrot.lane.b32.xlu0 %v2179, 92
  %v2778 = vpop.permute.xlu0 %2777
  %2779 = vrot.lane.b32.xlu0 %v2180, 92
  %v2780 = vpop.permute.xlu0 %2779
  %2781 = vrot.lane.b32.xlu0 %v2181, 92
  %v2782 = vpop.permute.xlu0 %2781
  %v2783 = vsel %vm700, %v2778, %v2780
  %v2784 = vsel %vm700, %v2780, %v2782
  %v2786 = vsel %vm90, %v2783, 0
  %v2789 = vsel %vm90, %v2784, 0
  %v2792 = vsel %vm90, %v2782, 0
  %2794 = vmatprep.subr.bf16.mxu0 %v2789
  %2795 = vmatpush1.bf16.msra.mxu0 %v2786
  %2796 = vmatprep.subr.bf16.mxu0 0
  %2797 = vmatpush1.bf16.msra.mxu0 0
  %2798 = vmatprep.subr.bf16.mxu0 0
  %2799 = vmatpush1.bf16.msra.mxu0 0
  %2800 = vmatprep.subr.bf16.mxu0 0
  %2801 = vmatpush1.bf16.msra.mxu0 0
  %2802 = vmatprep.subr.bf16.mxu0 0
  %2803 = vmatpush1.bf16.msra.mxu0 0
  %2804 = vmatprep.subr.bf16.mxu0 0
  %2805 = vmatpush1.bf16.msra.mxu0 0
  %2806 = vmatprep.subr.bf16.mxu0 0
  %2807 = vmatpush1.bf16.msra.mxu0 0
  %2808 = vmatprep.subr.bf16.mxu0 0
  %2809 = vmatpush1.bf16.msra.mxu0 0
  %2810 = vmatprep.subr.bf16.mxu0 0
  %2811 = vmatpush1.bf16.msra.mxu0 0
  %2812 = vmatprep.subr.bf16.mxu0 0
  %2813 = vmatpush1.bf16.msra.mxu0 0
  %2814 = vmatprep.subr.bf16.mxu0 0
  %2815 = vmatpush1.bf16.msra.mxu0 0
  %2816 = vmatprep.subr.bf16.mxu0 0
  %2817 = vmatpush1.bf16.msra.mxu0 0
  %2818 = vmatprep.subr.bf16.mxu0 0
  %2819 = vmatpush1.bf16.msra.mxu0 0
  %2820 = vmatprep.subr.bf16.mxu0 0
  %2821 = vmatpush1.bf16.msra.mxu0 0
  %2822 = vmatprep.subr.bf16.mxu0 0
  %2823 = vmatpush1.bf16.msra.mxu0 0
  %2824 = vmatprep.subr.bf16.mxu0 0
  %2825 = vmatpush1.bf16.msra.mxu0 0
  %2826 = vmatprep.mubr.bf16.mxu0 0
  %2827 = vmatmul.mubr.bf16.gmra.mrb[0].mxu0 %v704
  %v2828 = vpop.f32.mrb[0].mxu0
  %v2829 = vadd.f32 0.0, %v2828
  %v2830 = vpop.f32.mrb[0].mxu0
  %v2831 = vadd.f32 0.0, %v2830
  %v2832 = vpop.f32.mrb[0].mxu0
  %v2833 = vpop.f32.mrb[0].mxu0
  %2834 = vdwg.mxu0
  %2835 = vmatprep.subr.bf16.mxu0 0
  %2836 = vmatpush1.bf16.msra.mxu0 %v2792
  %2837 = vmatprep.subr.bf16.mxu0 0
  %2838 = vmatpush1.bf16.msra.mxu0 0
  %2839 = vmatprep.subr.bf16.mxu0 0
  %2840 = vmatpush1.bf16.msra.mxu0 0
  %2841 = vmatprep.subr.bf16.mxu0 0
  %2842 = vmatpush1.bf16.msra.mxu0 0
  %2843 = vmatprep.subr.bf16.mxu0 0
  %2844 = vmatpush1.bf16.msra.mxu0 0
  %2845 = vmatprep.subr.bf16.mxu0 0
  %2846 = vmatpush1.bf16.msra.mxu0 0
  %2847 = vmatprep.subr.bf16.mxu0 0
  %2848 = vmatpush1.bf16.msra.mxu0 0
  %2849 = vmatprep.subr.bf16.mxu0 0
  %2850 = vmatpush1.bf16.msra.mxu0 0
  %2851 = vmatprep.subr.bf16.mxu0 0
  %2852 = vmatpush1.bf16.msra.mxu0 0
  %2853 = vmatprep.subr.bf16.mxu0 0
  %2854 = vmatpush1.bf16.msra.mxu0 0
  %2855 = vmatprep.subr.bf16.mxu0 0
  %2856 = vmatpush1.bf16.msra.mxu0 0
  %2857 = vmatprep.subr.bf16.mxu0 0
  %2858 = vmatpush1.bf16.msra.mxu0 0
  %2859 = vmatprep.subr.bf16.mxu0 0
  %2860 = vmatpush1.bf16.msra.mxu0 0
  %2861 = vmatprep.subr.bf16.mxu0 0
  %2862 = vmatpush1.bf16.msra.mxu0 0
  %2863 = vmatprep.subr.bf16.mxu0 0
  %2864 = vmatpush1.bf16.msra.mxu0 0
  %2865 = vmatprep.subr.bf16.mxu0 0
  %2866 = vmatpush1.bf16.msra.mxu0 0
  %2867 = vmatprep.mubr.bf16.mxu0 0
  %2868 = vmatmul.mubr.bf16.gmra.mrb[0].mxu0 %v704
  %v2869 = vpop.f32.mrb[0].mxu0
  %v2870 = vadd.f32 0.0, %v2869
  %v2871 = vpop.f32.mrb[0].mxu0
  %v2872 = vpop.f32.mrb[0].mxu0
  %v2873 = vpop.f32.mrb[0].mxu0
  %2874 = vdwg.mxu0
  %v2875 = vadd.f32 %v2774, %v2829
  %v2876 = vadd.f32 %v2775, %v2831
  %v2877 = vadd.f32 %v2776, %v2870
  %2878 = vrot.lane.b32.xlu0 %v2179, 91
  %v2879 = vpop.permute.xlu0 %2878
  %2880 = vrot.lane.b32.xlu0 %v2180, 91
  %v2881 = vpop.permute.xlu0 %2880
  %2882 = vrot.lane.b32.xlu0 %v2181, 91
  %v2883 = vpop.permute.xlu0 %2882
  %v2884 = vsel %vm805, %v2879, %v2881
  %v2885 = vsel %vm805, %v2881, %v2883
  %v2887 = vsel %vm90, %v2884, 0
  %v2890 = vsel %vm90, %v2885, 0
  %v2893 = vsel %vm90, %v2883, 0
  %2895 = vmatprep.subr.bf16.mxu0 %v2890
  %2896 = vmatpush1.bf16.msra.mxu0 %v2887
  %2897 = vmatprep.subr.bf16.mxu0 0
  %2898 = vmatpush1.bf16.msra.mxu0 0
  %2899 = vmatprep.subr.bf16.mxu0 0
  %2900 = vmatpush1.bf16.msra.mxu0 0
  %2901 = vmatprep.subr.bf16.mxu0 0
  %2902 = vmatpush1.bf16.msra.mxu0 0
  %2903 = vmatprep.subr.bf16.mxu0 0
  %2904 = vmatpush1.bf16.msra.mxu0 0
  %2905 = vmatprep.subr.bf16.mxu0 0
  %2906 = vmatpush1.bf16.msra.mxu0 0
  %2907 = vmatprep.subr.bf16.mxu0 0
  %2908 = vmatpush1.bf16.msra.mxu0 0
  %2909 = vmatprep.subr.bf16.mxu0 0
  %2910 = vmatpush1.bf16.msra.mxu0 0
  %2911 = vmatprep.subr.bf16.mxu0 0
  %2912 = vmatpush1.bf16.msra.mxu0 0
  %2913 = vmatprep.subr.bf16.mxu0 0
  %2914 = vmatpush1.bf16.msra.mxu0 0
  %2915 = vmatprep.subr.bf16.mxu0 0
  %2916 = vmatpush1.bf16.msra.mxu0 0
  %2917 = vmatprep.subr.bf16.mxu0 0
  %2918 = vmatpush1.bf16.msra.mxu0 0
  %2919 = vmatprep.subr.bf16.mxu0 0
  %2920 = vmatpush1.bf16.msra.mxu0 0
  %2921 = vmatprep.subr.bf16.mxu0 0
  %2922 = vmatpush1.bf16.msra.mxu0 0
  %2923 = vmatprep.subr.bf16.mxu0 0
  %2924 = vmatpush1.bf16.msra.mxu0 0
  %2925 = vmatprep.subr.bf16.mxu0 0
  %2926 = vmatpush1.bf16.msra.mxu0 0
  %2927 = vmatprep.mubr.bf16.mxu0 0
  %2928 = vmatmul.mubr.bf16.gmra.mrb[0].mxu0 %v809
  %v2929 = vpop.f32.mrb[0].mxu0
  %v2930 = vadd.f32 0.0, %v2929
  %v2931 = vpop.f32.mrb[0].mxu0
  %v2932 = vadd.f32 0.0, %v2931
  %v2933 = vpop.f32.mrb[0].mxu0
  %v2934 = vpop.f32.mrb[0].mxu0
  %2935 = vdwg.mxu0
  %2936 = vmatprep.subr.bf16.mxu0 0
  %2937 = vmatpush1.bf16.msra.mxu0 %v2893
  %2938 = vmatprep.subr.bf16.mxu0 0
  %2939 = vmatpush1.bf16.msra.mxu0 0
  %2940 = vmatprep.subr.bf16.mxu0 0
  %2941 = vmatpush1.bf16.msra.mxu0 0
  %2942 = vmatprep.subr.bf16.mxu0 0
  %2943 = vmatpush1.bf16.msra.mxu0 0
  %2944 = vmatprep.subr.bf16.mxu0 0
  %2945 = vmatpush1.bf16.msra.mxu0 0
  %2946 = vmatprep.subr.bf16.mxu0 0
  %2947 = vmatpush1.bf16.msra.mxu0 0
  %2948 = vmatprep.subr.bf16.mxu0 0
  %2949 = vmatpush1.bf16.msra.mxu0 0
  %2950 = vmatprep.subr.bf16.mxu0 0
  %2951 = vmatpush1.bf16.msra.mxu0 0
  %2952 = vmatprep.subr.bf16.mxu0 0
  %2953 = vmatpush1.bf16.msra.mxu0 0
  %2954 = vmatprep.subr.bf16.mxu0 0
  %2955 = vmatpush1.bf16.msra.mxu0 0
  %2956 = vmatprep.subr.bf16.mxu0 0
  %2957 = vmatpush1.bf16.msra.mxu0 0
  %2958 = vmatprep.subr.bf16.mxu0 0
  %2959 = vmatpush1.bf16.msra.mxu0 0
  %2960 = vmatprep.subr.bf16.mxu0 0
  %2961 = vmatpush1.bf16.msra.mxu0 0
  %2962 = vmatprep.subr.bf16.mxu0 0
  %2963 = vmatpush1.bf16.msra.mxu0 0
  %2964 = vmatprep.subr.bf16.mxu0 0
  %2965 = vmatpush1.bf16.msra.mxu0 0
  %2966 = vmatprep.subr.bf16.mxu0 0
  %2967 = vmatpush1.bf16.msra.mxu0 0
  %2968 = vmatprep.mubr.bf16.mxu0 0
  %2969 = vmatmul.mubr.bf16.gmra.mrb[0].mxu0 %v809
  %v2970 = vpop.f32.mrb[0].mxu0
  %v2971 = vadd.f32 0.0, %v2970
  %v2972 = vpop.f32.mrb[0].mxu0
  %v2973 = vpop.f32.mrb[0].mxu0
  %v2974 = vpop.f32.mrb[0].mxu0
  %2975 = vdwg.mxu0
  %v2976 = vadd.f32 %v2875, %v2930
  %v2977 = vadd.f32 %v2876, %v2932
  %v2978 = vadd.f32 %v2877, %v2971
  %2979 = vrot.lane.b32.xlu0 %v2179, 90
  %v2980 = vpop.permute.xlu0 %2979
  %2981 = vrot.lane.b32.xlu0 %v2180, 90
  %v2982 = vpop.permute.xlu0 %2981
  %2983 = vrot.lane.b32.xlu0 %v2181, 90
  %v2984 = vpop.permute.xlu0 %2983
  %v2985 = vsel %vm910, %v2980, %v2982
  %v2986 = vsel %vm910, %v2982, %v2984
  %v2988 = vsel %vm90, %v2985, 0
  %v2991 = vsel %vm90, %v2986, 0
  %v2994 = vsel %vm90, %v2984, 0
  %2996 = vmatprep.subr.bf16.mxu0 %v2991
  %2997 = vmatpush1.bf16.msra.mxu0 %v2988
  %2998 = vmatprep.subr.bf16.mxu0 0
  %2999 = vmatpush1.bf16.msra.mxu0 0
  %3000 = vmatprep.subr.bf16.mxu0 0
  %3001 = vmatpush1.bf16.msra.mxu0 0
  %3002 = vmatprep.subr.bf16.mxu0 0
  %3003 = vmatpush1.bf16.msra.mxu0 0
  %3004 = vmatprep.subr.bf16.mxu0 0
  %3005 = vmatpush1.bf16.msra.mxu0 0
  %3006 = vmatprep.subr.bf16.mxu0 0
  %3007 = vmatpush1.bf16.msra.mxu0 0
  %3008 = vmatprep.subr.bf16.mxu0 0
  %3009 = vmatpush1.bf16.msra.mxu0 0
  %3010 = vmatprep.subr.bf16.mxu0 0
  %3011 = vmatpush1.bf16.msra.mxu0 0
  %3012 = vmatprep.subr.bf16.mxu0 0
  %3013 = vmatpush1.bf16.msra.mxu0 0
  %3014 = vmatprep.subr.bf16.mxu0 0
  %3015 = vmatpush1.bf16.msra.mxu0 0
  %3016 = vmatprep.subr.bf16.mxu0 0
  %3017 = vmatpush1.bf16.msra.mxu0 0
  %3018 = vmatprep.subr.bf16.mxu0 0
  %3019 = vmatpush1.bf16.msra.mxu0 0
  %3020 = vmatprep.subr.bf16.mxu0 0
  %3021 = vmatpush1.bf16.msra.mxu0 0
  %3022 = vmatprep.subr.bf16.mxu0 0
  %3023 = vmatpush1.bf16.msra.mxu0 0
  %3024 = vmatprep.subr.bf16.mxu0 0
  %3025 = vmatpush1.bf16.msra.mxu0 0
  %3026 = vmatprep.subr.bf16.mxu0 0
  %3027 = vmatpush1.bf16.msra.mxu0 0
  %3028 = vmatprep.mubr.bf16.mxu0 0
  %3029 = vmatmul.mubr.bf16.gmra.mrb[0].mxu0 %v914
  %v3030 = vpop.f32.mrb[0].mxu0
  %v3031 = vadd.f32 0.0, %v3030
  %v3032 = vpop.f32.mrb[0].mxu0
  %v3033 = vadd.f32 0.0, %v3032
  %v3034 = vpop.f32.mrb[0].mxu0
  %v3035 = vpop.f32.mrb[0].mxu0
  %3036 = vdwg.mxu0
  %3037 = vmatprep.subr.bf16.mxu0 0
  %3038 = vmatpush1.bf16.msra.mxu0 %v2994
  %3039 = vmatprep.subr.bf16.mxu0 0
  %3040 = vmatpush1.bf16.msra.mxu0 0
  %3041 = vmatprep.subr.bf16.mxu0 0
  %3042 = vmatpush1.bf16.msra.mxu0 0
  %3043 = vmatprep.subr.bf16.mxu0 0
  %3044 = vmatpush1.bf16.msra.mxu0 0
  %3045 = vmatprep.subr.bf16.mxu0 0
  %3046 = vmatpush1.bf16.msra.mxu0 0
  %3047 = vmatprep.subr.bf16.mxu0 0
  %3048 = vmatpush1.bf16.msra.mxu0 0
  %3049 = vmatprep.subr.bf16.mxu0 0
  %3050 = vmatpush1.bf16.msra.mxu0 0
  %3051 = vmatprep.subr.bf16.mxu0 0
  %3052 = vmatpush1.bf16.msra.mxu0 0
  %3053 = vmatprep.subr.bf16.mxu0 0
  %3054 = vmatpush1.bf16.msra.mxu0 0
  %3055 = vmatprep.subr.bf16.mxu0 0
  %3056 = vmatpush1.bf16.msra.mxu0 0
  %3057 = vmatprep.subr.bf16.mxu0 0
  %3058 = vmatpush1.bf16.msra.mxu0 0
  %3059 = vmatprep.subr.bf16.mxu0 0
  %3060 = vmatpush1.bf16.msra.mxu0 0
  %3061 = vmatprep.subr.bf16.mxu0 0
  %3062 = vmatpush1.bf16.msra.mxu0 0
  %3063 = vmatprep.subr.bf16.mxu0 0
  %3064 = vmatpush1.bf16.msra.mxu0 0
  %3065 = vmatprep.subr.bf16.mxu0 0
  %3066 = vmatpush1.bf16.msra.mxu0 0
  %3067 = vmatprep.subr.bf16.mxu0 0
  %3068 = vmatpush1.bf16.msra.mxu0 0
  %3069 = vmatprep.mubr.bf16.mxu0 0
  %3070 = vmatmul.mubr.bf16.gmra.mrb[0].mxu0 %v914
  %v3071 = vpop.f32.mrb[0].mxu0
  %v3072 = vadd.f32 0.0, %v3071
  %v3073 = vpop.f32.mrb[0].mxu0
  %v3074 = vpop.f32.mrb[0].mxu0
  %v3075 = vpop.f32.mrb[0].mxu0
  %3076 = vdwg.mxu0
  %v3077 = vadd.f32 %v2976, %v3031
  %v3078 = vadd.f32 %v2977, %v3033
  %v3079 = vadd.f32 %v2978, %v3072
  %v3080 = vadd.f32 %v3077, %v1012
  %v3081 = vadd.f32 %v3078, %v1012
  %v3082 = vadd.f32 %v3079, %v1012
  %v3083 = vmax.f32 %v3080, 0.0
  %v3084 = vmax.f32 %v3081, 0.0
  %v3085 = vmax.f32 %v3082, 0.0
  %v3086 = vmul.f32 %v3083, %v1024
  %v3087 = vmul.f32 %v3084, %v1028
  %v3088 = vmul.f32 %v3085, %v1032
  %v3089 = vpack.c.bf16 %v3086, %v3086
  %v3090 = vpack.c.bf16 %v3087, %v3087
  %v3091 = vpack.c.bf16 %v3088, %v3088
  %v3095 = vcombine.low %v3089, %v3090
  %v3097 = vunpack.c.l.s4 1983009808
  %v3098 = vunpack.c.0.s8 %v3097
  %v3099 = vlaneseq
  %v3100 = vshrl.u32 %v3099, 7
  %v3101 = vsub.s32 %v3098, %v3100
  %v3102 = vrot.slane %v3095, %v3101
  %v3104 = vunpack.c.l.s4 1983009808
  %v3105 = vunpack.c.0.s8 %v3104
  %v3106 = vlaneseq
  %v3107 = vshrl.u32 %v3106, 7
  %v3108 = vsub.s32 %v3105, %v3107
  %v3109 = vrot.slane %v3091, %v3108
  %v3110 = vcombine.low %v3102, %v3109
  %3111 = vrot.lane.b32.xlu0 %v3110, 19
  %v3112 = vpop.permute.xlu0 %3111
  %v3113 = vrot.slane %v3112, 6
  %v3114 = vsel %vm1064, %v3113, %v3112
  %3116 = vst.msk [vmem:[#allocation2] sm:$0x3f] %vm1071, %v3114
  %v3117 = vld [vmem:[#allocation2] sm:$0x3f]
  %v3119 = vcombine.high %v3117, %v3117
  %v3121 = vunpack.c.l.s4 1983009808
  %v3122 = vunpack.c.0.s8 %v3121
  %v3123 = vlaneseq
  %v3124 = vshrl.u32 %v3123, 7
  %v3125 = vsub.s32 %v3122, %v3124
  %v3126 = vrot.slane %v3117, %v3125
  %v3128 = vunpack.c.l.s4 1983009808
  %v3129 = vunpack.c.0.s8 %v3128
  %v3130 = vlaneseq
  %v3131 = vshrl.u32 %v3130, 7
  %v3132 = vsub.s32 %v3129, %v3131
  %v3133 = vrot.slane %v3119, %v3132
  %v3134 = vcombine.high %v3126, %v3126
  %3135 = vrot.lane.b32.xlu0 %v3126, 127
  %v3136 = vpop.permute.xlu0 %3135
  %3137 = vrot.lane.b32.xlu0 %v3134, 127
  %v3138 = vpop.permute.xlu0 %3137
  %3139 = vrot.lane.b32.xlu0 %v3133, 127
  %v3140 = vpop.permute.xlu0 %3139
  %v3141 = vsel %vm83, %v3136, %v3138
  %v3142 = vsel %vm83, %v3138, %v3140
  %v3144 = vsel %vm90, %v3141, 0
  %v3147 = vsel %vm90, %v3142, 0
  %v3150 = vsel %vm90, %v3140, 0
  %3152 = vmatprep.subr.bf16.mxu0 %v3147
  %3153 = vmatpush1.bf16.msra.mxu0 %v3144
  %3154 = vmatprep.subr.bf16.mxu0 0
  %3155 = vmatpush1.bf16.msra.mxu0 0
  %3156 = vmatprep.subr.bf16.mxu0 0
  %3157 = vmatpush1.bf16.msra.mxu0 0
  %3158 = vmatprep.subr.bf16.mxu0 0
  %3159 = vmatpush1.bf16.msra.mxu0 0
  %3160 = vmatprep.subr.bf16.mxu0 0
  %3161 = vmatpush1.bf16.msra.mxu0 0
  %3162 = vmatprep.subr.bf16.mxu0 0
  %3163 = vmatpush1.bf16.msra.mxu0 0
  %3164 = vmatprep.subr.bf16.mxu0 0
  %3165 = vmatpush1.bf16.msra.mxu0 0
  %3166 = vmatprep.subr.bf16.mxu0 0
  %3167 = vmatpush1.bf16.msra.mxu0 0
  %3168 = vmatprep.subr.bf16.mxu0 0
  %3169 = vmatpush1.bf16.msra.mxu0 0
  %3170 = vmatprep.subr.bf16.mxu0 0
  %3171 = vmatpush1.bf16.msra.mxu0 0
  %3172 = vmatprep.subr.bf16.mxu0 0
  %3173 = vmatpush1.bf16.msra.mxu0 0
  %3174 = vmatprep.subr.bf16.mxu0 0
  %3175 = vmatpush1.bf16.msra.mxu0 0
  %3176 = vmatprep.subr.bf16.mxu0 0
  %3177 = vmatpush1.bf16.msra.mxu0 0
  %3178 = vmatprep.subr.bf16.mxu0 0
  %3179 = vmatpush1.bf16.msra.mxu0 0
  %3180 = vmatprep.subr.bf16.mxu0 0
  %3181 = vmatpush1.bf16.msra.mxu0 0
  %3182 = vmatprep.subr.bf16.mxu0 0
  %3183 = vmatpush1.bf16.msra.mxu0 0
  %3184 = vmatprep.mubr.bf16.mxu0 0
  %3185 = vmatmul.mubr.bf16.gmra.mrb[0].mxu0 %v1100
  %v3186 = vpop.f32.mrb[0].mxu0
  %v3187 = vadd.f32 0.0, %v3186
  %v3188 = vpop.f32.mrb[0].mxu0
  %v3189 = vadd.f32 0.0, %v3188
  %v3190 = vpop.f32.mrb[0].mxu0
  %v3191 = vpop.f32.mrb[0].mxu0
  %3192 = vdwg.mxu0
  %3193 = vmatprep.subr.bf16.mxu0 0
  %3194 = vmatpush1.bf16.msra.mxu0 %v3150
  %3195 = vmatprep.subr.bf16.mxu0 0
  %3196 = vmatpush1.bf16.msra.mxu0 0
  %3197 = vmatprep.subr.bf16.mxu0 0
  %3198 = vmatpush1.bf16.msra.mxu0 0
  %3199 = vmatprep.subr.bf16.mxu0 0
  %3200 = vmatpush1.bf16.msra.mxu0 0
  %3201 = vmatprep.subr.bf16.mxu0 0
  %3202 = vmatpush1.bf16.msra.mxu0 0
  %3203 = vmatprep.subr.bf16.mxu0 0
  %3204 = vmatpush1.bf16.msra.mxu0 0
  %3205 = vmatprep.subr.bf16.mxu0 0
  %3206 = vmatpush1.bf16.msra.mxu0 0
  %3207 = vmatprep.subr.bf16.mxu0 0
  %3208 = vmatpush1.bf16.msra.mxu0 0
  %3209 = vmatprep.subr.bf16.mxu0 0
  %3210 = vmatpush1.bf16.msra.mxu0 0
  %3211 = vmatprep.subr.bf16.mxu0 0
  %3212 = vmatpush1.bf16.msra.mxu0 0
  %3213 = vmatprep.subr.bf16.mxu0 0
  %3214 = vmatpush1.bf16.msra.mxu0 0
  %3215 = vmatprep.subr.bf16.mxu0 0
  %3216 = vmatpush1.bf16.msra.mxu0 0
  %3217 = vmatprep.subr.bf16.mxu0 0
  %3218 = vmatpush1.bf16.msra.mxu0 0
  %3219 = vmatprep.subr.bf16.mxu0 0
  %3220 = vmatpush1.bf16.msra.mxu0 0
  %3221 = vmatprep.subr.bf16.mxu0 0
  %3222 = vmatpush1.bf16.msra.mxu0 0
  %3223 = vmatprep.subr.bf16.mxu0 0
  %3224 = vmatpush1.bf16.msra.mxu0 0
  %3225 = vmatprep.mubr.bf16.mxu0 0
  %3226 = vmatmul.mubr.bf16.gmra.mrb[0].mxu0 %v1100
  %v3227 = vpop.f32.mrb[0].mxu0
  %v3228 = vadd.f32 0.0, %v3227
  %v3229 = vpop.f32.mrb[0].mxu0
  %v3230 = vpop.f32.mrb[0].mxu0
  %v3231 = vpop.f32.mrb[0].mxu0
  %3232 = vdwg.mxu0
  %v3234 = vsel %vm90, %v3126, 0
  %v3237 = vsel %vm90, %v3134, 0
  %v3240 = vsel %vm90, %v3133, 0
  %3242 = vmatprep.subr.bf16.mxu0 %v3237
  %3243 = vmatpush1.bf16.msra.mxu0 %v3234
  %3244 = vmatprep.subr.bf16.mxu0 0
  %3245 = vmatpush1.bf16.msra.mxu0 0
  %3246 = vmatprep.subr.bf16.mxu0 0
  %3247 = vmatpush1.bf16.msra.mxu0 0
  %3248 = vmatprep.subr.bf16.mxu0 0
  %3249 = vmatpush1.bf16.msra.mxu0 0
  %3250 = vmatprep.subr.bf16.mxu0 0
  %3251 = vmatpush1.bf16.msra.mxu0 0
  %3252 = vmatprep.subr.bf16.mxu0 0
  %3253 = vmatpush1.bf16.msra.mxu0 0
  %3254 = vmatprep.subr.bf16.mxu0 0
  %3255 = vmatpush1.bf16.msra.mxu0 0
  %3256 = vmatprep.subr.bf16.mxu0 0
  %3257 = vmatpush1.bf16.msra.mxu0 0
  %3258 = vmatprep.subr.bf16.mxu0 0
  %3259 = vmatpush1.bf16.msra.mxu0 0
  %3260 = vmatprep.subr.bf16.mxu0 0
  %3261 = vmatpush1.bf16.msra.mxu0 0
  %3262 = vmatprep.subr.bf16.mxu0 0
  %3263 = vmatpush1.bf16.msra.mxu0 0
  %3264 = vmatprep.subr.bf16.mxu0 0
  %3265 = vmatpush1.bf16.msra.mxu0 0
  %3266 = vmatprep.subr.bf16.mxu0 0
  %3267 = vmatpush1.bf16.msra.mxu0 0
  %3268 = vmatprep.subr.bf16.mxu0 0
  %3269 = vmatpush1.bf16.msra.mxu0 0
  %3270 = vmatprep.subr.bf16.mxu0 0
  %3271 = vmatpush1.bf16.msra.mxu0 0
  %3272 = vmatprep.subr.bf16.mxu0 0
  %3273 = vmatpush1.bf16.msra.mxu0 0
  %3274 = vmatprep.mubr.bf16.mxu0 0
  %3275 = vmatmul.mubr.bf16.gmra.mrb[0].mxu0 %v1193
  %v3276 = vpop.f32.mrb[0].mxu0
  %v3277 = vadd.f32 %v3187, %v3276
  %v3278 = vpop.f32.mrb[0].mxu0
  %v3279 = vadd.f32 %v3189, %v3278
  %v3280 = vpop.f32.mrb[0].mxu0
  %v3281 = vpop.f32.mrb[0].mxu0
  %3282 = vdwg.mxu0
  %3283 = vmatprep.subr.bf16.mxu0 0
  %3284 = vmatpush1.bf16.msra.mxu0 %v3240
  %3285 = vmatprep.subr.bf16.mxu0 0
  %3286 = vmatpush1.bf16.msra.mxu0 0
  %3287 = vmatprep.subr.bf16.mxu0 0
  %3288 = vmatpush1.bf16.msra.mxu0 0
  %3289 = vmatprep.subr.bf16.mxu0 0
  %3290 = vmatpush1.bf16.msra.mxu0 0
  %3291 = vmatprep.subr.bf16.mxu0 0
  %3292 = vmatpush1.bf16.msra.mxu0 0
  %3293 = vmatprep.subr.bf16.mxu0 0
  %3294 = vmatpush1.bf16.msra.mxu0 0
  %3295 = vmatprep.subr.bf16.mxu0 0
  %3296 = vmatpush1.bf16.msra.mxu0 0
  %3297 = vmatprep.subr.bf16.mxu0 0
  %3298 = vmatpush1.bf16.msra.mxu0 0
  %3299 = vmatprep.subr.bf16.mxu0 0
  %3300 = vmatpush1.bf16.msra.mxu0 0
  %3301 = vmatprep.subr.bf16.mxu0 0
  %3302 = vmatpush1.bf16.msra.mxu0 0
  %3303 = vmatprep.subr.bf16.mxu0 0
  %3304 = vmatpush1.bf16.msra.mxu0 0
  %3305 = vmatprep.subr.bf16.mxu0 0
  %3306 = vmatpush1.bf16.msra.mxu0 0
  %3307 = vmatprep.subr.bf16.mxu0 0
  %3308 = vmatpush1.bf16.msra.mxu0 0
  %3309 = vmatprep.subr.bf16.mxu0 0
  %3310 = vmatpush1.bf16.msra.mxu0 0
  %3311 = vmatprep.subr.bf16.mxu0 0
  %3312 = vmatpush1.bf16.msra.mxu0 0
  %3313 = vmatprep.subr.bf16.mxu0 0
  %3314 = vmatpush1.bf16.msra.mxu0 0
  %3315 = vmatprep.mubr.bf16.mxu0 0
  %3316 = vmatmul.mubr.bf16.gmra.mrb[0].mxu0 %v1193
  %v3317 = vpop.f32.mrb[0].mxu0
  %v3318 = vadd.f32 %v3228, %v3317
  %v3319 = vpop.f32.mrb[0].mxu0
  %v3320 = vpop.f32.mrb[0].mxu0
  %v3321 = vpop.f32.mrb[0].mxu0
  %3322 = vdwg.mxu0
  %v3323 = vld [vmem:[#allocation2] sm:$0x3f]
  %v3325 = vcombine.high %v3323, %v3323
  %v3327 = vunpack.c.l.s4 1983009808
  %v3328 = vunpack.c.0.s8 %v3327
  %v3329 = vlaneseq
  %v3330 = vshrl.u32 %v3329, 7
  %v3331 = vsub.s32 %v3328, %v3330
  %v3332 = vrot.slane %v3323, %v3331
  %v3334 = vunpack.c.l.s4 1983009808
  %v3335 = vunpack.c.0.s8 %v3334
  %v3336 = vlaneseq
  %v3337 = vshrl.u32 %v3336, 7
  %v3338 = vsub.s32 %v3335, %v3337
  %v3339 = vrot.slane %v3325, %v3338
  %v3340 = vcombine.high %v3332, %v3332
  %3341 = vrot.lane.b32.xlu0 %v3332, 126
  %v3342 = vpop.permute.xlu0 %3341
  %3343 = vrot.lane.b32.xlu0 %v3340, 126
  %v3344 = vpop.permute.xlu0 %3343
  %3345 = vrot.lane.b32.xlu0 %v3339, 126
  %v3346 = vpop.permute.xlu0 %3345
  %v3347 = vsel %vm280, %v3342, %v3344
  %v3348 = vsel %vm280, %v3344, %v3346
  %v3350 = vsel %vm90, %v3347, 0
  %v3353 = vsel %vm90, %v3348, 0
  %v3356 = vsel %vm90, %v3346, 0
  %3358 = vmatprep.subr.bf16.mxu0 %v3353
  %3359 = vmatpush1.bf16.msra.mxu0 %v3350
  %3360 = vmatprep.subr.bf16.mxu0 0
  %3361 = vmatpush1.bf16.msra.mxu0 0
  %3362 = vmatprep.subr.bf16.mxu0 0
  %3363 = vmatpush1.bf16.msra.mxu0 0
  %3364 = vmatprep.subr.bf16.mxu0 0
  %3365 = vmatpush1.bf16.msra.mxu0 0
  %3366 = vmatprep.subr.bf16.mxu0 0
  %3367 = vmatpush1.bf16.msra.mxu0 0
  %3368 = vmatprep.subr.bf16.mxu0 0
  %3369 = vmatpush1.bf16.msra.mxu0 0
  %3370 = vmatprep.subr.bf16.mxu0 0
  %3371 = vmatpush1.bf16.msra.mxu0 0
  %3372 = vmatprep.subr.bf16.mxu0 0
  %3373 = vmatpush1.bf16.msra.mxu0 0
  %3374 = vmatprep.subr.bf16.mxu0 0
  %3375 = vmatpush1.bf16.msra.mxu0 0
  %3376 = vmatprep.subr.bf16.mxu0 0
  %3377 = vmatpush1.bf16.msra.mxu0 0
  %3378 = vmatprep.subr.bf16.mxu0 0
  %3379 = vmatpush1.bf16.msra.mxu0 0
  %3380 = vmatprep.subr.bf16.mxu0 0
  %3381 = vmatpush1.bf16.msra.mxu0 0
  %3382 = vmatprep.subr.bf16.mxu0 0
  %3383 = vmatpush1.bf16.msra.mxu0 0
  %3384 = vmatprep.subr.bf16.mxu0 0
  %3385 = vmatpush1.bf16.msra.mxu0 0
  %3386 = vmatprep.subr.bf16.mxu0 0
  %3387 = vmatpush1.bf16.msra.mxu0 0
  %3388 = vmatprep.subr.bf16.mxu0 0
  %3389 = vmatpush1.bf16.msra.mxu0 0
  %3390 = vmatprep.mubr.bf16.mxu0 0
  %3391 = vmatmul.mubr.bf16.gmra.mrb[0].mxu0 %v1312
  %v3392 = vpop.f32.mrb[0].mxu0
  %v3393 = vadd.f32 0.0, %v3392
  %v3394 = vpop.f32.mrb[0].mxu0
  %v3395 = vadd.f32 0.0, %v3394
  %v3396 = vpop.f32.mrb[0].mxu0
  %v3397 = vpop.f32.mrb[0].mxu0
  %3398 = vdwg.mxu0
  %3399 = vmatprep.subr.bf16.mxu0 0
  %3400 = vmatpush1.bf16.msra.mxu0 %v3356
  %3401 = vmatprep.subr.bf16.mxu0 0
  %3402 = vmatpush1.bf16.msra.mxu0 0
  %3403 = vmatprep.subr.bf16.mxu0 0
  %3404 = vmatpush1.bf16.msra.mxu0 0
  %3405 = vmatprep.subr.bf16.mxu0 0
  %3406 = vmatpush1.bf16.msra.mxu0 0
  %3407 = vmatprep.subr.bf16.mxu0 0
  %3408 = vmatpush1.bf16.msra.mxu0 0
  %3409 = vmatprep.subr.bf16.mxu0 0
  %3410 = vmatpush1.bf16.msra.mxu0 0
  %3411 = vmatprep.subr.bf16.mxu0 0
  %3412 = vmatpush1.bf16.msra.mxu0 0
  %3413 = vmatprep.subr.bf16.mxu0 0
  %3414 = vmatpush1.bf16.msra.mxu0 0
  %3415 = vmatprep.subr.bf16.mxu0 0
  %3416 = vmatpush1.bf16.msra.mxu0 0
  %3417 = vmatprep.subr.bf16.mxu0 0
  %3418 = vmatpush1.bf16.msra.mxu0 0
  %3419 = vmatprep.subr.bf16.mxu0 0
  %3420 = vmatpush1.bf16.msra.mxu0 0
  %3421 = vmatprep.subr.bf16.mxu0 0
  %3422 = vmatpush1.bf16.msra.mxu0 0
  %3423 = vmatprep.subr.bf16.mxu0 0
  %3424 = vmatpush1.bf16.msra.mxu0 0
  %3425 = vmatprep.subr.bf16.mxu0 0
  %3426 = vmatpush1.bf16.msra.mxu0 0
  %3427 = vmatprep.subr.bf16.mxu0 0
  %3428 = vmatpush1.bf16.msra.mxu0 0
  %3429 = vmatprep.subr.bf16.mxu0 0
  %3430 = vmatpush1.bf16.msra.mxu0 0
  %3431 = vmatprep.mubr.bf16.mxu0 0
  %3432 = vmatmul.mubr.bf16.gmra.mrb[0].mxu0 %v1312
  %v3433 = vpop.f32.mrb[0].mxu0
  %v3434 = vadd.f32 0.0, %v3433
  %v3435 = vpop.f32.mrb[0].mxu0
  %v3436 = vpop.f32.mrb[0].mxu0
  %v3437 = vpop.f32.mrb[0].mxu0
  %3438 = vdwg.mxu0
  %v3439 = vadd.f32 %v3277, %v3393
  %v3440 = vadd.f32 %v3279, %v3395
  %v3441 = vadd.f32 %v3318, %v3434
  %v3442 = vld [vmem:[#allocation2] sm:$0x3f]
  %v3444 = vcombine.high %v3442, %v3442
  %v3446 = vunpack.c.l.s4 1983009808
  %v3447 = vunpack.c.0.s8 %v3446
  %v3448 = vlaneseq
  %v3449 = vshrl.u32 %v3448, 7
  %v3450 = vsub.s32 %v3447, %v3449
  %v3451 = vrot.slane %v3442, %v3450
  %v3453 = vunpack.c.l.s4 1983009808
  %v3454 = vunpack.c.0.s8 %v3453
  %v3455 = vlaneseq
  %v3456 = vshrl.u32 %v3455, 7
  %v3457 = vsub.s32 %v3454, %v3456
  %v3458 = vrot.slane %v3444, %v3457
  %v3459 = vcombine.high %v3451, %v3451
  %3460 = vrot.lane.b32.xlu0 %v3451, 110
  %v3461 = vpop.permute.xlu0 %3460
  %3462 = vrot.lane.b32.xlu0 %v3459, 110
  %v3463 = vpop.permute.xlu0 %3462
  %3464 = vrot.lane.b32.xlu0 %v3458, 110
  %v3465 = vpop.permute.xlu0 %3464
  %v3466 = vsel %vm385, %v3461, %v3463
  %v3467 = vsel %vm385, %v3463, %v3465
  %v3469 = vsel %vm90, %v3466, 0
  %v3472 = vsel %vm90, %v3467, 0
  %v3475 = vsel %vm90, %v3465, 0
  %3477 = vmatprep.subr.bf16.mxu0 %v3472
  %3478 = vmatpush1.bf16.msra.mxu0 %v3469
  %3479 = vmatprep.subr.bf16.mxu0 0
  %3480 = vmatpush1.bf16.msra.mxu0 0
  %3481 = vmatprep.subr.bf16.mxu0 0
  %3482 = vmatpush1.bf16.msra.mxu0 0
  %3483 = vmatprep.subr.bf16.mxu0 0
  %3484 = vmatpush1.bf16.msra.mxu0 0
  %3485 = vmatprep.subr.bf16.mxu0 0
  %3486 = vmatpush1.bf16.msra.mxu0 0
  %3487 = vmatprep.subr.bf16.mxu0 0
  %3488 = vmatpush1.bf16.msra.mxu0 0
  %3489 = vmatprep.subr.bf16.mxu0 0
  %3490 = vmatpush1.bf16.msra.mxu0 0
  %3491 = vmatprep.subr.bf16.mxu0 0
  %3492 = vmatpush1.bf16.msra.mxu0 0
  %3493 = vmatprep.subr.bf16.mxu0 0
  %3494 = vmatpush1.bf16.msra.mxu0 0
  %3495 = vmatprep.subr.bf16.mxu0 0
  %3496 = vmatpush1.bf16.msra.mxu0 0
  %3497 = vmatprep.subr.bf16.mxu0 0
  %3498 = vmatpush1.bf16.msra.mxu0 0
  %3499 = vmatprep.subr.bf16.mxu0 0
  %3500 = vmatpush1.bf16.msra.mxu0 0
  %3501 = vmatprep.subr.bf16.mxu0 0
  %3502 = vmatpush1.bf16.msra.mxu0 0
  %3503 = vmatprep.subr.bf16.mxu0 0
  %3504 = vmatpush1.bf16.msra.mxu0 0
  %3505 = vmatprep.subr.bf16.mxu0 0
  %3506 = vmatpush1.bf16.msra.mxu0 0
  %3507 = vmatprep.subr.bf16.mxu0 0
  %3508 = vmatpush1.bf16.msra.mxu0 0
  %3509 = vmatprep.mubr.bf16.mxu0 0
  %3510 = vmatmul.mubr.bf16.gmra.mrb[0].mxu0 %v1434
  %v3511 = vpop.f32.mrb[0].mxu0
  %v3512 = vadd.f32 0.0, %v3511
  %v3513 = vpop.f32.mrb[0].mxu0
  %v3514 = vadd.f32 0.0, %v3513
  %v3515 = vpop.f32.mrb[0].mxu0
  %v3516 = vpop.f32.mrb[0].mxu0
  %3517 = vdwg.mxu0
  %3518 = vmatprep.subr.bf16.mxu0 0
  %3519 = vmatpush1.bf16.msra.mxu0 %v3475
  %3520 = vmatprep.subr.bf16.mxu0 0
  %3521 = vmatpush1.bf16.msra.mxu0 0
  %3522 = vmatprep.subr.bf16.mxu0 0
  %3523 = vmatpush1.bf16.msra.mxu0 0
  %3524 = vmatprep.subr.bf16.mxu0 0
  %3525 = vmatpush1.bf16.msra.mxu0 0
  %3526 = vmatprep.subr.bf16.mxu0 0
  %3527 = vmatpush1.bf16.msra.mxu0 0
  %3528 = vmatprep.subr.bf16.mxu0 0
  %3529 = vmatpush1.bf16.msra.mxu0 0
  %3530 = vmatprep.subr.bf16.mxu0 0
  %3531 = vmatpush1.bf16.msra.mxu0 0
  %3532 = vmatprep.subr.bf16.mxu0 0
  %3533 = vmatpush1.bf16.msra.mxu0 0
  %3534 = vmatprep.subr.bf16.mxu0 0
  %3535 = vmatpush1.bf16.msra.mxu0 0
  %3536 = vmatprep.subr.bf16.mxu0 0
  %3537 = vmatpush1.bf16.msra.mxu0 0
  %3538 = vmatprep.subr.bf16.mxu0 0
  %3539 = vmatpush1.bf16.msra.mxu0 0
  %3540 = vmatprep.subr.bf16.mxu0 0
  %3541 = vmatpush1.bf16.msra.mxu0 0
  %3542 = vmatprep.subr.bf16.mxu0 0
  %3543 = vmatpush1.bf16.msra.mxu0 0
  %3544 = vmatprep.subr.bf16.mxu0 0
  %3545 = vmatpush1.bf16.msra.mxu0 0
  %3546 = vmatprep.subr.bf16.mxu0 0
  %3547 = vmatpush1.bf16.msra.mxu0 0
  %3548 = vmatprep.subr.bf16.mxu0 0
  %3549 = vmatpush1.bf16.msra.mxu0 0
  %3550 = vmatprep.mubr.bf16.mxu0 0
  %3551 = vmatmul.mubr.bf16.gmra.mrb[0].mxu0 %v1434
  %v3552 = vpop.f32.mrb[0].mxu0
  %v3553 = vadd.f32 0.0, %v3552
  %v3554 = vpop.f32.mrb[0].mxu0
  %v3555 = vpop.f32.mrb[0].mxu0
  %v3556 = vpop.f32.mrb[0].mxu0
  %3557 = vdwg.mxu0
  %v3558 = vadd.f32 %v3439, %v3512
  %v3559 = vadd.f32 %v3440, %v3514
  %v3560 = vadd.f32 %v3441, %v3553
  %v3561 = vld [vmem:[#allocation2] sm:$0x3f]
  %v3563 = vcombine.high %v3561, %v3561
  %v3565 = vunpack.c.l.s4 1983009808
  %v3566 = vunpack.c.0.s8 %v3565
  %v3567 = vlaneseq
  %v3568 = vshrl.u32 %v3567, 7
  %v3569 = vsub.s32 %v3566, %v3568
  %v3570 = vrot.slane %v3561, %v3569
  %v3572 = vunpack.c.l.s4 1983009808
  %v3573 = vunpack.c.0.s8 %v3572
  %v3574 = vlaneseq
  %v3575 = vshrl.u32 %v3574, 7
  %v3576 = vsub.s32 %v3573, %v3575
  %v3577 = vrot.slane %v3563, %v3576
  %v3578 = vcombine.high %v3570, %v3570
  %3579 = vrot.lane.b32.xlu0 %v3570, 109
  %v3580 = vpop.permute.xlu0 %3579
  %3581 = vrot.lane.b32.xlu0 %v3578, 109
  %v3582 = vpop.permute.xlu0 %3581
  %3583 = vrot.lane.b32.xlu0 %v3577, 109
  %v3584 = vpop.permute.xlu0 %3583
  %v3585 = vsel %vm490, %v3580, %v3582
  %v3586 = vsel %vm490, %v3582, %v3584
  %v3588 = vsel %vm90, %v3585, 0
  %v3591 = vsel %vm90, %v3586, 0
  %v3594 = vsel %vm90, %v3584, 0
  %3596 = vmatprep.subr.bf16.mxu0 %v3591
  %3597 = vmatpush1.bf16.msra.mxu0 %v3588
  %3598 = vmatprep.subr.bf16.mxu0 0
  %3599 = vmatpush1.bf16.msra.mxu0 0
  %3600 = vmatprep.subr.bf16.mxu0 0
  %3601 = vmatpush1.bf16.msra.mxu0 0
  %3602 = vmatprep.subr.bf16.mxu0 0
  %3603 = vmatpush1.bf16.msra.mxu0 0
  %3604 = vmatprep.subr.bf16.mxu0 0
  %3605 = vmatpush1.bf16.msra.mxu0 0
  %3606 = vmatprep.subr.bf16.mxu0 0
  %3607 = vmatpush1.bf16.msra.mxu0 0
  %3608 = vmatprep.subr.bf16.mxu0 0
  %3609 = vmatpush1.bf16.msra.mxu0 0
  %3610 = vmatprep.subr.bf16.mxu0 0
  %3611 = vmatpush1.bf16.msra.mxu0 0
  %3612 = vmatprep.subr.bf16.mxu0 0
  %3613 = vmatpush1.bf16.msra.mxu0 0
  %3614 = vmatprep.subr.bf16.mxu0 0
  %3615 = vmatpush1.bf16.msra.mxu0 0
  %3616 = vmatprep.subr.bf16.mxu0 0
  %3617 = vmatpush1.bf16.msra.mxu0 0
  %3618 = vmatprep.subr.bf16.mxu0 0
  %3619 = vmatpush1.bf16.msra.mxu0 0
  %3620 = vmatprep.subr.bf16.mxu0 0
  %3621 = vmatpush1.bf16.msra.mxu0 0
  %3622 = vmatprep.subr.bf16.mxu0 0
  %3623 = vmatpush1.bf16.msra.mxu0 0
  %3624 = vmatprep.subr.bf16.mxu0 0
  %3625 = vmatpush1.bf16.msra.mxu0 0
  %3626 = vmatprep.subr.bf16.mxu0 0
  %3627 = vmatpush1.bf16.msra.mxu0 0
  %3628 = vmatprep.mubr.bf16.mxu0 0
  %3629 = vmatmul.mubr.bf16.gmra.mrb[0].mxu0 %v1556
  %v3630 = vpop.f32.mrb[0].mxu0
  %v3631 = vadd.f32 0.0, %v3630
  %v3632 = vpop.f32.mrb[0].mxu0
  %v3633 = vadd.f32 0.0, %v3632
  %v3634 = vpop.f32.mrb[0].mxu0
  %v3635 = vpop.f32.mrb[0].mxu0
  %3636 = vdwg.mxu0
  %3637 = vmatprep.subr.bf16.mxu0 0
  %3638 = vmatpush1.bf16.msra.mxu0 %v3594
  %3639 = vmatprep.subr.bf16.mxu0 0
  %3640 = vmatpush1.bf16.msra.mxu0 0
  %3641 = vmatprep.subr.bf16.mxu0 0
  %3642 = vmatpush1.bf16.msra.mxu0 0
  %3643 = vmatprep.subr.bf16.mxu0 0
  %3644 = vmatpush1.bf16.msra.mxu0 0
  %3645 = vmatprep.subr.bf16.mxu0 0
  %3646 = vmatpush1.bf16.msra.mxu0 0
  %3647 = vmatprep.subr.bf16.mxu0 0
  %3648 = vmatpush1.bf16.msra.mxu0 0
  %3649 = vmatprep.subr.bf16.mxu0 0
  %3650 = vmatpush1.bf16.msra.mxu0 0
  %3651 = vmatprep.subr.bf16.mxu0 0
  %3652 = vmatpush1.bf16.msra.mxu0 0
  %3653 = vmatprep.subr.bf16.mxu0 0
  %3654 = vmatpush1.bf16.msra.mxu0 0
  %3655 = vmatprep.subr.bf16.mxu0 0
  %3656 = vmatpush1.bf16.msra.mxu0 0
  %3657 = vmatprep.subr.bf16.mxu0 0
  %3658 = vmatpush1.bf16.msra.mxu0 0
  %3659 = vmatprep.subr.bf16.mxu0 0
  %3660 = vmatpush1.bf16.msra.mxu0 0
  %3661 = vmatprep.subr.bf16.mxu0 0
  %3662 = vmatpush1.bf16.msra.mxu0 0
  %3663 = vmatprep.subr.bf16.mxu0 0
  %3664 = vmatpush1.bf16.msra.mxu0 0
  %3665 = vmatprep.subr.bf16.mxu0 0
  %3666 = vmatpush1.bf16.msra.mxu0 0
  %3667 = vmatprep.subr.bf16.mxu0 0
  %3668 = vmatpush1.bf16.msra.mxu0 0
  %3669 = vmatprep.mubr.bf16.mxu0 0
  %3670 = vmatmul.mubr.bf16.gmra.mrb[0].mxu0 %v1556
  %v3671 = vpop.f32.mrb[0].mxu0
  %v3672 = vadd.f32 0.0, %v3671
  %v3673 = vpop.f32.mrb[0].mxu0
  %v3674 = vpop.f32.mrb[0].mxu0
  %v3675 = vpop.f32.mrb[0].mxu0
  %3676 = vdwg.mxu0
  %v3677 = vadd.f32 %v3558, %v3631
  %v3678 = vadd.f32 %v3559, %v3633
  %v3679 = vadd.f32 %v3560, %v3672
  %v3680 = vld [vmem:[#allocation2] sm:$0x3f]
  %v3682 = vcombine.high %v3680, %v3680
  %v3684 = vunpack.c.l.s4 1983009808
  %v3685 = vunpack.c.0.s8 %v3684
  %v3686 = vlaneseq
  %v3687 = vshrl.u32 %v3686, 7
  %v3688 = vsub.s32 %v3685, %v3687
  %v3689 = vrot.slane %v3680, %v3688
  %v3691 = vunpack.c.l.s4 1983009808
  %v3692 = vunpack.c.0.s8 %v3691
  %v3693 = vlaneseq
  %v3694 = vshrl.u32 %v3693, 7
  %v3695 = vsub.s32 %v3692, %v3694
  %v3696 = vrot.slane %v3682, %v3695
  %v3697 = vcombine.high %v3689, %v3689
  %3698 = vrot.lane.b32.xlu0 %v3689, 108
  %v3699 = vpop.permute.xlu0 %3698
  %3700 = vrot.lane.b32.xlu0 %v3697, 108
  %v3701 = vpop.permute.xlu0 %3700
  %3702 = vrot.lane.b32.xlu0 %v3696, 108
  %v3703 = vpop.permute.xlu0 %3702
  %v3704 = vsel %vm595, %v3699, %v3701
  %v3705 = vsel %vm595, %v3701, %v3703
  %v3707 = vsel %vm90, %v3704, 0
  %v3710 = vsel %vm90, %v3705, 0
  %v3713 = vsel %vm90, %v3703, 0
  %3715 = vmatprep.subr.bf16.mxu0 %v3710
  %3716 = vmatpush1.bf16.msra.mxu0 %v3707
  %3717 = vmatprep.subr.bf16.mxu0 0
  %3718 = vmatpush1.bf16.msra.mxu0 0
  %3719 = vmatprep.subr.bf16.mxu0 0
  %3720 = vmatpush1.bf16.msra.mxu0 0
  %3721 = vmatprep.subr.bf16.mxu0 0
  %3722 = vmatpush1.bf16.msra.mxu0 0
  %3723 = vmatprep.subr.bf16.mxu0 0
  %3724 = vmatpush1.bf16.msra.mxu0 0
  %3725 = vmatprep.subr.bf16.mxu0 0
  %3726 = vmatpush1.bf16.msra.mxu0 0
  %3727 = vmatprep.subr.bf16.mxu0 0
  %3728 = vmatpush1.bf16.msra.mxu0 0
  %3729 = vmatprep.subr.bf16.mxu0 0
  %3730 = vmatpush1.bf16.msra.mxu0 0
  %3731 = vmatprep.subr.bf16.mxu0 0
  %3732 = vmatpush1.bf16.msra.mxu0 0
  %3733 = vmatprep.subr.bf16.mxu0 0
  %3734 = vmatpush1.bf16.msra.mxu0 0
  %3735 = vmatprep.subr.bf16.mxu0 0
  %3736 = vmatpush1.bf16.msra.mxu0 0
  %3737 = vmatprep.subr.bf16.mxu0 0
  %3738 = vmatpush1.bf16.msra.mxu0 0
  %3739 = vmatprep.subr.bf16.mxu0 0
  %3740 = vmatpush1.bf16.msra.mxu0 0
  %3741 = vmatprep.subr.bf16.mxu0 0
  %3742 = vmatpush1.bf16.msra.mxu0 0
  %3743 = vmatprep.subr.bf16.mxu0 0
  %3744 = vmatpush1.bf16.msra.mxu0 0
  %3745 = vmatprep.subr.bf16.mxu0 0
  %3746 = vmatpush1.bf16.msra.mxu0 0
  %3747 = vmatprep.mubr.bf16.mxu0 0
  %3748 = vmatmul.mubr.bf16.gmra.mrb[0].mxu0 %v1678
  %v3749 = vpop.f32.mrb[0].mxu0
  %v3750 = vadd.f32 0.0, %v3749
  %v3751 = vpop.f32.mrb[0].mxu0
  %v3752 = vadd.f32 0.0, %v3751
  %v3753 = vpop.f32.mrb[0].mxu0
  %v3754 = vpop.f32.mrb[0].mxu0
  %3755 = vdwg.mxu0
  %3756 = vmatprep.subr.bf16.mxu0 0
  %3757 = vmatpush1.bf16.msra.mxu0 %v3713
  %3758 = vmatprep.subr.bf16.mxu0 0
  %3759 = vmatpush1.bf16.msra.mxu0 0
  %3760 = vmatprep.subr.bf16.mxu0 0
  %3761 = vmatpush1.bf16.msra.mxu0 0
  %3762 = vmatprep.subr.bf16.mxu0 0
  %3763 = vmatpush1.bf16.msra.mxu0 0
  %3764 = vmatprep.subr.bf16.mxu0 0
  %3765 = vmatpush1.bf16.msra.mxu0 0
  %3766 = vmatprep.subr.bf16.mxu0 0
  %3767 = vmatpush1.bf16.msra.mxu0 0
  %3768 = vmatprep.subr.bf16.mxu0 0
  %3769 = vmatpush1.bf16.msra.mxu0 0
  %3770 = vmatprep.subr.bf16.mxu0 0
  %3771 = vmatpush1.bf16.msra.mxu0 0
  %3772 = vmatprep.subr.bf16.mxu0 0
  %3773 = vmatpush1.bf16.msra.mxu0 0
  %3774 = vmatprep.subr.bf16.mxu0 0
  %3775 = vmatpush1.bf16.msra.mxu0 0
  %3776 = vmatprep.subr.bf16.mxu0 0
  %3777 = vmatpush1.bf16.msra.mxu0 0
  %3778 = vmatprep.subr.bf16.mxu0 0
  %3779 = vmatpush1.bf16.msra.mxu0 0
  %3780 = vmatprep.subr.bf16.mxu0 0
  %3781 = vmatpush1.bf16.msra.mxu0 0
  %3782 = vmatprep.subr.bf16.mxu0 0
  %3783 = vmatpush1.bf16.msra.mxu0 0
  %3784 = vmatprep.subr.bf16.mxu0 0
  %3785 = vmatpush1.bf16.msra.mxu0 0
  %3786 = vmatprep.subr.bf16.mxu0 0
  %3787 = vmatpush1.bf16.msra.mxu0 0
  %3788 = vmatprep.mubr.bf16.mxu0 0
  %3789 = vmatmul.mubr.bf16.gmra.mrb[0].mxu0 %v1678
  %v3790 = vpop.f32.mrb[0].mxu0
  %v3791 = vadd.f32 0.0, %v3790
  %v3792 = vpop.f32.mrb[0].mxu0
  %v3793 = vpop.f32.mrb[0].mxu0
  %v3794 = vpop.f32.mrb[0].mxu0
  %3795 = vdwg.mxu0
  %v3796 = vadd.f32 %v3677, %v3750
  %v3797 = vadd.f32 %v3678, %v3752
  %v3798 = vadd.f32 %v3679, %v3791
  %v3799 = vld [vmem:[#allocation2] sm:$0x3f]
  %v3801 = vcombine.high %v3799, %v3799
  %v3803 = vunpack.c.l.s4 1983009808
  %v3804 = vunpack.c.0.s8 %v3803
  %v3805 = vlaneseq
  %v3806 = vshrl.u32 %v3805, 7
  %v3807 = vsub.s32 %v3804, %v3806
  %v3808 = vrot.slane %v3799, %v3807
  %v3810 = vunpack.c.l.s4 1983009808
  %v3811 = vunpack.c.0.s8 %v3810
  %v3812 = vlaneseq
  %v3813 = vshrl.u32 %v3812, 7
  %v3814 = vsub.s32 %v3811, %v3813
  %v3815 = vrot.slane %v3801, %v3814
  %v3816 = vcombine.high %v3808, %v3808
  %3817 = vrot.lane.b32.xlu0 %v3808, 92
  %v3818 = vpop.permute.xlu0 %3817
  %3819 = vrot.lane.b32.xlu0 %v3816, 92
  %v3820 = vpop.permute.xlu0 %3819
  %3821 = vrot.lane.b32.xlu0 %v3815, 92
  %v3822 = vpop.permute.xlu0 %3821
  %v3823 = vsel %vm700, %v3818, %v3820
  %v3824 = vsel %vm700, %v3820, %v3822
  %v3826 = vsel %vm90, %v3823, 0
  %v3829 = vsel %vm90, %v3824, 0
  %v3832 = vsel %vm90, %v3822, 0
  %3834 = vmatprep.subr.bf16.mxu0 %v3829
  %3835 = vmatpush1.bf16.msra.mxu0 %v3826
  %3836 = vmatprep.subr.bf16.mxu0 0
  %3837 = vmatpush1.bf16.msra.mxu0 0
  %3838 = vmatprep.subr.bf16.mxu0 0
  %3839 = vmatpush1.bf16.msra.mxu0 0
  %3840 = vmatprep.subr.bf16.mxu0 0
  %3841 = vmatpush1.bf16.msra.mxu0 0
  %3842 = vmatprep.subr.bf16.mxu0 0
  %3843 = vmatpush1.bf16.msra.mxu0 0
  %3844 = vmatprep.subr.bf16.mxu0 0
  %3845 = vmatpush1.bf16.msra.mxu0 0
  %3846 = vmatprep.subr.bf16.mxu0 0
  %3847 = vmatpush1.bf16.msra.mxu0 0
  %3848 = vmatprep.subr.bf16.mxu0 0
  %3849 = vmatpush1.bf16.msra.mxu0 0
  %3850 = vmatprep.subr.bf16.mxu0 0
  %3851 = vmatpush1.bf16.msra.mxu0 0
  %3852 = vmatprep.subr.bf16.mxu0 0
  %3853 = vmatpush1.bf16.msra.mxu0 0
  %3854 = vmatprep.subr.bf16.mxu0 0
  %3855 = vmatpush1.bf16.msra.mxu0 0
  %3856 = vmatprep.subr.bf16.mxu0 0
  %3857 = vmatpush1.bf16.msra.mxu0 0
  %3858 = vmatprep.subr.bf16.mxu0 0
  %3859 = vmatpush1.bf16.msra.mxu0 0
  %3860 = vmatprep.subr.bf16.mxu0 0
  %3861 = vmatpush1.bf16.msra.mxu0 0
  %3862 = vmatprep.subr.bf16.mxu0 0
  %3863 = vmatpush1.bf16.msra.mxu0 0
  %3864 = vmatprep.subr.bf16.mxu0 0
  %3865 = vmatpush1.bf16.msra.mxu0 0
  %3866 = vmatprep.mubr.bf16.mxu0 0
  %3867 = vmatmul.mubr.bf16.gmra.mrb[0].mxu0 %v1800
  %v3868 = vpop.f32.mrb[0].mxu0
  %v3869 = vadd.f32 0.0, %v3868
  %v3870 = vpop.f32.mrb[0].mxu0
  %v3871 = vadd.f32 0.0, %v3870
  %v3872 = vpop.f32.mrb[0].mxu0
  %v3873 = vpop.f32.mrb[0].mxu0
  %3874 = vdwg.mxu0
  %3875 = vmatprep.subr.bf16.mxu0 0
  %3876 = vmatpush1.bf16.msra.mxu0 %v3832
  %3877 = vmatprep.subr.bf16.mxu0 0
  %3878 = vmatpush1.bf16.msra.mxu0 0
  %3879 = vmatprep.subr.bf16.mxu0 0
  %3880 = vmatpush1.bf16.msra.mxu0 0
  %3881 = vmatprep.subr.bf16.mxu0 0
  %3882 = vmatpush1.bf16.msra.mxu0 0
  %3883 = vmatprep.subr.bf16.mxu0 0
  %3884 = vmatpush1.bf16.msra.mxu0 0
  %3885 = vmatprep.subr.bf16.mxu0 0
  %3886 = vmatpush1.bf16.msra.mxu0 0
  %3887 = vmatprep.subr.bf16.mxu0 0
  %3888 = vmatpush1.bf16.msra.mxu0 0
  %3889 = vmatprep.subr.bf16.mxu0 0
  %3890 = vmatpush1.bf16.msra.mxu0 0
  %3891 = vmatprep.subr.bf16.mxu0 0
  %3892 = vmatpush1.bf16.msra.mxu0 0
  %3893 = vmatprep.subr.bf16.mxu0 0
  %3894 = vmatpush1.bf16.msra.mxu0 0
  %3895 = vmatprep.subr.bf16.mxu0 0
  %3896 = vmatpush1.bf16.msra.mxu0 0
  %3897 = vmatprep.subr.bf16.mxu0 0
  %3898 = vmatpush1.bf16.msra.mxu0 0
  %3899 = vmatprep.subr.bf16.mxu0 0
  %3900 = vmatpush1.bf16.msra.mxu0 0
  %3901 = vmatprep.subr.bf16.mxu0 0
  %3902 = vmatpush1.bf16.msra.mxu0 0
  %3903 = vmatprep.subr.bf16.mxu0 0
  %3904 = vmatpush1.bf16.msra.mxu0 0
  %3905 = vmatprep.subr.bf16.mxu0 0
  %3906 = vmatpush1.bf16.msra.mxu0 0
  %3907 = vmatprep.mubr.bf16.mxu0 0
  %3908 = vmatmul.mubr.bf16.gmra.mrb[0].mxu0 %v1800
  %v3909 = vpop.f32.mrb[0].mxu0
  %v3910 = vadd.f32 0.0, %v3909
  %v3911 = vpop.f32.mrb[0].mxu0
  %v3912 = vpop.f32.mrb[0].mxu0
  %v3913 = vpop.f32.mrb[0].mxu0
  %3914 = vdwg.mxu0
  %v3915 = vadd.f32 %v3796, %v3869
  %v3916 = vadd.f32 %v3797, %v3871
  %v3917 = vadd.f32 %v3798, %v3910
  %v3918 = vld [vmem:[#allocation2] sm:$0x3f]
  %v3920 = vcombine.high %v3918, %v3918
  %v3922 = vunpack.c.l.s4 1983009808
  %v3923 = vunpack.c.0.s8 %v3922
  %v3924 = vlaneseq
  %v3925 = vshrl.u32 %v3924, 7
  %v3926 = vsub.s32 %v3923, %v3925
  %v3927 = vrot.slane %v3918, %v3926
  %v3929 = vunpack.c.l.s4 1983009808
  %v3930 = vunpack.c.0.s8 %v3929
  %v3931 = vlaneseq
  %v3932 = vshrl.u32 %v3931, 7
  %v3933 = vsub.s32 %v3930, %v3932
  %v3934 = vrot.slane %v3920, %v3933
  %v3935 = vcombine.high %v3927, %v3927
  %3936 = vrot.lane.b32.xlu0 %v3927, 91
  %v3937 = vpop.permute.xlu0 %3936
  %3938 = vrot.lane.b32.xlu0 %v3935, 91
  %v3939 = vpop.permute.xlu0 %3938
  %3940 = vrot.lane.b32.xlu0 %v3934, 91
  %v3941 = vpop.permute.xlu0 %3940
  %v3942 = vsel %vm805, %v3937, %v3939
  %v3943 = vsel %vm805, %v3939, %v3941
  %v3945 = vsel %vm90, %v3942, 0
  %v3948 = vsel %vm90, %v3943, 0
  %v3951 = vsel %vm90, %v3941, 0
  %3953 = vmatprep.subr.bf16.mxu0 %v3948
  %3954 = vmatpush1.bf16.msra.mxu0 %v3945
  %3955 = vmatprep.subr.bf16.mxu0 0
  %3956 = vmatpush1.bf16.msra.mxu0 0
  %3957 = vmatprep.subr.bf16.mxu0 0
  %3958 = vmatpush1.bf16.msra.mxu0 0
  %3959 = vmatprep.subr.bf16.mxu0 0
  %3960 = vmatpush1.bf16.msra.mxu0 0
  %3961 = vmatprep.subr.bf16.mxu0 0
  %3962 = vmatpush1.bf16.msra.mxu0 0
  %3963 = vmatprep.subr.bf16.mxu0 0
  %3964 = vmatpush1.bf16.msra.mxu0 0
  %3965 = vmatprep.subr.bf16.mxu0 0
  %3966 = vmatpush1.bf16.msra.mxu0 0
  %3967 = vmatprep.subr.bf16.mxu0 0
  %3968 = vmatpush1.bf16.msra.mxu0 0
  %3969 = vmatprep.subr.bf16.mxu0 0
  %3970 = vmatpush1.bf16.msra.mxu0 0
  %3971 = vmatprep.subr.bf16.mxu0 0
  %3972 = vmatpush1.bf16.msra.mxu0 0
  %3973 = vmatprep.subr.bf16.mxu0 0
  %3974 = vmatpush1.bf16.msra.mxu0 0
  %3975 = vmatprep.subr.bf16.mxu0 0
  %3976 = vmatpush1.bf16.msra.mxu0 0
  %3977 = vmatprep.subr.bf16.mxu0 0
  %3978 = vmatpush1.bf16.msra.mxu0 0
  %3979 = vmatprep.subr.bf16.mxu0 0
  %3980 = vmatpush1.bf16.msra.mxu0 0
  %3981 = vmatprep.subr.bf16.mxu0 0
  %3982 = vmatpush1.bf16.msra.mxu0 0
  %3983 = vmatprep.subr.bf16.mxu0 0
  %3984 = vmatpush1.bf16.msra.mxu0 0
  %3985 = vmatprep.mubr.bf16.mxu0 0
  %3986 = vmatmul.mubr.bf16.gmra.mrb[0].mxu0 %v1922
  %v3987 = vpop.f32.mrb[0].mxu0
  %v3988 = vadd.f32 0.0, %v3987
  %v3989 = vpop.f32.mrb[0].mxu0
  %v3990 = vadd.f32 0.0, %v3989
  %v3991 = vpop.f32.mrb[0].mxu0
  %v3992 = vpop.f32.mrb[0].mxu0
  %3993 = vdwg.mxu0
  %3994 = vmatprep.subr.bf16.mxu0 0
  %3995 = vmatpush1.bf16.msra.mxu0 %v3951
  %3996 = vmatprep.subr.bf16.mxu0 0
  %3997 = vmatpush1.bf16.msra.mxu0 0
  %3998 = vmatprep.subr.bf16.mxu0 0
  %3999 = vmatpush1.bf16.msra.mxu0 0
  %4000 = vmatprep.subr.bf16.mxu0 0
  %4001 = vmatpush1.bf16.msra.mxu0 0
  %4002 = vmatprep.subr.bf16.mxu0 0
  %4003 = vmatpush1.bf16.msra.mxu0 0
  %4004 = vmatprep.subr.bf16.mxu0 0
  %4005 = vmatpush1.bf16.msra.mxu0 0
  %4006 = vmatprep.subr.bf16.mxu0 0
  %4007 = vmatpush1.bf16.msra.mxu0 0
  %4008 = vmatprep.subr.bf16.mxu0 0
  %4009 = vmatpush1.bf16.msra.mxu0 0
  %4010 = vmatprep.subr.bf16.mxu0 0
  %4011 = vmatpush1.bf16.msra.mxu0 0
  %4012 = vmatprep.subr.bf16.mxu0 0
  %4013 = vmatpush1.bf16.msra.mxu0 0
  %4014 = vmatprep.subr.bf16.mxu0 0
  %4015 = vmatpush1.bf16.msra.mxu0 0
  %4016 = vmatprep.subr.bf16.mxu0 0
  %4017 = vmatpush1.bf16.msra.mxu0 0
  %4018 = vmatprep.subr.bf16.mxu0 0
  %4019 = vmatpush1.bf16.msra.mxu0 0
  %4020 = vmatprep.subr.bf16.mxu0 0
  %4021 = vmatpush1.bf16.msra.mxu0 0
  %4022 = vmatprep.subr.bf16.mxu0 0
  %4023 = vmatpush1.bf16.msra.mxu0 0
  %4024 = vmatprep.subr.bf16.mxu0 0
  %4025 = vmatpush1.bf16.msra.mxu0 0
  %4026 = vmatprep.mubr.bf16.mxu0 0
  %4027 = vmatmul.mubr.bf16.gmra.mrb[0].mxu0 %v1922
  %v4028 = vpop.f32.mrb[0].mxu0
  %v4029 = vadd.f32 0.0, %v4028
  %v4030 = vpop.f32.mrb[0].mxu0
  %v4031 = vpop.f32.mrb[0].mxu0
  %v4032 = vpop.f32.mrb[0].mxu0
  %4033 = vdwg.mxu0
  %v4034 = vadd.f32 %v3915, %v3988
  %v4035 = vadd.f32 %v3916, %v3990
  %v4036 = vadd.f32 %v3917, %v4029
  %v4037 = vld [vmem:[#allocation2] sm:$0x3f]
  %v4039 = vcombine.high %v4037, %v4037
  %v4041 = vunpack.c.l.s4 1983009808
  %v4042 = vunpack.c.0.s8 %v4041
  %v4043 = vlaneseq
  %v4044 = vshrl.u32 %v4043, 7
  %v4045 = vsub.s32 %v4042, %v4044
  %v4046 = vrot.slane %v4037, %v4045
  %v4048 = vunpack.c.l.s4 1983009808
  %v4049 = vunpack.c.0.s8 %v4048
  %v4050 = vlaneseq
  %v4051 = vshrl.u32 %v4050, 7
  %v4052 = vsub.s32 %v4049, %v4051
  %v4053 = vrot.slane %v4039, %v4052
  %v4054 = vcombine.high %v4046, %v4046
  %4055 = vrot.lane.b32.xlu0 %v4046, 90
  %v4056 = vpop.permute.xlu0 %4055
  %4057 = vrot.lane.b32.xlu0 %v4054, 90
  %v4058 = vpop.permute.xlu0 %4057
  %4059 = vrot.lane.b32.xlu0 %v4053, 90
  %v4060 = vpop.permute.xlu0 %4059
  %v4061 = vsel %vm910, %v4056, %v4058
  %v4062 = vsel %vm910, %v4058, %v4060
  %v4064 = vsel %vm90, %v4061, 0
  %v4067 = vsel %vm90, %v4062, 0
  %v4070 = vsel %vm90, %v4060, 0
  %4072 = vmatprep.subr.bf16.mxu0 %v4067
  %4073 = vmatpush1.bf16.msra.mxu0 %v4064
  %4074 = vmatprep.subr.bf16.mxu0 0
  %4075 = vmatpush1.bf16.msra.mxu0 0
  %4076 = vmatprep.subr.bf16.mxu0 0
  %4077 = vmatpush1.bf16.msra.mxu0 0
  %4078 = vmatprep.subr.bf16.mxu0 0
  %4079 = vmatpush1.bf16.msra.mxu0 0
  %4080 = vmatprep.subr.bf16.mxu0 0
  %4081 = vmatpush1.bf16.msra.mxu0 0
  %4082 = vmatprep.subr.bf16.mxu0 0
  %4083 = vmatpush1.bf16.msra.mxu0 0
  %4084 = vmatprep.subr.bf16.mxu0 0
  %4085 = vmatpush1.bf16.msra.mxu0 0
  %4086 = vmatprep.subr.bf16.mxu0 0
  %4087 = vmatpush1.bf16.msra.mxu0 0
  %4088 = vmatprep.subr.bf16.mxu0 0
  %4089 = vmatpush1.bf16.msra.mxu0 0
  %4090 = vmatprep.subr.bf16.mxu0 0
  %4091 = vmatpush1.bf16.msra.mxu0 0
  %4092 = vmatprep.subr.bf16.mxu0 0
  %4093 = vmatpush1.bf16.msra.mxu0 0
  %4094 = vmatprep.subr.bf16.mxu0 0
  %4095 = vmatpush1.bf16.msra.mxu0 0
  %4096 = vmatprep.subr.bf16.mxu0 0
  %4097 = vmatpush1.bf16.msra.mxu0 0
  %4098 = vmatprep.subr.bf16.mxu0 0
  %4099 = vmatpush1.bf16.msra.mxu0 0
  %4100 = vmatprep.subr.bf16.mxu0 0
  %4101 = vmatpush1.bf16.msra.mxu0 0
  %4102 = vmatprep.subr.bf16.mxu0 0
  %4103 = vmatpush1.bf16.msra.mxu0 0
  %4104 = vmatprep.mubr.bf16.mxu0 0
  %4105 = vmatmul.mubr.bf16.gmra.mrb[0].mxu0 %v2044
  %v4106 = vpop.f32.mrb[0].mxu0
  %v4107 = vadd.f32 0.0, %v4106
  %v4108 = vpop.f32.mrb[0].mxu0
  %v4109 = vadd.f32 0.0, %v4108
  %v4110 = vpop.f32.mrb[0].mxu0
  %v4111 = vpop.f32.mrb[0].mxu0
  %4112 = vdwg.mxu0
  %4113 = vmatprep.subr.bf16.mxu0 0
  %4114 = vmatpush1.bf16.msra.mxu0 %v4070
  %4115 = vmatprep.subr.bf16.mxu0 0
  %4116 = vmatpush1.bf16.msra.mxu0 0
  %4117 = vmatprep.subr.bf16.mxu0 0
  %4118 = vmatpush1.bf16.msra.mxu0 0
  %4119 = vmatprep.subr.bf16.mxu0 0
  %4120 = vmatpush1.bf16.msra.mxu0 0
  %4121 = vmatprep.subr.bf16.mxu0 0
  %4122 = vmatpush1.bf16.msra.mxu0 0
  %4123 = vmatprep.subr.bf16.mxu0 0
  %4124 = vmatpush1.bf16.msra.mxu0 0
  %4125 = vmatprep.subr.bf16.mxu0 0
  %4126 = vmatpush1.bf16.msra.mxu0 0
  %4127 = vmatprep.subr.bf16.mxu0 0
  %4128 = vmatpush1.bf16.msra.mxu0 0
  %4129 = vmatprep.subr.bf16.mxu0 0
  %4130 = vmatpush1.bf16.msra.mxu0 0
  %4131 = vmatprep.subr.bf16.mxu0 0
  %4132 = vmatpush1.bf16.msra.mxu0 0
  %4133 = vmatprep.subr.bf16.mxu0 0
  %4134 = vmatpush1.bf16.msra.mxu0 0
  %4135 = vmatprep.subr.bf16.mxu0 0
  %4136 = vmatpush1.bf16.msra.mxu0 0
  %4137 = vmatprep.subr.bf16.mxu0 0
  %4138 = vmatpush1.bf16.msra.mxu0 0
  %4139 = vmatprep.subr.bf16.mxu0 0
  %4140 = vmatpush1.bf16.msra.mxu0 0
  %4141 = vmatprep.subr.bf16.mxu0 0
  %4142 = vmatpush1.bf16.msra.mxu0 0
  %4143 = vmatprep.subr.bf16.mxu0 0
  %4144 = vmatpush1.bf16.msra.mxu0 0
  %4145 = vmatprep.mubr.bf16.mxu0 0
  %4146 = vmatmul.mubr.bf16.gmra.mrb[0].mxu0 %v2044
  %v4147 = vpop.f32.mrb[0].mxu0
  %v4148 = vadd.f32 0.0, %v4147
  %v4149 = vpop.f32.mrb[0].mxu0
  %v4150 = vpop.f32.mrb[0].mxu0
  %v4151 = vpop.f32.mrb[0].mxu0
  %4152 = vdwg.mxu0
  %v4153 = vadd.f32 %v4034, %v4107
  %v4154 = vadd.f32 %v4035, %v4109
  %v4155 = vadd.f32 %v4036, %v4148
  %v4156 = vadd.f32 %v4153, %v2142
  %v4157 = vadd.f32 %v4154, %v2142
  %v4158 = vadd.f32 %v4155, %v2142
  %4159 = vrot.lane.b32.xlu0 %v2173, 109
  %v4160 = vpop.permute.xlu0 %4159
  %4161 = vrot.lane.b32.xlu0 %v2177, 109
  %v4162 = vpop.permute.xlu0 %4161
  %4163 = vrot.lane.b32.xlu0 %v2174, 109
  %v4164 = vpop.permute.xlu0 %4163
  %v4165 = vsel %vm2153, %v4160, %v4162
  %v4166 = vsel %vm2153, %v4162, %v4164
  %v4170 = vadd.f32 %v4156, %v4165
  %v4171 = vadd.f32 %v4157, %v4166
  %v4172 = vadd.f32 %v4158, %v4164
  %v4173 = vmax.f32 %v4170, 0.0
  %v4174 = vmax.f32 %v4171, 0.0
  %v4175 = vmax.f32 %v4172, 0.0
  %v4178 = vcombine.low %v4173, %v4174
  %s4180 = scalar_lea.vmem %s6, 12
  %4181 = vst [vmem:[%s4180] sm:$0xff] %v4178
  %4182 = vst.msk [vmem:[%s4180 + $0x8] sm:$0xf] %vm2170, %v4175
  // Predicated region
  $region26: #{basic_block_enc.1} parent=0 // pred_check
    _
  $region27: #{basic_block_enc.1} parent=0 // pred_check_branch
    %4184 = sbr.rel (0) target = $region29
  $region28: #{basic_block_enc.1} parent=0 // pred_region
    _
  $region29: #{basic_block_enc.1} parent=0 // pred_fallthru
    _
  // Predicated region
  $region30: #{basic_block_enc.1} parent=0 // pred_check
    _
  $region31: #{basic_block_enc.1} parent=0 // pred_check_branch
    %4186 = sbr.rel (0) target = $region33
  $region32: #{basic_block_enc.1} parent=0 // pred_region
    _
  $region33: #{basic_block_enc.1} parent=0 // pred_fallthru
    _

</llo_original>
